<compile_context>
chip_gen: v6e
topology: v6e:2x2x1
jax: 0.10.0
libtpu: 0.0.40
codegen_flags: <defaults>
</compile_context>

<pallas_src>
import numpy as np

import jax
import jax.numpy as jnp
from jax.experimental import pallas as pl
from jax.experimental.pallas import tpu as pltpu

# ----------------------------- configuration (small synthetic) ------------------------
BATCH       = 2
IMG         = 16          # input_size
PATCH       = 4           # patch_size
IN_CHANS    = 3
EMBED_DIM   = 32
NUM_LAYERS  = 2
NUM_HEADS   = 4
MLP_RATIO   = 4.0
MASK_PROB   = 0.75

GRID_HW     = IMG // PATCH                 # 4
NUM_PATCHES = GRID_HW * GRID_HW            # 16
SEQ_LEN     = NUM_PATCHES + 1              # +cls = 17
HEAD_DIM    = EMBED_DIM // NUM_HEADS       # 8
MLP_HIDDEN  = int(EMBED_DIM * MLP_RATIO)   # 128
PATCH_DIM   = PATCH * PATCH * 3            # 48
PRED_PAD    = 128                          # lane-dense padding of decoder output


# ----------------------------- the single fused Pallas kernel -------------------------
def _simmim_kernel(
    # per-batch data
    xp_ref, msk_ref, tgt_ref, mw_ref,
    # embedding params
    pos_ref, w_pe_ref, b_pe_ref, mtok_ref, ctok_ref,
    # attention params (packed [q|k|v] along output lanes)
    w_qkv_ref, b_qkv_ref, w_o_ref, b_o_ref,
    ln1_g_ref, ln1_b_ref, ln2_g_ref, ln2_b_ref,
    # MLP params
    w1_ref, b1_ref, w2_ref, b2_ref,
    # final norm + decoder
    ne_g_ref, ne_b_ref, w_dec_ref, b_dec_ref,
    # outputs
    pred_ref, num_ref, den_ref,
    # VMEM scratch
    xbuf,
):
    f32, bf16 = jnp.float32, jnp.bfloat16
    L, T, D, H, HD = NUM_PATCHES, SEQ_LEN, EMBED_DIM, NUM_HEADS, HEAD_DIM
    scale = 1.0 / float(np.sqrt(HD))

    def mm(a, w):   # bf16 MXU inputs, f32 accumulation
        return jnp.dot(a.astype(bf16), w.astype(bf16), preferred_element_type=f32)

    def ln(v, g, b):   # layernorm stats in f32, eps matches nn.LayerNorm
        mu = jnp.mean(v, axis=-1, keepdims=True)
        var = jnp.mean(jnp.square(v - mu), axis=-1, keepdims=True)
        return (v - mu) * jax.lax.rsqrt(var + 1e-5) * g + b

    # ---- patch embedding (conv k=p,s=p as dense) + mask-token blend + pos + cls ------
    # in-kernel token order is [patch_0 .. patch_{L-1}, cls]; attention / LN / MLP are
    # permutation-equivariant, and the pos table is fed in the same order.
    m = msk_ref[0]                                               # (L, 1)
    tokens = mm(xp_ref[0], w_pe_ref[...]) + b_pe_ref[...]        # (L, D)
    tokens = tokens * (1.0 - m) + mtok_ref[...] * m              # apply_mask(keep_mask=True)
    xbuf[pl.ds(0, L), :] = tokens + pos_ref[pl.ds(0, L), :]
    xbuf[pl.ds(L, 1), :] = ctok_ref[...] + pos_ref[pl.ds(L, 1), :]
    x = xbuf[...]                                                # (T, D) f32

    # ---- transformer encoder: post-norm MHA + GELU MLP, dropout = identity (eval) ----
    # TODO(synk): TransformerEncoderLayer internals not shown in the source; standard
    # post-norm MHA + GELU MLP is assumed (same structure as the previous version).
    for l in range(NUM_LAYERS):
        qkv = mm(x, w_qkv_ref[l]) + b_qkv_ref[l]                 # (T, 3D) fused projection
        heads = []
        for h in range(H):
            qh = qkv[:, h * HD:(h + 1) * HD]                     # static lane slices
            kh = qkv[:, D + h * HD:D + (h + 1) * HD]
            vh = qkv[:, 2 * D + h * HD:2 * D + (h + 1) * HD]
            s = jax.lax.dot_general(qh.astype(bf16), kh.astype(bf16),
                                    (((1,), (1,)), ((), ())),
                                    preferred_element_type=f32) * scale
            s = s - jnp.max(s, axis=-1, keepdims=True)
            e = jnp.exp(s)
            p = e * pl.reciprocal(jnp.sum(e, axis=-1, keepdims=True), approx=True)
            heads.append(jnp.dot(p.astype(bf16), vh.astype(bf16),
                                 preferred_element_type=f32))    # (T, HD)
        # head merge: lane-concat + single output projection
        attn = mm(jnp.concatenate(heads, axis=-1), w_o_ref[l]) + b_o_ref[l]
        x = ln(x + attn, ln1_g_ref[l], ln1_b_ref[l])
        hid = jax.nn.gelu(mm(x, w1_ref[l]) + b1_ref[l])          # (T, MLP_HIDDEN)
        x = ln(x + mm(hid, w2_ref[l]) + b2_ref[l], ln2_g_ref[l], ln2_b_ref[l])

    # ---- norm_encoder, drop cls (last row in kernel order), 1x1-conv decoder ---------
    x = ln(x, ne_g_ref[...], ne_b_ref[...])
    lat = x[0:L, :]                                              # (L, D)
    y = mm(lat, w_dec_ref[...]) + b_dec_ref[...]                 # (L, 128); cols >=48 are 0
    pred_ref[0] = y                                              # lane-dense store

    # ---- masked L1 loss partial sums (target & mask-weights pre-permuted to this layout)
    diff = jnp.abs(y - tgt_ref[0]) * mw_ref[0]                   # padded cols contribute 0
    num_ref[0] = jnp.sum(diff, axis=(0, 1), keepdims=True) * (1.0 / PATCH_DIM)
    den_ref[0] = jnp.sum(m, axis=(0, 1), keepdims=True)


# ----------------------------- BlockSpec helpers ---------------------------------------
def _batch_spec(a):
    nd = a.ndim
    return pl.BlockSpec((1,) + a.shape[1:], lambda b, _n=nd: (b,) + (0,) * (_n - 1))


def _rep_spec(a):
    nd = a.ndim
    return pl.BlockSpec(a.shape, lambda b, _n=nd: (0,) * _n)


# Row index used to pull the (pred-row ordered) mask back onto the conv-output layout:
# element (l=(hh,ww), kc=(c,i,j)) of the decoder output sits in pred row  hh*p + i.
_R_IDX = ((np.arange(NUM_PATCHES)[:, None] // GRID_HW) * PATCH
          + (np.arange(PATCH_DIM)[None, :] % (PATCH * PATCH)) // PATCH)


# ----------------------------- forward pass --------------------------------------------
def simmim_forward(params, x, mask):
    """x: (B, 3, H, W) NCHW float32; mask: (B, L) float32 (1 = masked)."""
    B = x.shape[0]
    p, h, w = PATCH, GRID_HW, GRID_HW
    L, T = NUM_PATCHES, SEQ_LEN
    pad = PRED_PAD - PATCH_DIM

    xr = x.reshape(B, 3, h, p, w, p)
    # conv-order patches: xp[b, (hh,ww), (c,i,j)] = x[b, c, hh*p+i, ww*p+j]
    xp = xr.transpose(0, 2, 4, 1, 3, 5).reshape(B, L, IN_CHANS * p * p)
    # patchify(imgs) of the reference, expressed in decoder-conv-output layout
    tgt = xr.transpose(0, 2, 3, 1, 4, 5).reshape(B, L, PATCH_DIM)
    tgt = jnp.pad(tgt, ((0, 0), (0, 0), (0, pad)))
    # per-element mask weight in the same layout (mask row of the corresponding pred row)
    mw = jnp.pad(mask[:, _R_IDX], ((0, 0), (0, 0), (0, pad)))
    mask3 = mask[:, :, None]

    batch_args = (xp, mask3, tgt, mw)
    param_args = (params["pos"], params["w_pe"], params["b_pe"], params["mask_token"],
                  params["cls_token"], params["w_qkv"], params["b_qkv"], params["w_o"],
                  params["b_o"], params["ln1_g"], params["ln1_b"], params["ln2_g"],
                  params["ln2_b"], params["w1"], params["b1"], params["w2"],
                  params["b2"], params["ne_g"], params["ne_b"], params["w_dec"],
                  params["b_dec"])

    y_pad, num, den = pl.pallas_call(
        _simmim_kernel,
        out_shape=(jax.ShapeDtypeStruct((B, L, PRED_PAD), jnp.float32),
                   jax.ShapeDtypeStruct((B, 1, 1), jnp.float32),
                   jax.ShapeDtypeStruct((B, 1, 1), jnp.float32)),
        grid=(B,),
        in_specs=[_batch_spec(a) for a in batch_args]
                + [_rep_spec(a) for a in param_args],
        out_specs=[pl.BlockSpec((1, L, PRED_PAD), lambda b: (b, 0, 0)),
                   pl.BlockSpec((1, 1, 1), lambda b: (b, 0, 0)),
                   pl.BlockSpec((1, 1, 1), lambda b: (b, 0, 0))],
        scratch_shapes=[pltpu.VMEM((T, EMBED_DIM), jnp.float32)],
        compiler_params=pltpu.CompilerParams(dimension_semantics=("parallel",)),
    )(*batch_args, *param_args)

    # decoder output -> PixelShuffle + permute(0,2,3,1) + reshape layout of the reference
    y = y_pad[:, :, :PATCH_DIM]                                  # (B, L, 48), conv order (c,i,j)
    y = y.reshape(B, h, w, 3, p, p).transpose(0, 1, 4, 2, 5, 3)
    pred = y.reshape(B, h * w, p * p * 3)

    loss = jnp.sum(num) / (jnp.sum(den) + 1e-8)
    return loss, pred, mask


# ----------------------------- parameter setup (deterministic) -------------------------
def _sincos_pos_embed(T, D):
    # TODO(synk): exact SinCosPositionalEmbedding2d variant is not given in the source;
    # using the standard 1-D transformer sin/cos table over (cls + patches).
    pos = np.arange(T)[:, None].astype(np.float64)
    dim = np.arange(D // 2)[None, :].astype(np.float64)
    omega = 1.0 / (10000.0 ** (2.0 * dim / D))
    ang = pos * omega
    emb = np.concatenate([np.sin(ang), np.cos(ang)], axis=-1)
    return jnp.asarray(emb, dtype=jnp.float32)                   # (T, D)


def init_params(key):
    keys = jax.random.split(key, 6)

    def w(k, shape, scale=0.02, dtype=jnp.bfloat16):
        return (scale * jax.random.normal(k, shape)).astype(dtype)

    NL, D = NUM_LAYERS, EMBED_DIM
    pos = _sincos_pos_embed(SEQ_LEN, EMBED_DIM)
    # kernel token order is [patches..., cls]; reorder the table accordingly.
    pos_k = jnp.concatenate([pos[1:], pos[:1]], axis=0)

    w_dec = jnp.pad(w(keys[5], (EMBED_DIM, PATCH_DIM), dtype=jnp.float32),
                    ((0, 0), (0, PRED_PAD - PATCH_DIM))).astype(jnp.bfloat16)

    return {
        "w_pe": w(keys[0], (IN_CHANS * PATCH * PATCH, EMBED_DIM)),
        "b_pe": jnp.zeros((1, EMBED_DIM), jnp.float32),
        "mask_token": jnp.zeros((1, EMBED_DIM), jnp.float32),
        "cls_token": jnp.zeros((1, EMBED_DIM), jnp.float32),
        "pos": pos_k,
        # fused QKV projection: columns are [Wq | Wk | Wv], each head a contiguous HD block
        "w_qkv": w(keys[1], (NL, D, 3 * D)),
        "b_qkv": jnp.zeros((NL, 1, 3 * D), jnp.float32),
        "w_o": w(keys[2], (NL, D, D)),
        "b_o": jnp.zeros((NL, 1, D), jnp.float32),
        "ln1_g": jnp.ones((NL, 1, D), jnp.float32),
        "ln1_b": jnp.zeros((NL, 1, D), jnp.float32),
        "ln2_g": jnp.ones((NL, 1, D), jnp.float32),
        "ln2_b": jnp.zeros((NL, 1, D), jnp.float32),
        "w1": w(keys[3], (NL, D, MLP_HIDDEN)),
        "b1": jnp.zeros((NL, 1, MLP_HIDDEN), jnp.float32),
        "w2": w(keys[4], (NL, MLP_HIDDEN, D)),
        "b2": jnp.zeros((NL, 1, D), jnp.float32),
        "ne_g": jnp.ones((1, D), jnp.float32),
        "ne_b": jnp.zeros((1, D), jnp.float32),
        "w_dec": w_dec,
        "b_dec": jnp.zeros((1, PRED_PAD), jnp.float32),
    }


def random_mask(key, B, L, mask_prob):
    # TODO(synk): MaskGenerator2d uses numpy RNG; replaced by deterministic
    # exact-count random masking with jax.random (1 = masked).
    n_mask = int(L * mask_prob)
    noise = jax.random.uniform(key, (B, L))
    ranks = jnp.argsort(jnp.argsort(noise, axis=1), axis=1)
    return (ranks < n_mask).astype(jnp.float32)


# ----------------------------- driver ---------------------------------------------------
if __name__ == "__main__":
    root = jax.random.PRNGKey(0)
    k_param, k_img, k_mask = jax.random.split(root, 3)

    params = init_params(k_param)
    x = jax.random.normal(k_img, (BATCH, IN_CHANS, IMG, IMG), dtype=jnp.float32)
    mask = random_mask(k_mask, BATCH, NUM_PATCHES, MASK_PROB)

    fwd = jax.jit(simmim_forward)
    loss, pred, mask_out = fwd(params, x, mask)
    jax.block_until_ready((loss, pred, mask_out))

    assert pred.shape == (BATCH, NUM_PATCHES, PATCH_DIM)
    assert mask_out.shape == (BATCH, NUM_PATCHES)
    assert loss.shape == () and bool(jnp.isfinite(loss))
    print("KERNEL_OK")
</pallas_src>

<mosaic_0001>
module attributes {stable_mosaic.version = 11 : i64} {
  func.func @_simmim_kernel(%arg0: i32, %arg1: memref<1x16x48xf32, #tpu.memory_space<vmem>>, %arg2: memref<1x16x1xf32, #tpu.memory_space<vmem>>, %arg3: memref<1x16x128xf32, #tpu.memory_space<vmem>>, %arg4: memref<1x16x128xf32, #tpu.memory_space<vmem>>, %arg5: memref<17x32xf32, #tpu.memory_space<vmem>>, %arg6: memref<48x32xbf16, #tpu.memory_space<vmem>>, %arg7: memref<1x32xf32, #tpu.memory_space<vmem>>, %arg8: memref<1x32xf32, #tpu.memory_space<vmem>>, %arg9: memref<1x32xf32, #tpu.memory_space<vmem>>, %arg10: memref<2x32x96xbf16, #tpu.memory_space<vmem>>, %arg11: memref<2x1x96xf32, #tpu.memory_space<vmem>>, %arg12: memref<2x32x32xbf16, #tpu.memory_space<vmem>>, %arg13: memref<2x1x32xf32, #tpu.memory_space<vmem>>, %arg14: memref<2x1x32xf32, #tpu.memory_space<vmem>>, %arg15: memref<2x1x32xf32, #tpu.memory_space<vmem>>, %arg16: memref<2x1x32xf32, #tpu.memory_space<vmem>>, %arg17: memref<2x1x32xf32, #tpu.memory_space<vmem>>, %arg18: memref<2x32x128xbf16, #tpu.memory_space<vmem>>, %arg19: memref<2x1x128xf32, #tpu.memory_space<vmem>>, %arg20: memref<2x128x32xbf16, #tpu.memory_space<vmem>>, %arg21: memref<2x1x32xf32, #tpu.memory_space<vmem>>, %arg22: memref<1x32xf32, #tpu.memory_space<vmem>>, %arg23: memref<1x32xf32, #tpu.memory_space<vmem>>, %arg24: memref<32x128xbf16, #tpu.memory_space<vmem>>, %arg25: memref<1x128xf32, #tpu.memory_space<vmem>>, %arg26: memref<1x16x128xf32, #tpu.memory_space<vmem>>, %arg27: memref<1x1x1xf32, #tpu.memory_space<vmem>>, %arg28: memref<1x1x1xf32, #tpu.memory_space<vmem>>, %arg29: memref<17x32xf32, #tpu.memory_space<vmem>>) attributes {dimension_semantics = [#tpu.dimension_semantics<parallel>], iteration_bounds = array<i64: 2>, scalar_prefetch = 0 : i64, scratch_operands = 1 : i64, tpu.core_type = #tpu.core_type<tc>, window_params = [{transform_indices = @transform_0, window_bounds = array<i64: 1, 16, 48>}, {transform_indices = @transform_1, window_bounds = array<i64: 1, 16, 1>}, {transform_indices = @transform_2, window_bounds = array<i64: 1, 16, 128>}, {transform_indices = @transform_3, window_bounds = array<i64: 1, 16, 128>}, {pipeline_mode = #tpu.pipeline_mode<synchronous>, transform_indices = @transform_4, window_bounds = array<i64: 17, 32>}, {pipeline_mode = #tpu.pipeline_mode<synchronous>, transform_indices = @transform_5, window_bounds = array<i64: 48, 32>}, {pipeline_mode = #tpu.pipeline_mode<synchronous>, transform_indices = @transform_6, window_bounds = array<i64: 1, 32>}, {pipeline_mode = #tpu.pipeline_mode<synchronous>, transform_indices = @transform_7, window_bounds = array<i64: 1, 32>}, {pipeline_mode = #tpu.pipeline_mode<synchronous>, transform_indices = @transform_8, window_bounds = array<i64: 1, 32>}, {pipeline_mode = #tpu.pipeline_mode<synchronous>, transform_indices = @transform_9, window_bounds = array<i64: 2, 32, 96>}, {pipeline_mode = #tpu.pipeline_mode<synchronous>, transform_indices = @transform_10, window_bounds = array<i64: 2, 1, 96>}, {pipeline_mode = #tpu.pipeline_mode<synchronous>, transform_indices = @transform_11, window_bounds = array<i64: 2, 32, 32>}, {pipeline_mode = #tpu.pipeline_mode<synchronous>, transform_indices = @transform_12, window_bounds = array<i64: 2, 1, 32>}, {pipeline_mode = #tpu.pipeline_mode<synchronous>, transform_indices = @transform_13, window_bounds = array<i64: 2, 1, 32>}, {pipeline_mode = #tpu.pipeline_mode<synchronous>, transform_indices = @transform_14, window_bounds = array<i64: 2, 1, 32>}, {pipeline_mode = #tpu.pipeline_mode<synchronous>, transform_indices = @transform_15, window_bounds = array<i64: 2, 1, 32>}, {pipeline_mode = #tpu.pipeline_mode<synchronous>, transform_indices = @transform_16, window_bounds = array<i64: 2, 1, 32>}, {pipeline_mode = #tpu.pipeline_mode<synchronous>, transform_indices = @transform_17, window_bounds = array<i64: 2, 32, 128>}, {pipeline_mode = #tpu.pipeline_mode<synchronous>, transform_indices = @transform_18, window_bounds = array<i64: 2, 1, 128>}, {pipeline_mode = #tpu.pipeline_mode<synchronous>, transform_indices = @transform_19, window_bounds = array<i64: 2, 128, 32>}, {pipeline_mode = #tpu.pipeline_mode<synchronous>, transform_indices = @transform_20, window_bounds = array<i64: 2, 1, 32>}, {pipeline_mode = #tpu.pipeline_mode<synchronous>, transform_indices = @transform_21, window_bounds = array<i64: 1, 32>}, {pipeline_mode = #tpu.pipeline_mode<synchronous>, transform_indices = @transform_22, window_bounds = array<i64: 1, 32>}, {pipeline_mode = #tpu.pipeline_mode<synchronous>, transform_indices = @transform_23, window_bounds = array<i64: 32, 128>}, {pipeline_mode = #tpu.pipeline_mode<synchronous>, transform_indices = @transform_24, window_bounds = array<i64: 1, 128>}, {transform_indices = @transform_25, window_bounds = array<i64: 1, 16, 128>}, {transform_indices = @transform_26, window_bounds = array<i64: 1, 1, 1>}, {transform_indices = @transform_27, window_bounds = array<i64: 1, 1, 1>}]} {
    %c0 = arith.constant 0 : index
    %c0_0 = arith.constant 0 : index
    %c0_1 = arith.constant 0 : index
    %0 = vector.load %arg2[%c0, %c0_0, %c0_1] : memref<1x16x1xf32, #tpu.memory_space<vmem>>, vector<1x16x1xf32>
    %1 = vector.shape_cast %0 : vector<1x16x1xf32> to vector<16x1xf32>
    %c0_2 = arith.constant 0 : index
    %c0_3 = arith.constant 0 : index
    %c0_4 = arith.constant 0 : index
    %2 = vector.load %arg1[%c0_2, %c0_3, %c0_4] : memref<1x16x48xf32, #tpu.memory_space<vmem>>, vector<1x16x48xf32>
    %3 = vector.shape_cast %2 : vector<1x16x48xf32> to vector<16x48xf32>
    %c0_5 = arith.constant 0 : index
    %c0_6 = arith.constant 0 : index
    %4 = vector.load %arg6[%c0_5, %c0_6] : memref<48x32xbf16, #tpu.memory_space<vmem>>, vector<48x32xbf16>
    %5 = arith.truncf %3 : vector<16x48xf32> to vector<16x48xbf16>
    %cst = arith.constant dense<0.000000e+00> : vector<16x32xf32>
    %6 = tpu.matmul %5, %4, %cst {dimension_numbers = #tpu.dot_dimension_numbers<[1], [0], [0], [1], [0, 0, 1, 1], [], []>} : vector<16x48xbf16>, vector<48x32xbf16>, vector<16x32xf32> -> vector<16x32xf32>
    %c0_7 = arith.constant 0 : index
    %c0_8 = arith.constant 0 : index
    %7 = vector.load %arg7[%c0_7, %c0_8] : memref<1x32xf32, #tpu.memory_space<vmem>>, vector<1x32xf32>
    %8 = vector.broadcast %7 : vector<1x32xf32> to vector<16x32xf32>
    %9 = arith.addf %6, %8 : vector<16x32xf32>
    %cst_9 = arith.constant 1.000000e+00 : f32
    %10 = vector.broadcast %cst_9 : f32 to vector<16x1xf32>
    %11 = arith.subf %10, %1 : vector<16x1xf32>
    %12 = vector.broadcast %11 : vector<16x1xf32> to vector<16x32xf32>
    %13 = arith.mulf %9, %12 : vector<16x32xf32>
    %c0_10 = arith.constant 0 : index
    %c0_11 = arith.constant 0 : index
    %14 = vector.load %arg8[%c0_10, %c0_11] : memref<1x32xf32, #tpu.memory_space<vmem>>, vector<1x32xf32>
    %15 = vector.broadcast %14 : vector<1x32xf32> to vector<16x32xf32>
    %16 = vector.broadcast %1 : vector<16x1xf32> to vector<16x32xf32>
    %17 = arith.mulf %15, %16 : vector<16x32xf32>
    %18 = arith.addf %13, %17 : vector<16x32xf32>
    %c0_12 = arith.constant 0 : index
    %c0_13 = arith.constant 0 : index
    %19 = vector.load %arg5[%c0_12, %c0_13] : memref<17x32xf32, #tpu.memory_space<vmem>>, vector<16x32xf32>
    %20 = arith.addf %18, %19 : vector<16x32xf32>
    %c0_14 = arith.constant 0 : index
    %c0_15 = arith.constant 0 : index
    %21 = vector.load %arg29[%c0_14, %c0_15] : memref<17x32xf32, #tpu.memory_space<vmem>>, vector<16x32xf32>
    tpu.vector_store %arg29[%c0_14, %c0_15], %20 {strides = array<i32>} : memref<17x32xf32, #tpu.memory_space<vmem>>, vector<16x32xf32>,
    %c0_16 = arith.constant 0 : index
    %c0_17 = arith.constant 0 : index
    %22 = vector.load %arg9[%c0_16, %c0_17] : memref<1x32xf32, #tpu.memory_space<vmem>>, vector<1x32xf32>
    %c16 = arith.constant 16 : index
    %c0_18 = arith.constant 0 : index
    %23 = vector.load %arg5[%c16, %c0_18] : memref<17x32xf32, #tpu.memory_space<vmem>>, vector<1x32xf32>
    %24 = arith.addf %22, %23 : vector<1x32xf32>
    %c16_19 = arith.constant 16 : index
    %c0_20 = arith.constant 0 : index
    %25 = vector.load %arg29[%c16_19, %c0_20] : memref<17x32xf32, #tpu.memory_space<vmem>>, vector<1x32xf32>
    tpu.vector_store %arg29[%c16_19, %c0_20], %24 {strides = array<i32>} : memref<17x32xf32, #tpu.memory_space<vmem>>, vector<1x32xf32>,
    %c0_21 = arith.constant 0 : index
    %c0_22 = arith.constant 0 : index
    %26 = vector.load %arg29[%c0_21, %c0_22] : memref<17x32xf32, #tpu.memory_space<vmem>>, vector<17x32xf32>
    %c0_23 = arith.constant 0 : index
    %c0_24 = arith.constant 0 : index
    %c0_25 = arith.constant 0 : index
    %27 = vector.load %arg10[%c0_23, %c0_24, %c0_25] : memref<2x32x96xbf16, #tpu.memory_space<vmem>>, vector<1x32x96xbf16>
    %28 = vector.shape_cast %27 : vector<1x32x96xbf16> to vector<32x96xbf16>
    %29 = arith.truncf %26 : vector<17x32xf32> to vector<17x32xbf16>
    %cst_26 = arith.constant dense<0.000000e+00> : vector<17x96xf32>
    %30 = tpu.matmul %29, %28, %cst_26 {dimension_numbers = #tpu.dot_dimension_numbers<[1], [0], [0], [1], [0, 0, 1, 1], [], []>} : vector<17x32xbf16>, vector<32x96xbf16>, vector<17x96xf32> -> vector<17x96xf32>
    %c0_27 = arith.constant 0 : index
    %c0_28 = arith.constant 0 : index
    %c0_29 = arith.constant 0 : index
    %31 = vector.load %arg11[%c0_27, %c0_28, %c0_29] : memref<2x1x96xf32, #tpu.memory_space<vmem>>, vector<1x1x96xf32>
    %32 = vector.shape_cast %31 : vector<1x1x96xf32> to vector<1x96xf32>
    %33 = vector.broadcast %32 : vector<1x96xf32> to vector<17x96xf32>
    %34 = arith.addf %30, %33 : vector<17x96xf32>
    %35 = vector.extract_strided_slice %34 {offsets = [0, 0], sizes = [17, 8], strides = [1, 1]} : vector<17x96xf32> to vector<17x8xf32>
    %36 = vector.extract_strided_slice %34 {offsets = [0, 32], sizes = [17, 8], strides = [1, 1]} : vector<17x96xf32> to vector<17x8xf32>
    %37 = vector.extract_strided_slice %34 {offsets = [0, 64], sizes = [17, 8], strides = [1, 1]} : vector<17x96xf32> to vector<17x8xf32>
    %38 = arith.truncf %35 : vector<17x8xf32> to vector<17x8xbf16>
    %39 = arith.truncf %36 : vector<17x8xf32> to vector<17x8xbf16>
    %cst_30 = arith.constant dense<0.000000e+00> : vector<17x17xf32>
    %40 = tpu.matmul %38, %39, %cst_30 {dimension_numbers = #tpu.dot_dimension_numbers<[1], [1], [0], [0], [0, 0, 1, 0], [], []>} : vector<17x8xbf16>, vector<17x8xbf16>, vector<17x17xf32> -> vector<17x17xf32>
    %cst_31 = arith.constant 0.353553385 : f32
    %41 = vector.broadcast %cst_31 : f32 to vector<17x17xf32>
    %42 = arith.mulf %40, %41 : vector<17x17xf32>
    %cst_32 = arith.constant dense<0xFF800000> : vector<17xf32>
    %43 = vector.multi_reduction <maximumf>, %42, %cst_32 [1] : vector<17x17xf32> to vector<17xf32>
    %44 = vector.shape_cast %43 : vector<17xf32> to vector<17x1xf32>
    %45 = vector.broadcast %44 : vector<17x1xf32> to vector<17x17xf32>
    %46 = arith.subf %42, %45 : vector<17x17xf32>
    %47 = math.exp %46 : vector<17x17xf32>
    %cst_33 = arith.constant dense<0.000000e+00> : vector<17xf32>
    %48 = vector.multi_reduction <add>, %47, %cst_33 [1] : vector<17x17xf32> to vector<17xf32>
    %49 = vector.shape_cast %48 : vector<17xf32> to vector<17x1xf32>
    %50 = tpu.reciprocal %49 {approx = true} : vector<17x1xf32> -> vector<17x1xf32>
    %51 = vector.broadcast %50 : vector<17x1xf32> to vector<17x17xf32>
    %52 = arith.mulf %47, %51 : vector<17x17xf32>
    %53 = arith.truncf %52 : vector<17x17xf32> to vector<17x17xbf16>
    %54 = arith.truncf %37 : vector<17x8xf32> to vector<17x8xbf16>
    %cst_34 = arith.constant dense<0.000000e+00> : vector<17x8xf32>
    %55 = tpu.matmul %53, %54, %cst_34 {dimension_numbers = #tpu.dot_dimension_numbers<[1], [0], [0], [1], [0, 0, 1, 1], [], []>} : vector<17x17xbf16>, vector<17x8xbf16>, vector<17x8xf32> -> vector<17x8xf32>
    %56 = vector.extract_strided_slice %34 {offsets = [0, 8], sizes = [17, 8], strides = [1, 1]} : vector<17x96xf32> to vector<17x8xf32>
    %57 = vector.extract_strided_slice %34 {offsets = [0, 40], sizes = [17, 8], strides = [1, 1]} : vector<17x96xf32> to vector<17x8xf32>
    %58 = vector.extract_strided_slice %34 {offsets = [0, 72], sizes = [17, 8], strides = [1, 1]} : vector<17x96xf32> to vector<17x8xf32>
    %59 = arith.truncf %56 : vector<17x8xf32> to vector<17x8xbf16>
    %60 = arith.truncf %57 : vector<17x8xf32> to vector<17x8xbf16>
    %cst_35 = arith.constant dense<0.000000e+00> : vector<17x17xf32>
    %61 = tpu.matmul %59, %60, %cst_35 {dimension_numbers = #tpu.dot_dimension_numbers<[1], [1], [0], [0], [0, 0, 1, 0], [], []>} : vector<17x8xbf16>, vector<17x8xbf16>, vector<17x17xf32> -> vector<17x17xf32>
    %cst_36 = arith.constant 0.353553385 : f32
    %62 = vector.broadcast %cst_36 : f32 to vector<17x17xf32>
    %63 = arith.mulf %61, %62 : vector<17x17xf32>
    %cst_37 = arith.constant dense<0xFF800000> : vector<17xf32>
    %64 = vector.multi_reduction <maximumf>, %63, %cst_37 [1] : vector<17x17xf32> to vector<17xf32>
    %65 = vector.shape_cast %64 : vector<17xf32> to vector<17x1xf32>
    %66 = vector.broadcast %65 : vector<17x1xf32> to vector<17x17xf32>
    %67 = arith.subf %63, %66 : vector<17x17xf32>
    %68 = math.exp %67 : vector<17x17xf32>
    %cst_38 = arith.constant dense<0.000000e+00> : vector<17xf32>
    %69 = vector.multi_reduction <add>, %68, %cst_38 [1] : vector<17x17xf32> to vector<17xf32>
    %70 = vector.shape_cast %69 : vector<17xf32> to vector<17x1xf32>
    %71 = tpu.reciprocal %70 {approx = true} : vector<17x1xf32> -> vector<17x1xf32>
    %72 = vector.broadcast %71 : vector<17x1xf32> to vector<17x17xf32>
    %73 = arith.mulf %68, %72 : vector<17x17xf32>
    %74 = arith.truncf %73 : vector<17x17xf32> to vector<17x17xbf16>
    %75 = arith.truncf %58 : vector<17x8xf32> to vector<17x8xbf16>
    %cst_39 = arith.constant dense<0.000000e+00> : vector<17x8xf32>
    %76 = tpu.matmul %74, %75, %cst_39 {dimension_numbers = #tpu.dot_dimension_numbers<[1], [0], [0], [1], [0, 0, 1, 1], [], []>} : vector<17x17xbf16>, vector<17x8xbf16>, vector<17x8xf32> -> vector<17x8xf32>
    %77 = vector.extract_strided_slice %34 {offsets = [0, 16], sizes = [17, 8], strides = [1, 1]} : vector<17x96xf32> to vector<17x8xf32>
    %78 = vector.extract_strided_slice %34 {offsets = [0, 48], sizes = [17, 8], strides = [1, 1]} : vector<17x96xf32> to vector<17x8xf32>
    %79 = vector.extract_strided_slice %34 {offsets = [0, 80], sizes = [17, 8], strides = [1, 1]} : vector<17x96xf32> to vector<17x8xf32>
    %80 = arith.truncf %77 : vector<17x8xf32> to vector<17x8xbf16>
    %81 = arith.truncf %78 : vector<17x8xf32> to vector<17x8xbf16>
    %cst_40 = arith.constant dense<0.000000e+00> : vector<17x17xf32>
    %82 = tpu.matmul %80, %81, %cst_40 {dimension_numbers = #tpu.dot_dimension_numbers<[1], [1], [0], [0], [0, 0, 1, 0], [], []>} : vector<17x8xbf16>, vector<17x8xbf16>, vector<17x17xf32> -> vector<17x17xf32>
    %cst_41 = arith.constant 0.353553385 : f32
    %83 = vector.broadcast %cst_41 : f32 to vector<17x17xf32>
    %84 = arith.mulf %82, %83 : vector<17x17xf32>
    %cst_42 = arith.constant dense<0xFF800000> : vector<17xf32>
    %85 = vector.multi_reduction <maximumf>, %84, %cst_42 [1] : vector<17x17xf32> to vector<17xf32>
    %86 = vector.shape_cast %85 : vector<17xf32> to vector<17x1xf32>
    %87 = vector.broadcast %86 : vector<17x1xf32> to vector<17x17xf32>
    %88 = arith.subf %84, %87 : vector<17x17xf32>
    %89 = math.exp %88 : vector<17x17xf32>
    %cst_43 = arith.constant dense<0.000000e+00> : vector<17xf32>
    %90 = vector.multi_reduction <add>, %89, %cst_43 [1] : vector<17x17xf32> to vector<17xf32>
    %91 = vector.shape_cast %90 : vector<17xf32> to vector<17x1xf32>
    %92 = tpu.reciprocal %91 {approx = true} : vector<17x1xf32> -> vector<17x1xf32>
    %93 = vector.broadcast %92 : vector<17x1xf32> to vector<17x17xf32>
    %94 = arith.mulf %89, %93 : vector<17x17xf32>
    %95 = arith.truncf %94 : vector<17x17xf32> to vector<17x17xbf16>
    %96 = arith.truncf %79 : vector<17x8xf32> to vector<17x8xbf16>
    %cst_44 = arith.constant dense<0.000000e+00> : vector<17x8xf32>
    %97 = tpu.matmul %95, %96, %cst_44 {dimension_numbers = #tpu.dot_dimension_numbers<[1], [0], [0], [1], [0, 0, 1, 1], [], []>} : vector<17x17xbf16>, vector<17x8xbf16>, vector<17x8xf32> -> vector<17x8xf32>
    %98 = vector.extract_strided_slice %34 {offsets = [0, 24], sizes = [17, 8], strides = [1, 1]} : vector<17x96xf32> to vector<17x8xf32>
    %99 = vector.extract_strided_slice %34 {offsets = [0, 56], sizes = [17, 8], strides = [1, 1]} : vector<17x96xf32> to vector<17x8xf32>
    %100 = vector.extract_strided_slice %34 {offsets = [0, 88], sizes = [17, 8], strides = [1, 1]} : vector<17x96xf32> to vector<17x8xf32>
    %101 = arith.truncf %98 : vector<17x8xf32> to vector<17x8xbf16>
    %102 = arith.truncf %99 : vector<17x8xf32> to vector<17x8xbf16>
    %cst_45 = arith.constant dense<0.000000e+00> : vector<17x17xf32>
    %103 = tpu.matmul %101, %102, %cst_45 {dimension_numbers = #tpu.dot_dimension_numbers<[1], [1], [0], [0], [0, 0, 1, 0], [], []>} : vector<17x8xbf16>, vector<17x8xbf16>, vector<17x17xf32> -> vector<17x17xf32>
    %cst_46 = arith.constant 0.353553385 : f32
    %104 = vector.broadcast %cst_46 : f32 to vector<17x17xf32>
    %105 = arith.mulf %103, %104 : vector<17x17xf32>
    %cst_47 = arith.constant dense<0xFF800000> : vector<17xf32>
    %106 = vector.multi_reduction <maximumf>, %105, %cst_47 [1] : vector<17x17xf32> to vector<17xf32>
    %107 = vector.shape_cast %106 : vector<17xf32> to vector<17x1xf32>
    %108 = vector.broadcast %107 : vector<17x1xf32> to vector<17x17xf32>
    %109 = arith.subf %105, %108 : vector<17x17xf32>
    %110 = math.exp %109 : vector<17x17xf32>
    %cst_48 = arith.constant dense<0.000000e+00> : vector<17xf32>
    %111 = vector.multi_reduction <add>, %110, %cst_48 [1] : vector<17x17xf32> to vector<17xf32>
    %112 = vector.shape_cast %111 : vector<17xf32> to vector<17x1xf32>
    %113 = tpu.reciprocal %112 {approx = true} : vector<17x1xf32> -> vector<17x1xf32>
    %114 = vector.broadcast %113 : vector<17x1xf32> to vector<17x17xf32>
    %115 = arith.mulf %110, %114 : vector<17x17xf32>
    %116 = arith.truncf %115 : vector<17x17xf32> to vector<17x17xbf16>
    %117 = arith.truncf %100 : vector<17x8xf32> to vector<17x8xbf16>
    %cst_49 = arith.constant dense<0.000000e+00> : vector<17x8xf32>
    %118 = tpu.matmul %116, %117, %cst_49 {dimension_numbers = #tpu.dot_dimension_numbers<[1], [0], [0], [1], [0, 0, 1, 1], [], []>} : vector<17x17xbf16>, vector<17x8xbf16>, vector<17x8xf32> -> vector<17x8xf32>
    %119 = tpu.concatenate %55, %76, %97, %118 in 1 : vector<17x8xf32>, vector<17x8xf32>, vector<17x8xf32>, vector<17x8xf32> -> vector<17x32xf32>
    %c0_50 = arith.constant 0 : index
    %c0_51 = arith.constant 0 : index
    %c0_52 = arith.constant 0 : index
    %120 = vector.load %arg12[%c0_50, %c0_51, %c0_52] : memref<2x32x32xbf16, #tpu.memory_space<vmem>>, vector<1x32x32xbf16>
    %121 = vector.shape_cast %120 : vector<1x32x32xbf16> to vector<32x32xbf16>
    %122 = arith.truncf %119 : vector<17x32xf32> to vector<17x32xbf16>
    %cst_53 = arith.constant dense<0.000000e+00> : vector<17x32xf32>
    %123 = tpu.matmul %122, %121, %cst_53 {dimension_numbers = #tpu.dot_dimension_numbers<[1], [0], [0], [1], [0, 0, 1, 1], [], []>} : vector<17x32xbf16>, vector<32x32xbf16>, vector<17x32xf32> -> vector<17x32xf32>
    %c0_54 = arith.constant 0 : index
    %c0_55 = arith.constant 0 : index
    %c0_56 = arith.constant 0 : index
    %124 = vector.load %arg13[%c0_54, %c0_55, %c0_56] : memref<2x1x32xf32, #tpu.memory_space<vmem>>, vector<1x1x32xf32>
    %125 = vector.shape_cast %124 : vector<1x1x32xf32> to vector<1x32xf32>
    %126 = vector.broadcast %125 : vector<1x32xf32> to vector<17x32xf32>
    %127 = arith.addf %123, %126 : vector<17x32xf32>
    %128 = arith.addf %26, %127 : vector<17x32xf32>
    %c0_57 = arith.constant 0 : index
    %c0_58 = arith.constant 0 : index
    %c0_59 = arith.constant 0 : index
    %129 = vector.load %arg14[%c0_57, %c0_58, %c0_59] : memref<2x1x32xf32, #tpu.memory_space<vmem>>, vector<1x1x32xf32>
    %130 = vector.shape_cast %129 : vector<1x1x32xf32> to vector<1x32xf32>
    %c0_60 = arith.constant 0 : index
    %c0_61 = arith.constant 0 : index
    %c0_62 = arith.constant 0 : index
    %131 = vector.load %arg15[%c0_60, %c0_61, %c0_62] : memref<2x1x32xf32, #tpu.memory_space<vmem>>, vector<1x1x32xf32>
    %132 = vector.shape_cast %131 : vector<1x1x32xf32> to vector<1x32xf32>
    %cst_63 = arith.constant dense<0.000000e+00> : vector<17xf32>
    %133 = vector.multi_reduction <add>, %128, %cst_63 [1] : vector<17x32xf32> to vector<17xf32>
    %134 = vector.shape_cast %133 : vector<17xf32> to vector<17x1xf32>
    %cst_64 = arith.constant 3.200000e+01 : f32
    %135 = vector.broadcast %cst_64 : f32 to vector<17x1xf32>
    %136 = arith.divf %134, %135 : vector<17x1xf32>
    %137 = vector.broadcast %136 : vector<17x1xf32> to vector<17x32xf32>
    %138 = arith.subf %128, %137 : vector<17x32xf32>
    %139 = arith.mulf %138, %138 : vector<17x32xf32>
    %cst_65 = arith.constant dense<0.000000e+00> : vector<17xf32>
    %140 = vector.multi_reduction <add>, %139, %cst_65 [1] : vector<17x32xf32> to vector<17xf32>
    %141 = vector.shape_cast %140 : vector<17xf32> to vector<17x1xf32>
    %cst_66 = arith.constant 3.200000e+01 : f32
    %142 = vector.broadcast %cst_66 : f32 to vector<17x1xf32>
    %143 = arith.divf %141, %142 : vector<17x1xf32>
    %144 = vector.broadcast %136 : vector<17x1xf32> to vector<17x32xf32>
    %145 = arith.subf %128, %144 : vector<17x32xf32>
    %cst_67 = arith.constant 9.99999974E-6 : f32
    %146 = vector.broadcast %cst_67 : f32 to vector<17x1xf32>
    %147 = arith.addf %143, %146 : vector<17x1xf32>
    %148 = math.rsqrt %147 : vector<17x1xf32>
    %149 = vector.broadcast %148 : vector<17x1xf32> to vector<17x32xf32>
    %150 = arith.mulf %145, %149 : vector<17x32xf32>
    %151 = vector.broadcast %130 : vector<1x32xf32> to vector<17x32xf32>
    %152 = arith.mulf %150, %151 : vector<17x32xf32>
    %153 = vector.broadcast %132 : vector<1x32xf32> to vector<17x32xf32>
    %154 = arith.addf %152, %153 : vector<17x32xf32>
    %c0_68 = arith.constant 0 : index
    %c0_69 = arith.constant 0 : index
    %c0_70 = arith.constant 0 : index
    %155 = vector.load %arg18[%c0_68, %c0_69, %c0_70] : memref<2x32x128xbf16, #tpu.memory_space<vmem>>, vector<1x32x128xbf16>
    %156 = vector.shape_cast %155 : vector<1x32x128xbf16> to vector<32x128xbf16>
    %157 = arith.truncf %154 : vector<17x32xf32> to vector<17x32xbf16>
    %cst_71 = arith.constant dense<0.000000e+00> : vector<17x128xf32>
    %158 = tpu.matmul %157, %156, %cst_71 {dimension_numbers = #tpu.dot_dimension_numbers<[1], [0], [0], [1], [0, 0, 1, 1], [], []>} : vector<17x32xbf16>, vector<32x128xbf16>, vector<17x128xf32> -> vector<17x128xf32>
    %c0_72 = arith.constant 0 : index
    %c0_73 = arith.constant 0 : index
    %c0_74 = arith.constant 0 : index
    %159 = vector.load %arg19[%c0_72, %c0_73, %c0_74] : memref<2x1x128xf32, #tpu.memory_space<vmem>>, vector<1x1x128xf32>
    %160 = vector.shape_cast %159 : vector<1x1x128xf32> to vector<1x128xf32>
    %161 = vector.broadcast %160 : vector<1x128xf32> to vector<17x128xf32>
    %162 = arith.addf %158, %161 : vector<17x128xf32>
    %163 = arith.mulf %162, %162 : vector<17x128xf32>
    %164 = arith.mulf %162, %163 : vector<17x128xf32>
    %cst_75 = arith.constant 4.471500e-02 : f32
    %165 = vector.broadcast %cst_75 : f32 to vector<17x128xf32>
    %166 = arith.mulf %165, %164 : vector<17x128xf32>
    %167 = arith.addf %162, %166 : vector<17x128xf32>
    %cst_76 = arith.constant 0.797884583 : f32
    %168 = vector.broadcast %cst_76 : f32 to vector<17x128xf32>
    %169 = arith.mulf %168, %167 : vector<17x128xf32>
    %170 = math.tanh %169 : vector<17x128xf32>
    %cst_77 = arith.constant 1.000000e+00 : f32
    %171 = vector.broadcast %cst_77 : f32 to vector<17x128xf32>
    %172 = arith.addf %171, %170 : vector<17x128xf32>
    %cst_78 = arith.constant 5.000000e-01 : f32
    %173 = vector.broadcast %cst_78 : f32 to vector<17x128xf32>
    %174 = arith.mulf %173, %172 : vector<17x128xf32>
    %175 = arith.mulf %162, %174 : vector<17x128xf32>
    %c0_79 = arith.constant 0 : index
    %c0_80 = arith.constant 0 : index
    %c0_81 = arith.constant 0 : index
    %176 = vector.load %arg20[%c0_79, %c0_80, %c0_81] : memref<2x128x32xbf16, #tpu.memory_space<vmem>>, vector<1x128x32xbf16>
    %177 = vector.shape_cast %176 : vector<1x128x32xbf16> to vector<128x32xbf16>
    %178 = arith.truncf %175 : vector<17x128xf32> to vector<17x128xbf16>
    %cst_82 = arith.constant dense<0.000000e+00> : vector<17x32xf32>
    %179 = tpu.matmul %178, %177, %cst_82 {dimension_numbers = #tpu.dot_dimension_numbers<[1], [0], [0], [1], [0, 0, 1, 1], [], []>} : vector<17x128xbf16>, vector<128x32xbf16>, vector<17x32xf32> -> vector<17x32xf32>
    %180 = arith.addf %154, %179 : vector<17x32xf32>
    %c0_83 = arith.constant 0 : index
    %c0_84 = arith.constant 0 : index
    %c0_85 = arith.constant 0 : index
    %181 = vector.load %arg21[%c0_83, %c0_84, %c0_85] : memref<2x1x32xf32, #tpu.memory_space<vmem>>, vector<1x1x32xf32>
    %182 = vector.shape_cast %181 : vector<1x1x32xf32> to vector<1x32xf32>
    %183 = vector.broadcast %182 : vector<1x32xf32> to vector<17x32xf32>
    %184 = arith.addf %180, %183 : vector<17x32xf32>
    %c0_86 = arith.constant 0 : index
    %c0_87 = arith.constant 0 : index
    %c0_88 = arith.constant 0 : index
    %185 = vector.load %arg16[%c0_86, %c0_87, %c0_88] : memref<2x1x32xf32, #tpu.memory_space<vmem>>, vector<1x1x32xf32>
    %186 = vector.shape_cast %185 : vector<1x1x32xf32> to vector<1x32xf32>
    %c0_89 = arith.constant 0 : index
    %c0_90 = arith.constant 0 : index
    %c0_91 = arith.constant 0 : index
    %187 = vector.load %arg17[%c0_89, %c0_90, %c0_91] : memref<2x1x32xf32, #tpu.memory_space<vmem>>, vector<1x1x32xf32>
    %188 = vector.shape_cast %187 : vector<1x1x32xf32> to vector<1x32xf32>
    %cst_92 = arith.constant dense<0.000000e+00> : vector<17xf32>
    %189 = vector.multi_reduction <add>, %184, %cst_92 [1] : vector<17x32xf32> to vector<17xf32>
    %190 = vector.shape_cast %189 : vector<17xf32> to vector<17x1xf32>
    %cst_93 = arith.constant 3.200000e+01 : f32
    %191 = vector.broadcast %cst_93 : f32 to vector<17x1xf32>
    %192 = arith.divf %190, %191 : vector<17x1xf32>
    %193 = vector.broadcast %192 : vector<17x1xf32> to vector<17x32xf32>
    %194 = arith.subf %184, %193 : vector<17x32xf32>
    %195 = arith.mulf %194, %194 : vector<17x32xf32>
    %cst_94 = arith.constant dense<0.000000e+00> : vector<17xf32>
    %196 = vector.multi_reduction <add>, %195, %cst_94 [1] : vector<17x32xf32> to vector<17xf32>
    %197 = vector.shape_cast %196 : vector<17xf32> to vector<17x1xf32>
    %cst_95 = arith.constant 3.200000e+01 : f32
    %198 = vector.broadcast %cst_95 : f32 to vector<17x1xf32>
    %199 = arith.divf %197, %198 : vector<17x1xf32>
    %200 = vector.broadcast %192 : vector<17x1xf32> to vector<17x32xf32>
    %201 = arith.subf %184, %200 : vector<17x32xf32>
    %cst_96 = arith.constant 9.99999974E-6 : f32
    %202 = vector.broadcast %cst_96 : f32 to vector<17x1xf32>
    %203 = arith.addf %199, %202 : vector<17x1xf32>
    %204 = math.rsqrt %203 : vector<17x1xf32>
    %205 = vector.broadcast %204 : vector<17x1xf32> to vector<17x32xf32>
    %206 = arith.mulf %201, %205 : vector<17x32xf32>
    %207 = vector.broadcast %186 : vector<1x32xf32> to vector<17x32xf32>
    %208 = arith.mulf %206, %207 : vector<17x32xf32>
    %209 = vector.broadcast %188 : vector<1x32xf32> to vector<17x32xf32>
    %210 = arith.addf %208, %209 : vector<17x32xf32>
    %c1 = arith.constant 1 : index
    %c0_97 = arith.constant 0 : index
    %c0_98 = arith.constant 0 : index
    %211 = vector.load %arg10[%c1, %c0_97, %c0_98] : memref<2x32x96xbf16, #tpu.memory_space<vmem>>, vector<1x32x96xbf16>
    %212 = vector.shape_cast %211 : vector<1x32x96xbf16> to vector<32x96xbf16>
    %213 = arith.truncf %210 : vector<17x32xf32> to vector<17x32xbf16>
    %cst_99 = arith.constant dense<0.000000e+00> : vector<17x96xf32>
    %214 = tpu.matmul %213, %212, %cst_99 {dimension_numbers = #tpu.dot_dimension_numbers<[1], [0], [0], [1], [0, 0, 1, 1], [], []>} : vector<17x32xbf16>, vector<32x96xbf16>, vector<17x96xf32> -> vector<17x96xf32>
    %c1_100 = arith.constant 1 : index
    %c0_101 = arith.constant 0 : index
    %c0_102 = arith.constant 0 : index
    %215 = vector.load %arg11[%c1_100, %c0_101, %c0_102] : memref<2x1x96xf32, #tpu.memory_space<vmem>>, vector<1x1x96xf32>
    %216 = vector.shape_cast %215 : vector<1x1x96xf32> to vector<1x96xf32>
    %217 = vector.broadcast %216 : vector<1x96xf32> to vector<17x96xf32>
    %218 = arith.addf %214, %217 : vector<17x96xf32>
    %219 = vector.extract_strided_slice %218 {offsets = [0, 0], sizes = [17, 8], strides = [1, 1]} : vector<17x96xf32> to vector<17x8xf32>
    %220 = vector.extract_strided_slice %218 {offsets = [0, 32], sizes = [17, 8], strides = [1, 1]} : vector<17x96xf32> to vector<17x8xf32>
    %221 = vector.extract_strided_slice %218 {offsets = [0, 64], sizes = [17, 8], strides = [1, 1]} : vector<17x96xf32> to vector<17x8xf32>
    %222 = arith.truncf %219 : vector<17x8xf32> to vector<17x8xbf16>
    %223 = arith.truncf %220 : vector<17x8xf32> to vector<17x8xbf16>
    %cst_103 = arith.constant dense<0.000000e+00> : vector<17x17xf32>
    %224 = tpu.matmul %222, %223, %cst_103 {dimension_numbers = #tpu.dot_dimension_numbers<[1], [1], [0], [0], [0, 0, 1, 0], [], []>} : vector<17x8xbf16>, vector<17x8xbf16>, vector<17x17xf32> -> vector<17x17xf32>
    %cst_104 = arith.constant 0.353553385 : f32
    %225 = vector.broadcast %cst_104 : f32 to vector<17x17xf32>
    %226 = arith.mulf %224, %225 : vector<17x17xf32>
    %cst_105 = arith.constant dense<0xFF800000> : vector<17xf32>
    %227 = vector.multi_reduction <maximumf>, %226, %cst_105 [1] : vector<17x17xf32> to vector<17xf32>
    %228 = vector.shape_cast %227 : vector<17xf32> to vector<17x1xf32>
    %229 = vector.broadcast %228 : vector<17x1xf32> to vector<17x17xf32>
    %230 = arith.subf %226, %229 : vector<17x17xf32>
    %231 = math.exp %230 : vector<17x17xf32>
    %cst_106 = arith.constant dense<0.000000e+00> : vector<17xf32>
    %232 = vector.multi_reduction <add>, %231, %cst_106 [1] : vector<17x17xf32> to vector<17xf32>
    %233 = vector.shape_cast %232 : vector<17xf32> to vector<17x1xf32>
    %234 = tpu.reciprocal %233 {approx = true} : vector<17x1xf32> -> vector<17x1xf32>
    %235 = vector.broadcast %234 : vector<17x1xf32> to vector<17x17xf32>
    %236 = arith.mulf %231, %235 : vector<17x17xf32>
    %237 = arith.truncf %236 : vector<17x17xf32> to vector<17x17xbf16>
    %238 = arith.truncf %221 : vector<17x8xf32> to vector<17x8xbf16>
    %cst_107 = arith.constant dense<0.000000e+00> : vector<17x8xf32>
    %239 = tpu.matmul %237, %238, %cst_107 {dimension_numbers = #tpu.dot_dimension_numbers<[1], [0], [0], [1], [0, 0, 1, 1], [], []>} : vector<17x17xbf16>, vector<17x8xbf16>, vector<17x8xf32> -> vector<17x8xf32>
    %240 = vector.extract_strided_slice %218 {offsets = [0, 8], sizes = [17, 8], strides = [1, 1]} : vector<17x96xf32> to vector<17x8xf32>
    %241 = vector.extract_strided_slice %218 {offsets = [0, 40], sizes = [17, 8], strides = [1, 1]} : vector<17x96xf32> to vector<17x8xf32>
    %242 = vector.extract_strided_slice %218 {offsets = [0, 72], sizes = [17, 8], strides = [1, 1]} : vector<17x96xf32> to vector<17x8xf32>
    %243 = arith.truncf %240 : vector<17x8xf32> to vector<17x8xbf16>
    %244 = arith.truncf %241 : vector<17x8xf32> to vector<17x8xbf16>
    %cst_108 = arith.constant dense<0.000000e+00> : vector<17x17xf32>
    %245 = tpu.matmul %243, %244, %cst_108 {dimension_numbers = #tpu.dot_dimension_numbers<[1], [1], [0], [0], [0, 0, 1, 0], [], []>} : vector<17x8xbf16>, vector<17x8xbf16>, vector<17x17xf32> -> vector<17x17xf32>
    %cst_109 = arith.constant 0.353553385 : f32
    %246 = vector.broadcast %cst_109 : f32 to vector<17x17xf32>
    %247 = arith.mulf %245, %246 : vector<17x17xf32>
    %cst_110 = arith.constant dense<0xFF800000> : vector<17xf32>
    %248 = vector.multi_reduction <maximumf>, %247, %cst_110 [1] : vector<17x17xf32> to vector<17xf32>
    %249 = vector.shape_cast %248 : vector<17xf32> to vector<17x1xf32>
    %250 = vector.broadcast %249 : vector<17x1xf32> to vector<17x17xf32>
    %251 = arith.subf %247, %250 : vector<17x17xf32>
    %252 = math.exp %251 : vector<17x17xf32>
    %cst_111 = arith.constant dense<0.000000e+00> : vector<17xf32>
    %253 = vector.multi_reduction <add>, %252, %cst_111 [1] : vector<17x17xf32> to vector<17xf32>
    %254 = vector.shape_cast %253 : vector<17xf32> to vector<17x1xf32>
    %255 = tpu.reciprocal %254 {approx = true} : vector<17x1xf32> -> vector<17x1xf32>
    %256 = vector.broadcast %255 : vector<17x1xf32> to vector<17x17xf32>
    %257 = arith.mulf %252, %256 : vector<17x17xf32>
    %258 = arith.truncf %257 : vector<17x17xf32> to vector<17x17xbf16>
    %259 = arith.truncf %242 : vector<17x8xf32> to vector<17x8xbf16>
    %cst_112 = arith.constant dense<0.000000e+00> : vector<17x8xf32>
    %260 = tpu.matmul %258, %259, %cst_112 {dimension_numbers = #tpu.dot_dimension_numbers<[1], [0], [0], [1], [0, 0, 1, 1], [], []>} : vector<17x17xbf16>, vector<17x8xbf16>, vector<17x8xf32> -> vector<17x8xf32>
    %261 = vector.extract_strided_slice %218 {offsets = [0, 16], sizes = [17, 8], strides = [1, 1]} : vector<17x96xf32> to vector<17x8xf32>
    %262 = vector.extract_strided_slice %218 {offsets = [0, 48], sizes = [17, 8], strides = [1, 1]} : vector<17x96xf32> to vector<17x8xf32>
    %263 = vector.extract_strided_slice %218 {offsets = [0, 80], sizes = [17, 8], strides = [1, 1]} : vector<17x96xf32> to vector<17x8xf32>
    %264 = arith.truncf %261 : vector<17x8xf32> to vector<17x8xbf16>
    %265 = arith.truncf %262 : vector<17x8xf32> to vector<17x8xbf16>
    %cst_113 = arith.constant dense<0.000000e+00> : vector<17x17xf32>
    %266 = tpu.matmul %264, %265, %cst_113 {dimension_numbers = #tpu.dot_dimension_numbers<[1], [1], [0], [0], [0, 0, 1, 0], [], []>} : vector<17x8xbf16>, vector<17x8xbf16>, vector<17x17xf32> -> vector<17x17xf32>
    %cst_114 = arith.constant 0.353553385 : f32
    %267 = vector.broadcast %cst_114 : f32 to vector<17x17xf32>
    %268 = arith.mulf %266, %267 : vector<17x17xf32>
    %cst_115 = arith.constant dense<0xFF800000> : vector<17xf32>
    %269 = vector.multi_reduction <maximumf>, %268, %cst_115 [1] : vector<17x17xf32> to vector<17xf32>
    %270 = vector.shape_cast %269 : vector<17xf32> to vector<17x1xf32>
    %271 = vector.broadcast %270 : vector<17x1xf32> to vector<17x17xf32>
    %272 = arith.subf %268, %271 : vector<17x17xf32>
    %273 = math.exp %272 : vector<17x17xf32>
    %cst_116 = arith.constant dense<0.000000e+00> : vector<17xf32>
    %274 = vector.multi_reduction <add>, %273, %cst_116 [1] : vector<17x17xf32> to vector<17xf32>
    %275 = vector.shape_cast %274 : vector<17xf32> to vector<17x1xf32>
    %276 = tpu.reciprocal %275 {approx = true} : vector<17x1xf32> -> vector<17x1xf32>
    %277 = vector.broadcast %276 : vector<17x1xf32> to vector<17x17xf32>
    %278 = arith.mulf %273, %277 : vector<17x17xf32>
    %279 = arith.truncf %278 : vector<17x17xf32> to vector<17x17xbf16>
    %280 = arith.truncf %263 : vector<17x8xf32> to vector<17x8xbf16>
    %cst_117 = arith.constant dense<0.000000e+00> : vector<17x8xf32>
    %281 = tpu.matmul %279, %280, %cst_117 {dimension_numbers = #tpu.dot_dimension_numbers<[1], [0], [0], [1], [0, 0, 1, 1], [], []>} : vector<17x17xbf16>, vector<17x8xbf16>, vector<17x8xf32> -> vector<17x8xf32>
    %282 = vector.extract_strided_slice %218 {offsets = [0, 24], sizes = [17, 8], strides = [1, 1]} : vector<17x96xf32> to vector<17x8xf32>
    %283 = vector.extract_strided_slice %218 {offsets = [0, 56], sizes = [17, 8], strides = [1, 1]} : vector<17x96xf32> to vector<17x8xf32>
    %284 = vector.extract_strided_slice %218 {offsets = [0, 88], sizes = [17, 8], strides = [1, 1]} : vector<17x96xf32> to vector<17x8xf32>
    %285 = arith.truncf %282 : vector<17x8xf32> to vector<17x8xbf16>
    %286 = arith.truncf %283 : vector<17x8xf32> to vector<17x8xbf16>
    %cst_118 = arith.constant dense<0.000000e+00> : vector<17x17xf32>
    %287 = tpu.matmul %285, %286, %cst_118 {dimension_numbers = #tpu.dot_dimension_numbers<[1], [1], [0], [0], [0, 0, 1, 0], [], []>} : vector<17x8xbf16>, vector<17x8xbf16>, vector<17x17xf32> -> vector<17x17xf32>
    %cst_119 = arith.constant 0.353553385 : f32
    %288 = vector.broadcast %cst_119 : f32 to vector<17x17xf32>
    %289 = arith.mulf %287, %288 : vector<17x17xf32>
    %cst_120 = arith.constant dense<0xFF800000> : vector<17xf32>
    %290 = vector.multi_reduction <maximumf>, %289, %cst_120 [1] : vector<17x17xf32> to vector<17xf32>
    %291 = vector.shape_cast %290 : vector<17xf32> to vector<17x1xf32>
    %292 = vector.broadcast %291 : vector<17x1xf32> to vector<17x17xf32>
    %293 = arith.subf %289, %292 : vector<17x17xf32>
    %294 = math.exp %293 : vector<17x17xf32>
    %cst_121 = arith.constant dense<0.000000e+00> : vector<17xf32>
    %295 = vector.multi_reduction <add>, %294, %cst_121 [1] : vector<17x17xf32> to vector<17xf32>
    %296 = vector.shape_cast %295 : vector<17xf32> to vector<17x1xf32>
    %297 = tpu.reciprocal %296 {approx = true} : vector<17x1xf32> -> vector<17x1xf32>
    %298 = vector.broadcast %297 : vector<17x1xf32> to vector<17x17xf32>
    %299 = arith.mulf %294, %298 : vector<17x17xf32>
    %300 = arith.truncf %299 : vector<17x17xf32> to vector<17x17xbf16>
    %301 = arith.truncf %284 : vector<17x8xf32> to vector<17x8xbf16>
    %cst_122 = arith.constant dense<0.000000e+00> : vector<17x8xf32>
    %302 = tpu.matmul %300, %301, %cst_122 {dimension_numbers = #tpu.dot_dimension_numbers<[1], [0], [0], [1], [0, 0, 1, 1], [], []>} : vector<17x17xbf16>, vector<17x8xbf16>, vector<17x8xf32> -> vector<17x8xf32>
    %303 = tpu.concatenate %239, %260, %281, %302 in 1 : vector<17x8xf32>, vector<17x8xf32>, vector<17x8xf32>, vector<17x8xf32> -> vector<17x32xf32>
    %c1_123 = arith.constant 1 : index
    %c0_124 = arith.constant 0 : index
    %c0_125 = arith.constant 0 : index
    %304 = vector.load %arg12[%c1_123, %c0_124, %c0_125] : memref<2x32x32xbf16, #tpu.memory_space<vmem>>, vector<1x32x32xbf16>
    %305 = vector.shape_cast %304 : vector<1x32x32xbf16> to vector<32x32xbf16>
    %306 = arith.truncf %303 : vector<17x32xf32> to vector<17x32xbf16>
    %cst_126 = arith.constant dense<0.000000e+00> : vector<17x32xf32>
    %307 = tpu.matmul %306, %305, %cst_126 {dimension_numbers = #tpu.dot_dimension_numbers<[1], [0], [0], [1], [0, 0, 1, 1], [], []>} : vector<17x32xbf16>, vector<32x32xbf16>, vector<17x32xf32> -> vector<17x32xf32>
    %c1_127 = arith.constant 1 : index
    %c0_128 = arith.constant 0 : index
    %c0_129 = arith.constant 0 : index
    %308 = vector.load %arg13[%c1_127, %c0_128, %c0_129] : memref<2x1x32xf32, #tpu.memory_space<vmem>>, vector<1x1x32xf32>
    %309 = vector.shape_cast %308 : vector<1x1x32xf32> to vector<1x32xf32>
    %310 = vector.broadcast %309 : vector<1x32xf32> to vector<17x32xf32>
    %311 = arith.addf %307, %310 : vector<17x32xf32>
    %312 = arith.addf %210, %311 : vector<17x32xf32>
    %c1_130 = arith.constant 1 : index
    %c0_131 = arith.constant 0 : index
    %c0_132 = arith.constant 0 : index
    %313 = vector.load %arg14[%c1_130, %c0_131, %c0_132] : memref<2x1x32xf32, #tpu.memory_space<vmem>>, vector<1x1x32xf32>
    %314 = vector.shape_cast %313 : vector<1x1x32xf32> to vector<1x32xf32>
    %c1_133 = arith.constant 1 : index
    %c0_134 = arith.constant 0 : index
    %c0_135 = arith.constant 0 : index
    %315 = vector.load %arg15[%c1_133, %c0_134, %c0_135] : memref<2x1x32xf32, #tpu.memory_space<vmem>>, vector<1x1x32xf32>
    %316 = vector.shape_cast %315 : vector<1x1x32xf32> to vector<1x32xf32>
    %cst_136 = arith.constant dense<0.000000e+00> : vector<17xf32>
    %317 = vector.multi_reduction <add>, %312, %cst_136 [1] : vector<17x32xf32> to vector<17xf32>
    %318 = vector.shape_cast %317 : vector<17xf32> to vector<17x1xf32>
    %cst_137 = arith.constant 3.200000e+01 : f32
    %319 = vector.broadcast %cst_137 : f32 to vector<17x1xf32>
    %320 = arith.divf %318, %319 : vector<17x1xf32>
    %321 = vector.broadcast %320 : vector<17x1xf32> to vector<17x32xf32>
    %322 = arith.subf %312, %321 : vector<17x32xf32>
    %323 = arith.mulf %322, %322 : vector<17x32xf32>
    %cst_138 = arith.constant dense<0.000000e+00> : vector<17xf32>
    %324 = vector.multi_reduction <add>, %323, %cst_138 [1] : vector<17x32xf32> to vector<17xf32>
    %325 = vector.shape_cast %324 : vector<17xf32> to vector<17x1xf32>
    %cst_139 = arith.constant 3.200000e+01 : f32
    %326 = vector.broadcast %cst_139 : f32 to vector<17x1xf32>
    %327 = arith.divf %325, %326 : vector<17x1xf32>
    %328 = vector.broadcast %320 : vector<17x1xf32> to vector<17x32xf32>
    %329 = arith.subf %312, %328 : vector<17x32xf32>
    %cst_140 = arith.constant 9.99999974E-6 : f32
    %330 = vector.broadcast %cst_140 : f32 to vector<17x1xf32>
    %331 = arith.addf %327, %330 : vector<17x1xf32>
    %332 = math.rsqrt %331 : vector<17x1xf32>
    %333 = vector.broadcast %332 : vector<17x1xf32> to vector<17x32xf32>
    %334 = arith.mulf %329, %333 : vector<17x32xf32>
    %335 = vector.broadcast %314 : vector<1x32xf32> to vector<17x32xf32>
    %336 = arith.mulf %334, %335 : vector<17x32xf32>
    %337 = vector.broadcast %316 : vector<1x32xf32> to vector<17x32xf32>
    %338 = arith.addf %336, %337 : vector<17x32xf32>
    %c1_141 = arith.constant 1 : index
    %c0_142 = arith.constant 0 : index
    %c0_143 = arith.constant 0 : index
    %339 = vector.load %arg18[%c1_141, %c0_142, %c0_143] : memref<2x32x128xbf16, #tpu.memory_space<vmem>>, vector<1x32x128xbf16>
    %340 = vector.shape_cast %339 : vector<1x32x128xbf16> to vector<32x128xbf16>
    %341 = arith.truncf %338 : vector<17x32xf32> to vector<17x32xbf16>
    %cst_144 = arith.constant dense<0.000000e+00> : vector<17x128xf32>
    %342 = tpu.matmul %341, %340, %cst_144 {dimension_numbers = #tpu.dot_dimension_numbers<[1], [0], [0], [1], [0, 0, 1, 1], [], []>} : vector<17x32xbf16>, vector<32x128xbf16>, vector<17x128xf32> -> vector<17x128xf32>
    %c1_145 = arith.constant 1 : index
    %c0_146 = arith.constant 0 : index
    %c0_147 = arith.constant 0 : index
    %343 = vector.load %arg19[%c1_145, %c0_146, %c0_147] : memref<2x1x128xf32, #tpu.memory_space<vmem>>, vector<1x1x128xf32>
    %344 = vector.shape_cast %343 : vector<1x1x128xf32> to vector<1x128xf32>
    %345 = vector.broadcast %344 : vector<1x128xf32> to vector<17x128xf32>
    %346 = arith.addf %342, %345 : vector<17x128xf32>
    %347 = arith.mulf %346, %346 : vector<17x128xf32>
    %348 = arith.mulf %346, %347 : vector<17x128xf32>
    %cst_148 = arith.constant 4.471500e-02 : f32
    %349 = vector.broadcast %cst_148 : f32 to vector<17x128xf32>
    %350 = arith.mulf %349, %348 : vector<17x128xf32>
    %351 = arith.addf %346, %350 : vector<17x128xf32>
    %cst_149 = arith.constant 0.797884583 : f32
    %352 = vector.broadcast %cst_149 : f32 to vector<17x128xf32>
    %353 = arith.mulf %352, %351 : vector<17x128xf32>
    %354 = math.tanh %353 : vector<17x128xf32>
    %cst_150 = arith.constant 1.000000e+00 : f32
    %355 = vector.broadcast %cst_150 : f32 to vector<17x128xf32>
    %356 = arith.addf %355, %354 : vector<17x128xf32>
    %cst_151 = arith.constant 5.000000e-01 : f32
    %357 = vector.broadcast %cst_151 : f32 to vector<17x128xf32>
    %358 = arith.mulf %357, %356 : vector<17x128xf32>
    %359 = arith.mulf %346, %358 : vector<17x128xf32>
    %c1_152 = arith.constant 1 : index
    %c0_153 = arith.constant 0 : index
    %c0_154 = arith.constant 0 : index
    %360 = vector.load %arg20[%c1_152, %c0_153, %c0_154] : memref<2x128x32xbf16, #tpu.memory_space<vmem>>, vector<1x128x32xbf16>
    %361 = vector.shape_cast %360 : vector<1x128x32xbf16> to vector<128x32xbf16>
    %362 = arith.truncf %359 : vector<17x128xf32> to vector<17x128xbf16>
    %cst_155 = arith.constant dense<0.000000e+00> : vector<17x32xf32>
    %363 = tpu.matmul %362, %361, %cst_155 {dimension_numbers = #tpu.dot_dimension_numbers<[1], [0], [0], [1], [0, 0, 1, 1], [], []>} : vector<17x128xbf16>, vector<128x32xbf16>, vector<17x32xf32> -> vector<17x32xf32>
    %364 = arith.addf %338, %363 : vector<17x32xf32>
    %c1_156 = arith.constant 1 : index
    %c0_157 = arith.constant 0 : index
    %c0_158 = arith.constant 0 : index
    %365 = vector.load %arg21[%c1_156, %c0_157, %c0_158] : memref<2x1x32xf32, #tpu.memory_space<vmem>>, vector<1x1x32xf32>
    %366 = vector.shape_cast %365 : vector<1x1x32xf32> to vector<1x32xf32>
    %367 = vector.broadcast %366 : vector<1x32xf32> to vector<17x32xf32>
    %368 = arith.addf %364, %367 : vector<17x32xf32>
    %c1_159 = arith.constant 1 : index
    %c0_160 = arith.constant 0 : index
    %c0_161 = arith.constant 0 : index
    %369 = vector.load %arg16[%c1_159, %c0_160, %c0_161] : memref<2x1x32xf32, #tpu.memory_space<vmem>>, vector<1x1x32xf32>
    %370 = vector.shape_cast %369 : vector<1x1x32xf32> to vector<1x32xf32>
    %c1_162 = arith.constant 1 : index
    %c0_163 = arith.constant 0 : index
    %c0_164 = arith.constant 0 : index
    %371 = vector.load %arg17[%c1_162, %c0_163, %c0_164] : memref<2x1x32xf32, #tpu.memory_space<vmem>>, vector<1x1x32xf32>
    %372 = vector.shape_cast %371 : vector<1x1x32xf32> to vector<1x32xf32>
    %cst_165 = arith.constant dense<0.000000e+00> : vector<17xf32>
    %373 = vector.multi_reduction <add>, %368, %cst_165 [1] : vector<17x32xf32> to vector<17xf32>
    %374 = vector.shape_cast %373 : vector<17xf32> to vector<17x1xf32>
    %cst_166 = arith.constant 3.200000e+01 : f32
    %375 = vector.broadcast %cst_166 : f32 to vector<17x1xf32>
    %376 = arith.divf %374, %375 : vector<17x1xf32>
    %377 = vector.broadcast %376 : vector<17x1xf32> to vector<17x32xf32>
    %378 = arith.subf %368, %377 : vector<17x32xf32>
    %379 = arith.mulf %378, %378 : vector<17x32xf32>
    %cst_167 = arith.constant dense<0.000000e+00> : vector<17xf32>
    %380 = vector.multi_reduction <add>, %379, %cst_167 [1] : vector<17x32xf32> to vector<17xf32>
    %381 = vector.shape_cast %380 : vector<17xf32> to vector<17x1xf32>
    %cst_168 = arith.constant 3.200000e+01 : f32
    %382 = vector.broadcast %cst_168 : f32 to vector<17x1xf32>
    %383 = arith.divf %381, %382 : vector<17x1xf32>
    %384 = vector.broadcast %376 : vector<17x1xf32> to vector<17x32xf32>
    %385 = arith.subf %368, %384 : vector<17x32xf32>
    %cst_169 = arith.constant 9.99999974E-6 : f32
    %386 = vector.broadcast %cst_169 : f32 to vector<17x1xf32>
    %387 = arith.addf %383, %386 : vector<17x1xf32>
    %388 = math.rsqrt %387 : vector<17x1xf32>
    %389 = vector.broadcast %388 : vector<17x1xf32> to vector<17x32xf32>
    %390 = arith.mulf %385, %389 : vector<17x32xf32>
    %391 = vector.broadcast %370 : vector<1x32xf32> to vector<17x32xf32>
    %392 = arith.mulf %390, %391 : vector<17x32xf32>
    %393 = vector.broadcast %372 : vector<1x32xf32> to vector<17x32xf32>
    %394 = arith.addf %392, %393 : vector<17x32xf32>
    %c0_170 = arith.constant 0 : index
    %c0_171 = arith.constant 0 : index
    %395 = vector.load %arg22[%c0_170, %c0_171] : memref<1x32xf32, #tpu.memory_space<vmem>>, vector<1x32xf32>
    %c0_172 = arith.constant 0 : index
    %c0_173 = arith.constant 0 : index
    %396 = vector.load %arg23[%c0_172, %c0_173] : memref<1x32xf32, #tpu.memory_space<vmem>>, vector<1x32xf32>
    %cst_174 = arith.constant dense<0.000000e+00> : vector<17xf32>
    %397 = vector.multi_reduction <add>, %394, %cst_174 [1] : vector<17x32xf32> to vector<17xf32>
    %398 = vector.shape_cast %397 : vector<17xf32> to vector<17x1xf32>
    %cst_175 = arith.constant 3.200000e+01 : f32
    %399 = vector.broadcast %cst_175 : f32 to vector<17x1xf32>
    %400 = arith.divf %398, %399 : vector<17x1xf32>
    %401 = vector.broadcast %400 : vector<17x1xf32> to vector<17x32xf32>
    %402 = arith.subf %394, %401 : vector<17x32xf32>
    %403 = arith.mulf %402, %402 : vector<17x32xf32>
    %cst_176 = arith.constant dense<0.000000e+00> : vector<17xf32>
    %404 = vector.multi_reduction <add>, %403, %cst_176 [1] : vector<17x32xf32> to vector<17xf32>
    %405 = vector.shape_cast %404 : vector<17xf32> to vector<17x1xf32>
    %cst_177 = arith.constant 3.200000e+01 : f32
    %406 = vector.broadcast %cst_177 : f32 to vector<17x1xf32>
    %407 = arith.divf %405, %406 : vector<17x1xf32>
    %408 = vector.broadcast %400 : vector<17x1xf32> to vector<17x32xf32>
    %409 = arith.subf %394, %408 : vector<17x32xf32>
    %cst_178 = arith.constant 9.99999974E-6 : f32
    %410 = vector.broadcast %cst_178 : f32 to vector<17x1xf32>
    %411 = arith.addf %407, %410 : vector<17x1xf32>
    %412 = math.rsqrt %411 : vector<17x1xf32>
    %413 = vector.broadcast %412 : vector<17x1xf32> to vector<17x32xf32>
    %414 = arith.mulf %409, %413 : vector<17x32xf32>
    %415 = vector.broadcast %395 : vector<1x32xf32> to vector<17x32xf32>
    %416 = arith.mulf %414, %415 : vector<17x32xf32>
    %417 = vector.broadcast %396 : vector<1x32xf32> to vector<17x32xf32>
    %418 = arith.addf %416, %417 : vector<17x32xf32>
    %419 = vector.extract_strided_slice %418 {offsets = [0, 0], sizes = [16, 32], strides = [1, 1]} : vector<17x32xf32> to vector<16x32xf32>
    %c0_179 = arith.constant 0 : index
    %c0_180 = arith.constant 0 : index
    %420 = vector.load %arg24[%c0_179, %c0_180] : memref<32x128xbf16, #tpu.memory_space<vmem>>, vector<32x128xbf16>
    %421 = arith.truncf %419 : vector<16x32xf32> to vector<16x32xbf16>
    %cst_181 = arith.constant dense<0.000000e+00> : vector<16x128xf32>
    %422 = tpu.matmul %421, %420, %cst_181 {dimension_numbers = #tpu.dot_dimension_numbers<[1], [0], [0], [1], [0, 0, 1, 1], [], []>} : vector<16x32xbf16>, vector<32x128xbf16>, vector<16x128xf32> -> vector<16x128xf32>
    %c0_182 = arith.constant 0 : index
    %c0_183 = arith.constant 0 : index
    %423 = vector.load %arg25[%c0_182, %c0_183] : memref<1x128xf32, #tpu.memory_space<vmem>>, vector<1x128xf32>
    %424 = vector.broadcast %423 : vector<1x128xf32> to vector<16x128xf32>
    %425 = arith.addf %422, %424 : vector<16x128xf32>
    %c0_184 = arith.constant 0 : index
    %c0_185 = arith.constant 0 : index
    %c0_186 = arith.constant 0 : index
    %426 = vector.load %arg26[%c0_184, %c0_185, %c0_186] : memref<1x16x128xf32, #tpu.memory_space<vmem>>, vector<1x16x128xf32>
    %427 = vector.shape_cast %426 : vector<1x16x128xf32> to vector<16x128xf32>
    %428 = vector.shape_cast %425 : vector<16x128xf32> to vector<1x16x128xf32>
    tpu.vector_store %arg26[%c0_184, %c0_185, %c0_186], %428 {strides = array<i32>} : memref<1x16x128xf32, #tpu.memory_space<vmem>>, vector<1x16x128xf32>,
    %c0_187 = arith.constant 0 : index
    %c0_188 = arith.constant 0 : index
    %c0_189 = arith.constant 0 : index
    %429 = vector.load %arg3[%c0_187, %c0_188, %c0_189] : memref<1x16x128xf32, #tpu.memory_space<vmem>>, vector<1x16x128xf32>
    %430 = vector.shape_cast %429 : vector<1x16x128xf32> to vector<16x128xf32>
    %431 = arith.subf %425, %430 : vector<16x128xf32>
    %432 = math.absf %431 : vector<16x128xf32>
    %c0_190 = arith.constant 0 : index
    %c0_191 = arith.constant 0 : index
    %c0_192 = arith.constant 0 : index
    %433 = vector.load %arg4[%c0_190, %c0_191, %c0_192] : memref<1x16x128xf32, #tpu.memory_space<vmem>>, vector<1x16x128xf32>
    %434 = vector.shape_cast %433 : vector<1x16x128xf32> to vector<16x128xf32>
    %435 = arith.mulf %432, %434 : vector<16x128xf32>
    %436 = vector.shape_cast %435 : vector<16x128xf32> to vector<1x16x128xf32>
    %cst_193 = arith.constant dense<0.000000e+00> : vector<1xf32>
    %437 = vector.multi_reduction <add>, %436, %cst_193 [1, 2] : vector<1x16x128xf32> to vector<1xf32>
    %438 = vector.shape_cast %437 : vector<1xf32> to vector<1x1x1xf32>
    %439 = vector.extract %438[0, 0, 0] : f32 from vector<1x1x1xf32>
    %440 = vector.broadcast %439 : f32 to vector<1x1xf32>
    %cst_194 = arith.constant 0.020833334 : f32
    %441 = vector.broadcast %cst_194 : f32 to vector<1x1xf32>
    %442 = arith.mulf %440, %441 : vector<1x1xf32>
    %c0_195 = arith.constant 0 : index
    %c0_196 = arith.constant 0 : index
    %c0_197 = arith.constant 0 : index
    %443 = vector.load %arg27[%c0_195, %c0_196, %c0_197] : memref<1x1x1xf32, #tpu.memory_space<vmem>>, vector<1x1x1xf32>
    %444 = vector.shape_cast %443 : vector<1x1x1xf32> to vector<1x1xf32>
    %445 = vector.shape_cast %442 : vector<1x1xf32> to vector<1x1x1xf32>
    tpu.vector_store %arg27[%c0_195, %c0_196, %c0_197], %445 {strides = array<i32>} : memref<1x1x1xf32, #tpu.memory_space<vmem>>, vector<1x1x1xf32>,
    %446 = vector.shape_cast %1 : vector<16x1xf32> to vector<1x16x1xf32>
    %cst_198 = arith.constant dense<0.000000e+00> : vector<1xf32>
    %447 = vector.multi_reduction <add>, %446, %cst_198 [1, 2] : vector<1x16x1xf32> to vector<1xf32>
    %448 = vector.shape_cast %447 : vector<1xf32> to vector<1x1x1xf32>
    %449 = vector.extract %448[0, 0, 0] : f32 from vector<1x1x1xf32>
    %450 = vector.broadcast %449 : f32 to vector<1x1xf32>
    %c0_199 = arith.constant 0 : index
    %c0_200 = arith.constant 0 : index
    %c0_201 = arith.constant 0 : index
    %451 = vector.load %arg28[%c0_199, %c0_200, %c0_201] : memref<1x1x1xf32, #tpu.memory_space<vmem>>, vector<1x1x1xf32>
    %452 = vector.shape_cast %451 : vector<1x1x1xf32> to vector<1x1xf32>
    %453 = vector.shape_cast %450 : vector<1x1xf32> to vector<1x1x1xf32>
    tpu.vector_store %arg28[%c0_199, %c0_200, %c0_201], %453 {strides = array<i32>} : memref<1x1x1xf32, #tpu.memory_space<vmem>>, vector<1x1x1xf32>,
    return
  }
  func.func @transform_0(%arg0: i32) -> (i32, i32, i32) {
    %c0_i32 = arith.constant 0 : i32
    %c0_i32_0 = arith.constant 0 : i32
    %c0_i32_1 = arith.constant 0 : i32
    return %arg0, %c0_i32, %c0_i32_0 : i32, i32, i32
  }
  func.func @transform_1(%arg0: i32) -> (i32, i32, i32) {
    %c0_i32 = arith.constant 0 : i32
    %c0_i32_0 = arith.constant 0 : i32
    %c0_i32_1 = arith.constant 0 : i32
    return %arg0, %c0_i32, %c0_i32_0 : i32, i32, i32
  }
  func.func @transform_2(%arg0: i32) -> (i32, i32, i32) {
    %c0_i32 = arith.constant 0 : i32
    %c0_i32_0 = arith.constant 0 : i32
    %c0_i32_1 = arith.constant 0 : i32
    return %arg0, %c0_i32, %c0_i32_0 : i32, i32, i32
  }
  func.func @transform_3(%arg0: i32) -> (i32, i32, i32) {
    %c0_i32 = arith.constant 0 : i32
    %c0_i32_0 = arith.constant 0 : i32
    %c0_i32_1 = arith.constant 0 : i32
    return %arg0, %c0_i32, %c0_i32_0 : i32, i32, i32
  }
  func.func @transform_4(%arg0: i32) -> (i32, i32) {
    %c0_i32 = arith.constant 0 : i32
    %c0_i32_0 = arith.constant 0 : i32
    %c0_i32_1 = arith.constant 0 : i32
    return %c0_i32, %c0_i32_0 : i32, i32
  }
  func.func @transform_5(%arg0: i32) -> (i32, i32) {
    %c0_i32 = arith.constant 0 : i32
    %c0_i32_0 = arith.constant 0 : i32
    %c0_i32_1 = arith.constant 0 : i32
    return %c0_i32, %c0_i32_0 : i32, i32
  }
  func.func @transform_6(%arg0: i32) -> (i32, i32) {
    %c0_i32 = arith.constant 0 : i32
    %c0_i32_0 = arith.constant 0 : i32
    %c0_i32_1 = arith.constant 0 : i32
    return %c0_i32, %c0_i32_0 : i32, i32
  }
  func.func @transform_7(%arg0: i32) -> (i32, i32) {
    %c0_i32 = arith.constant 0 : i32
    %c0_i32_0 = arith.constant 0 : i32
    %c0_i32_1 = arith.constant 0 : i32
    return %c0_i32, %c0_i32_0 : i32, i32
  }
  func.func @transform_8(%arg0: i32) -> (i32, i32) {
    %c0_i32 = arith.constant 0 : i32
    %c0_i32_0 = arith.constant 0 : i32
    %c0_i32_1 = arith.constant 0 : i32
    return %c0_i32, %c0_i32_0 : i32, i32
  }
  func.func @transform_9(%arg0: i32) -> (i32, i32, i32) {
    %c0_i32 = arith.constant 0 : i32
    %c0_i32_0 = arith.constant 0 : i32
    %c0_i32_1 = arith.constant 0 : i32
    %c0_i32_2 = arith.constant 0 : i32
    return %c0_i32, %c0_i32_0, %c0_i32_1 : i32, i32, i32
  }
  func.func @transform_10(%arg0: i32) -> (i32, i32, i32) {
    %c0_i32 = arith.constant 0 : i32
    %c0_i32_0 = arith.constant 0 : i32
    %c0_i32_1 = arith.constant 0 : i32
    %c0_i32_2 = arith.constant 0 : i32
    return %c0_i32, %c0_i32_0, %c0_i32_1 : i32, i32, i32
  }
  func.func @transform_11(%arg0: i32) -> (i32, i32, i32) {
    %c0_i32 = arith.constant 0 : i32
    %c0_i32_0 = arith.constant 0 : i32
    %c0_i32_1 = arith.constant 0 : i32
    %c0_i32_2 = arith.constant 0 : i32
    return %c0_i32, %c0_i32_0, %c0_i32_1 : i32, i32, i32
  }
  func.func @transform_12(%arg0: i32) -> (i32, i32, i32) {
    %c0_i32 = arith.constant 0 : i32
    %c0_i32_0 = arith.constant 0 : i32
    %c0_i32_1 = arith.constant 0 : i32
    %c0_i32_2 = arith.constant 0 : i32
    return %c0_i32, %c0_i32_0, %c0_i32_1 : i32, i32, i32
  }
  func.func @transform_13(%arg0: i32) -> (i32, i32, i32) {
    %c0_i32 = arith.constant 0 : i32
    %c0_i32_0 = arith.constant 0 : i32
    %c0_i32_1 = arith.constant 0 : i32
    %c0_i32_2 = arith.constant 0 : i32
    return %c0_i32, %c0_i32_0, %c0_i32_1 : i32, i32, i32
  }
  func.func @transform_14(%arg0: i32) -> (i32, i32, i32) {
    %c0_i32 = arith.constant 0 : i32
    %c0_i32_0 = arith.constant 0 : i32
    %c0_i32_1 = arith.constant 0 : i32
    %c0_i32_2 = arith.constant 0 : i32
    return %c0_i32, %c0_i32_0, %c0_i32_1 : i32, i32, i32
  }
  func.func @transform_15(%arg0: i32) -> (i32, i32, i32) {
    %c0_i32 = arith.constant 0 : i32
    %c0_i32_0 = arith.constant 0 : i32
    %c0_i32_1 = arith.constant 0 : i32
    %c0_i32_2 = arith.constant 0 : i32
    return %c0_i32, %c0_i32_0, %c0_i32_1 : i32, i32, i32
  }
  func.func @transform_16(%arg0: i32) -> (i32, i32, i32) {
    %c0_i32 = arith.constant 0 : i32
    %c0_i32_0 = arith.constant 0 : i32
    %c0_i32_1 = arith.constant 0 : i32
    %c0_i32_2 = arith.constant 0 : i32
    return %c0_i32, %c0_i32_0, %c0_i32_1 : i32, i32, i32
  }
  func.func @transform_17(%arg0: i32) -> (i32, i32, i32) {
    %c0_i32 = arith.constant 0 : i32
    %c0_i32_0 = arith.constant 0 : i32
    %c0_i32_1 = arith.constant 0 : i32
    %c0_i32_2 = arith.constant 0 : i32
    return %c0_i32, %c0_i32_0, %c0_i32_1 : i32, i32, i32
  }
  func.func @transform_18(%arg0: i32) -> (i32, i32, i32) {
    %c0_i32 = arith.constant 0 : i32
    %c0_i32_0 = arith.constant 0 : i32
    %c0_i32_1 = arith.constant 0 : i32
    %c0_i32_2 = arith.constant 0 : i32
    return %c0_i32, %c0_i32_0, %c0_i32_1 : i32, i32, i32
  }
  func.func @transform_19(%arg0: i32) -> (i32, i32, i32) {
    %c0_i32 = arith.constant 0 : i32
    %c0_i32_0 = arith.constant 0 : i32
    %c0_i32_1 = arith.constant 0 : i32
    %c0_i32_2 = arith.constant 0 : i32
    return %c0_i32, %c0_i32_0, %c0_i32_1 : i32, i32, i32
  }
  func.func @transform_20(%arg0: i32) -> (i32, i32, i32) {
    %c0_i32 = arith.constant 0 : i32
    %c0_i32_0 = arith.constant 0 : i32
    %c0_i32_1 = arith.constant 0 : i32
    %c0_i32_2 = arith.constant 0 : i32
    return %c0_i32, %c0_i32_0, %c0_i32_1 : i32, i32, i32
  }
  func.func @transform_21(%arg0: i32) -> (i32, i32) {
    %c0_i32 = arith.constant 0 : i32
    %c0_i32_0 = arith.constant 0 : i32
    %c0_i32_1 = arith.constant 0 : i32
    return %c0_i32, %c0_i32_0 : i32, i32
  }
  func.func @transform_22(%arg0: i32) -> (i32, i32) {
    %c0_i32 = arith.constant 0 : i32
    %c0_i32_0 = arith.constant 0 : i32
    %c0_i32_1 = arith.constant 0 : i32
    return %c0_i32, %c0_i32_0 : i32, i32
  }
  func.func @transform_23(%arg0: i32) -> (i32, i32) {
    %c0_i32 = arith.constant 0 : i32
    %c0_i32_0 = arith.constant 0 : i32
    %c0_i32_1 = arith.constant 0 : i32
    return %c0_i32, %c0_i32_0 : i32, i32
  }
  func.func @transform_24(%arg0: i32) -> (i32, i32) {
    %c0_i32 = arith.constant 0 : i32
    %c0_i32_0 = arith.constant 0 : i32
    %c0_i32_1 = arith.constant 0 : i32
    return %c0_i32, %c0_i32_0 : i32, i32
  }
  func.func @transform_25(%arg0: i32) -> (i32, i32, i32) {
    %c0_i32 = arith.constant 0 : i32
    %c0_i32_0 = arith.constant 0 : i32
    %c0_i32_1 = arith.constant 0 : i32
    return %arg0, %c0_i32, %c0_i32_0 : i32, i32, i32
  }
  func.func @transform_26(%arg0: i32) -> (i32, i32, i32) {
    %c0_i32 = arith.constant 0 : i32
    %c0_i32_0 = arith.constant 0 : i32
    %c0_i32_1 = arith.constant 0 : i32
    return %arg0, %c0_i32, %c0_i32_0 : i32, i32, i32
  }
  func.func @transform_27(%arg0: i32) -> (i32, i32, i32) {
    %c0_i32 = arith.constant 0 : i32
    %c0_i32_0 = arith.constant 0 : i32
    %c0_i32_1 = arith.constant 0 : i32
    return %arg0, %c0_i32, %c0_i32_0 : i32, i32, i32
  }
}

</mosaic_0001>

<llo_original>
// kernel: simmim_forward.1
$region0: #{simmim_forward.1}
  #allocation0 [shape = 'u32[]', space=smem, size = 0x4, offset = 0x4, fixed_abs, tag = 'smem constant byte address 0x4 - core index']
  #allocation1 [shape = 'u32[144,128]{1,0:T(1,128)}', space=vmem, size = 0x12000, scoped, tag = 'internal scratch']
  #allocation2 [shape = 'f32[17,32]{1,0:T(8,128)}', space=vmem, size = 0x3000, scoped, tag = 'scratch operand']
  %s0 = inlined_call_operand.vmem [shape: f32[2,16,48], index: 0, kind: input, shape index: {}]
  %s1 = inlined_call_operand.vmem [shape: f32[2,16,1], index: 1, kind: input, shape index: {}]
  %s2 = inlined_call_operand.vmem [shape: f32[2,16,128], index: 2, kind: input, shape index: {}]
  %s3 = inlined_call_operand.vmem [shape: f32[2,16,128], index: 3, kind: input, shape index: {}]
  %s4 = inlined_call_operand.vmem [shape: f32[17,32], index: 4, kind: input, shape index: {}]
  %s5 = inlined_call_operand.vmem [shape: bf16[48,32], index: 5, kind: input, shape index: {}]
  %s6 = inlined_call_operand.vmem [shape: f32[1,32], index: 6, kind: input, shape index: {}]
  %s7 = inlined_call_operand.vmem [shape: f32[1,32], index: 7, kind: input, shape index: {}]
  %s8 = inlined_call_operand.vmem [shape: f32[1,32], index: 8, kind: input, shape index: {}]
  %s9 = inlined_call_operand.vmem [shape: bf16[2,32,96], index: 9, kind: input, shape index: {}]
  %s10 = inlined_call_operand.vmem [shape: f32[2,1,96], index: 10, kind: input, shape index: {}]
  %s11 = inlined_call_operand.vmem [shape: bf16[2,32,32], index: 11, kind: input, shape index: {}]
  %s12 = inlined_call_operand.vmem [shape: f32[2,1,32], index: 12, kind: input, shape index: {}]
  %s13 = inlined_call_operand.vmem [shape: f32[2,1,32], index: 13, kind: input, shape index: {}]
  %s14 = inlined_call_operand.vmem [shape: f32[2,1,32], index: 14, kind: input, shape index: {}]
  %s15 = inlined_call_operand.vmem [shape: f32[2,1,32], index: 15, kind: input, shape index: {}]
  %s16 = inlined_call_operand.vmem [shape: f32[2,1,32], index: 16, kind: input, shape index: {}]
  %s17 = inlined_call_operand.vmem [shape: bf16[2,32,128], index: 17, kind: input, shape index: {}]
  %s18 = inlined_call_operand.vmem [shape: f32[2,1,128], index: 18, kind: input, shape index: {}]
  %s19 = inlined_call_operand.vmem [shape: bf16[2,128,32], index: 19, kind: input, shape index: {}]
  %s20 = inlined_call_operand.vmem [shape: f32[2,1,32], index: 20, kind: input, shape index: {}]
  %s21 = inlined_call_operand.vmem [shape: f32[1,32], index: 21, kind: input, shape index: {}]
  %s22 = inlined_call_operand.vmem [shape: f32[1,32], index: 22, kind: input, shape index: {}]
  %s23 = inlined_call_operand.vmem [shape: bf16[32,128], index: 23, kind: input, shape index: {}]
  %s24 = inlined_call_operand.vmem [shape: f32[1,128], index: 24, kind: input, shape index: {}]
  %s25 = inlined_call_operand.vmem [shape: f32[2,16,128], index: 25, kind: output, shape index: {0}]
  %s26 = inlined_call_operand.vmem [shape: f32[2,1,1], index: 26, kind: output, shape index: {1}]
  %s27 = inlined_call_operand.vmem [shape: f32[2,1,1], index: 27, kind: output, shape index: {2}]
  %28 = xla_tuple %s25, %s26, %s27
  %s29 = sld [smem:[#allocation0]]
  $region149: #{simmim_forward.1} parent=0
    _
  %s31 = ssub.s32 1, %s29
  %s32 = scalar_select 0, %s31, %s29
  loop: start=0, step=1, limit=4
  $region2: #{simmim_forward.1} parent=0 // loop_pre_header
    _
  $region3: #{simmim_forward.1} parent=0 // loop_header
    %s34 = sphi 0, %s38
    %p35 = scmp.ge.s32.totalorder %s34, 4
    %s44 = sphi 0, %s46
    %s47 = sphi 0, %s44
    %s48 = sphi 0, %s47
    %s64 = sphi 0, %s48
    %s70 = sphi 0, %s72
    %s73 = sphi 0, %s70
    %s74 = sphi 0, %s73
    %s90 = sphi 0, %s74
    %s96 = sphi 0, %s98
    %s99 = sphi 0, %s96
    %s100 = sphi 0, %s99
    %s116 = sphi 0, %s100
    %s122 = sphi 0, %s124
    %s125 = sphi 0, %s122
    %s126 = sphi 0, %s125
    %s142 = sphi 0, %s126
    %s146 = sphi 0, %s146
    %s148 = sphi 0, %s146
    %s149 = sphi 0, %s148
    %s163 = sphi 0, %s149
    %s167 = sphi 0, %s167
    %s169 = sphi 0, %s167
    %s170 = sphi 0, %s169
    %s184 = sphi 0, %s170
    %s188 = sphi 0, %s188
    %s190 = sphi 0, %s188
    %s191 = sphi 0, %s190
    %s205 = sphi 0, %s191
    %s209 = sphi 0, %s209
    %s211 = sphi 0, %s209
    %s212 = sphi 0, %s211
    %s226 = sphi 0, %s212
    %s230 = sphi 0, %s230
    %s232 = sphi 0, %s230
    %s233 = sphi 0, %s232
    %s247 = sphi 0, %s233
    %s251 = sphi 0, %s251
    %s253 = sphi 0, %s251
    %s254 = sphi 0, %s253
    %s268 = sphi 0, %s254
    %s272 = sphi 0, %s272
    %s274 = sphi 0, %s272
    %s275 = sphi 0, %s274
    %s289 = sphi 0, %s275
    %s293 = sphi 0, %s293
    %s295 = sphi 0, %s293
    %s296 = sphi 0, %s295
    %s310 = sphi 0, %s296
    %s314 = sphi 0, %s314
    %s316 = sphi 0, %s314
    %s317 = sphi 0, %s316
    %s331 = sphi 0, %s317
    %s335 = sphi 0, %s335
    %s337 = sphi 0, %s335
    %s338 = sphi 0, %s337
    %s352 = sphi 0, %s338
    %s356 = sphi 0, %s356
    %s358 = sphi 0, %s356
    %s359 = sphi 0, %s358
    %s373 = sphi 0, %s359
    %s377 = sphi 0, %s377
    %s379 = sphi 0, %s377
    %s380 = sphi 0, %s379
    %s394 = sphi 0, %s380
    %s398 = sphi 0, %s398
    %s400 = sphi 0, %s398
    %s401 = sphi 0, %s400
    %s415 = sphi 0, %s401
    %s419 = sphi 0, %s419
    %s421 = sphi 0, %s419
    %s422 = sphi 0, %s421
    %s436 = sphi 0, %s422
    %s440 = sphi 0, %s440
    %s442 = sphi 0, %s440
    %s443 = sphi 0, %s442
    %s457 = sphi 0, %s443
    %s461 = sphi 0, %s461
    %s463 = sphi 0, %s461
    %s464 = sphi 0, %s463
    %s478 = sphi 0, %s464
    %s482 = sphi 0, %s482
    %s484 = sphi 0, %s482
    %s485 = sphi 0, %s484
    %s499 = sphi 0, %s485
    %s503 = sphi 0, %s503
    %s505 = sphi 0, %s503
    %s506 = sphi 0, %s505
    %s520 = sphi 0, %s506
    %s524 = sphi 0, %s524
    %s526 = sphi 0, %s524
    %s527 = sphi 0, %s526
    %s541 = sphi 0, %s527
    %s545 = sphi 0, %s545
    %s547 = sphi 0, %s545
    %s548 = sphi 0, %s547
    %s562 = sphi 0, %s548
    %s566 = sphi 0, %s566
    %s568 = sphi 0, %s566
    %s569 = sphi 0, %s568
    %s583 = sphi 0, %s569
    %s589 = sphi 0, %s591
    %s592 = sphi 0, %s589
    %s593 = sphi 0, %s592
    %s609 = sphi 0, %s593
    %s615 = sphi 0, %s617
    %s618 = sphi 0, %s615
    %s619 = sphi 0, %s618
    %s635 = sphi 0, %s619
    %s641 = sphi 0, %s643
    %s644 = sphi 0, %s641
    %s645 = sphi 0, %s644
    %s661 = sphi 0, %s645
  $region4: #{simmim_forward.1} parent=0 // loop_header_branch
    %37 = sbr.rel (%p35) target = $region8
  $region5: #{simmim_forward.1} parent=0 // loop_body
    %s39 = ssub.s32 %s34, 1
    %s40 = ssub.s32 %s34, 2
    %s41 = sadd.s32 %s34, 1
    %s42 = ssub.s32 %s34, %s41
    %p43 = scmp.eq.s32.totalorder %s42, 0
    %s45 = sadd.s32 %s44, 1
    %s46 = scalar_select %p43, %s44, %s45
    %p49 = pneg %p43
    %p50 = scmp.eq.s32.totalorder %s34, 1
    %p51 = por %p49, %p50
    %p52 = scmp.ne.s32.totalorder %s44, %s47
    %p53 = scmp.eq.s32.totalorder %s34, 0
    %p54 = por %p52, %p53
    %p55 = scmp.ne.s32.totalorder %s44, %s47
    %p56 = scmp.eq.s32.totalorder %s39, 1
    %p57 = por %p55, %p56
    %p58 = scmp.ne.s32.totalorder %s47, %s48
    %p59 = scmp.eq.s32.totalorder %s39, 0
    %p60 = por %p58, %p59
    %p61 = scmp.ne.s32.totalorder %s47, %s48
    %p62 = scmp.eq.s32.totalorder %s40, 1
    %p63 = por %p61, %p62
    %p65 = scmp.ne.s32.totalorder %s48, %s64
    %p66 = scmp.eq.s32.totalorder %s40, 0
    %p67 = por %p65, %p66
    %s68 = ssub.s32 %s34, %s41
    %p69 = scmp.eq.s32.totalorder %s68, 0
    %s71 = sadd.s32 %s70, 1
    %s72 = scalar_select %p69, %s70, %s71
    %p75 = pneg %p69
    %p76 = scmp.eq.s32.totalorder %s34, 1
    %p77 = por %p75, %p76
    %p78 = scmp.ne.s32.totalorder %s70, %s73
    %p79 = scmp.eq.s32.totalorder %s34, 0
    %p80 = por %p78, %p79
    %p81 = scmp.ne.s32.totalorder %s70, %s73
    %p82 = scmp.eq.s32.totalorder %s39, 1
    %p83 = por %p81, %p82
    %p84 = scmp.ne.s32.totalorder %s73, %s74
    %p85 = scmp.eq.s32.totalorder %s39, 0
    %p86 = por %p84, %p85
    %p87 = scmp.ne.s32.totalorder %s73, %s74
    %p88 = scmp.eq.s32.totalorder %s40, 1
    %p89 = por %p87, %p88
    %p91 = scmp.ne.s32.totalorder %s74, %s90
    %p92 = scmp.eq.s32.totalorder %s40, 0
    %p93 = por %p91, %p92
    %s94 = ssub.s32 %s34, %s41
    %p95 = scmp.eq.s32.totalorder %s94, 0
    %s97 = sadd.s32 %s96, 1
    %s98 = scalar_select %p95, %s96, %s97
    %p101 = pneg %p95
    %p102 = scmp.eq.s32.totalorder %s34, 1
    %p103 = por %p101, %p102
    %p104 = scmp.ne.s32.totalorder %s96, %s99
    %p105 = scmp.eq.s32.totalorder %s34, 0
    %p106 = por %p104, %p105
    %p107 = scmp.ne.s32.totalorder %s96, %s99
    %p108 = scmp.eq.s32.totalorder %s39, 1
    %p109 = por %p107, %p108
    %p110 = scmp.ne.s32.totalorder %s99, %s100
    %p111 = scmp.eq.s32.totalorder %s39, 0
    %p112 = por %p110, %p111
    %p113 = scmp.ne.s32.totalorder %s99, %s100
    %p114 = scmp.eq.s32.totalorder %s40, 1
    %p115 = por %p113, %p114
    %p117 = scmp.ne.s32.totalorder %s100, %s116
    %p118 = scmp.eq.s32.totalorder %s40, 0
    %p119 = por %p117, %p118
    %s120 = ssub.s32 %s34, %s41
    %p121 = scmp.eq.s32.totalorder %s120, 0
    %s123 = sadd.s32 %s122, 1
    %s124 = scalar_select %p121, %s122, %s123
    %p127 = pneg %p121
    %p128 = scmp.eq.s32.totalorder %s34, 1
    %p129 = por %p127, %p128
    %p130 = scmp.ne.s32.totalorder %s122, %s125
    %p131 = scmp.eq.s32.totalorder %s34, 0
    %p132 = por %p130, %p131
    %p133 = scmp.ne.s32.totalorder %s122, %s125
    %p134 = scmp.eq.s32.totalorder %s39, 1
    %p135 = por %p133, %p134
    %p136 = scmp.ne.s32.totalorder %s125, %s126
    %p137 = scmp.eq.s32.totalorder %s39, 0
    %p138 = por %p136, %p137
    %p139 = scmp.ne.s32.totalorder %s125, %s126
    %p140 = scmp.eq.s32.totalorder %s40, 1
    %p141 = por %p139, %p140
    %p143 = scmp.ne.s32.totalorder %s126, %s142
    %p144 = scmp.eq.s32.totalorder %s40, 0
    %p145 = por %p143, %p144
    %s147 = sadd.s32 %s146, 1
    %p150 = scmp.eq.s32.totalorder %s34, 1
    %p151 = scmp.ne.s32.totalorder %s146, %s148
    %p152 = scmp.eq.s32.totalorder %s34, 0
    %p153 = por %p151, %p152
    %p154 = scmp.ne.s32.totalorder %s146, %s148
    %p155 = scmp.eq.s32.totalorder %s39, 1
    %p156 = por %p154, %p155
    %p157 = scmp.ne.s32.totalorder %s148, %s149
    %p158 = scmp.eq.s32.totalorder %s39, 0
    %p159 = por %p157, %p158
    %p160 = scmp.ne.s32.totalorder %s148, %s149
    %p161 = scmp.eq.s32.totalorder %s40, 1
    %p162 = por %p160, %p161
    %p164 = scmp.ne.s32.totalorder %s149, %s163
    %p165 = scmp.eq.s32.totalorder %s40, 0
    %p166 = por %p164, %p165
    %s168 = sadd.s32 %s167, 1
    %p171 = scmp.eq.s32.totalorder %s34, 1
    %p172 = scmp.ne.s32.totalorder %s167, %s169
    %p173 = scmp.eq.s32.totalorder %s34, 0
    %p174 = por %p172, %p173
    %p175 = scmp.ne.s32.totalorder %s167, %s169
    %p176 = scmp.eq.s32.totalorder %s39, 1
    %p177 = por %p175, %p176
    %p178 = scmp.ne.s32.totalorder %s169, %s170
    %p179 = scmp.eq.s32.totalorder %s39, 0
    %p180 = por %p178, %p179
    %p181 = scmp.ne.s32.totalorder %s169, %s170
    %p182 = scmp.eq.s32.totalorder %s40, 1
    %p183 = por %p181, %p182
    %p185 = scmp.ne.s32.totalorder %s170, %s184
    %p186 = scmp.eq.s32.totalorder %s40, 0
    %p187 = por %p185, %p186
    %s189 = sadd.s32 %s188, 1
    %p192 = scmp.eq.s32.totalorder %s34, 1
    %p193 = scmp.ne.s32.totalorder %s188, %s190
    %p194 = scmp.eq.s32.totalorder %s34, 0
    %p195 = por %p193, %p194
    %p196 = scmp.ne.s32.totalorder %s188, %s190
    %p197 = scmp.eq.s32.totalorder %s39, 1
    %p198 = por %p196, %p197
    %p199 = scmp.ne.s32.totalorder %s190, %s191
    %p200 = scmp.eq.s32.totalorder %s39, 0
    %p201 = por %p199, %p200
    %p202 = scmp.ne.s32.totalorder %s190, %s191
    %p203 = scmp.eq.s32.totalorder %s40, 1
    %p204 = por %p202, %p203
    %p206 = scmp.ne.s32.totalorder %s191, %s205
    %p207 = scmp.eq.s32.totalorder %s40, 0
    %p208 = por %p206, %p207
    %s210 = sadd.s32 %s209, 1
    %p213 = scmp.eq.s32.totalorder %s34, 1
    %p214 = scmp.ne.s32.totalorder %s209, %s211
    %p215 = scmp.eq.s32.totalorder %s34, 0
    %p216 = por %p214, %p215
    %p217 = scmp.ne.s32.totalorder %s209, %s211
    %p218 = scmp.eq.s32.totalorder %s39, 1
    %p219 = por %p217, %p218
    %p220 = scmp.ne.s32.totalorder %s211, %s212
    %p221 = scmp.eq.s32.totalorder %s39, 0
    %p222 = por %p220, %p221
    %p223 = scmp.ne.s32.totalorder %s211, %s212
    %p224 = scmp.eq.s32.totalorder %s40, 1
    %p225 = por %p223, %p224
    %p227 = scmp.ne.s32.totalorder %s212, %s226
    %p228 = scmp.eq.s32.totalorder %s40, 0
    %p229 = por %p227, %p228
    %s231 = sadd.s32 %s230, 1
    %p234 = scmp.eq.s32.totalorder %s34, 1
    %p235 = scmp.ne.s32.totalorder %s230, %s232
    %p236 = scmp.eq.s32.totalorder %s34, 0
    %p237 = por %p235, %p236
    %p238 = scmp.ne.s32.totalorder %s230, %s232
    %p239 = scmp.eq.s32.totalorder %s39, 1
    %p240 = por %p238, %p239
    %p241 = scmp.ne.s32.totalorder %s232, %s233
    %p242 = scmp.eq.s32.totalorder %s39, 0
    %p243 = por %p241, %p242
    %p244 = scmp.ne.s32.totalorder %s232, %s233
    %p245 = scmp.eq.s32.totalorder %s40, 1
    %p246 = por %p244, %p245
    %p248 = scmp.ne.s32.totalorder %s233, %s247
    %p249 = scmp.eq.s32.totalorder %s40, 0
    %p250 = por %p248, %p249
    %s252 = sadd.s32 %s251, 1
    %p255 = scmp.eq.s32.totalorder %s34, 1
    %p256 = scmp.ne.s32.totalorder %s251, %s253
    %p257 = scmp.eq.s32.totalorder %s34, 0
    %p258 = por %p256, %p257
    %p259 = scmp.ne.s32.totalorder %s251, %s253
    %p260 = scmp.eq.s32.totalorder %s39, 1
    %p261 = por %p259, %p260
    %p262 = scmp.ne.s32.totalorder %s253, %s254
    %p263 = scmp.eq.s32.totalorder %s39, 0
    %p264 = por %p262, %p263
    %p265 = scmp.ne.s32.totalorder %s253, %s254
    %p266 = scmp.eq.s32.totalorder %s40, 1
    %p267 = por %p265, %p266
    %p269 = scmp.ne.s32.totalorder %s254, %s268
    %p270 = scmp.eq.s32.totalorder %s40, 0
    %p271 = por %p269, %p270
    %s273 = sadd.s32 %s272, 1
    %p276 = scmp.eq.s32.totalorder %s34, 1
    %p277 = scmp.ne.s32.totalorder %s272, %s274
    %p278 = scmp.eq.s32.totalorder %s34, 0
    %p279 = por %p277, %p278
    %p280 = scmp.ne.s32.totalorder %s272, %s274
    %p281 = scmp.eq.s32.totalorder %s39, 1
    %p282 = por %p280, %p281
    %p283 = scmp.ne.s32.totalorder %s274, %s275
    %p284 = scmp.eq.s32.totalorder %s39, 0
    %p285 = por %p283, %p284
    %p286 = scmp.ne.s32.totalorder %s274, %s275
    %p287 = scmp.eq.s32.totalorder %s40, 1
    %p288 = por %p286, %p287
    %p290 = scmp.ne.s32.totalorder %s275, %s289
    %p291 = scmp.eq.s32.totalorder %s40, 0
    %p292 = por %p290, %p291
    %s294 = sadd.s32 %s293, 1
    %p297 = scmp.eq.s32.totalorder %s34, 1
    %p298 = scmp.ne.s32.totalorder %s293, %s295
    %p299 = scmp.eq.s32.totalorder %s34, 0
    %p300 = por %p298, %p299
    %p301 = scmp.ne.s32.totalorder %s293, %s295
    %p302 = scmp.eq.s32.totalorder %s39, 1
    %p303 = por %p301, %p302
    %p304 = scmp.ne.s32.totalorder %s295, %s296
    %p305 = scmp.eq.s32.totalorder %s39, 0
    %p306 = por %p304, %p305
    %p307 = scmp.ne.s32.totalorder %s295, %s296
    %p308 = scmp.eq.s32.totalorder %s40, 1
    %p309 = por %p307, %p308
    %p311 = scmp.ne.s32.totalorder %s296, %s310
    %p312 = scmp.eq.s32.totalorder %s40, 0
    %p313 = por %p311, %p312
    %s315 = sadd.s32 %s314, 1
    %p318 = scmp.eq.s32.totalorder %s34, 1
    %p319 = scmp.ne.s32.totalorder %s314, %s316
    %p320 = scmp.eq.s32.totalorder %s34, 0
    %p321 = por %p319, %p320
    %p322 = scmp.ne.s32.totalorder %s314, %s316
    %p323 = scmp.eq.s32.totalorder %s39, 1
    %p324 = por %p322, %p323
    %p325 = scmp.ne.s32.totalorder %s316, %s317
    %p326 = scmp.eq.s32.totalorder %s39, 0
    %p327 = por %p325, %p326
    %p328 = scmp.ne.s32.totalorder %s316, %s317
    %p329 = scmp.eq.s32.totalorder %s40, 1
    %p330 = por %p328, %p329
    %p332 = scmp.ne.s32.totalorder %s317, %s331
    %p333 = scmp.eq.s32.totalorder %s40, 0
    %p334 = por %p332, %p333
    %s336 = sadd.s32 %s335, 1
    %p339 = scmp.eq.s32.totalorder %s34, 1
    %p340 = scmp.ne.s32.totalorder %s335, %s337
    %p341 = scmp.eq.s32.totalorder %s34, 0
    %p342 = por %p340, %p341
    %p343 = scmp.ne.s32.totalorder %s335, %s337
    %p344 = scmp.eq.s32.totalorder %s39, 1
    %p345 = por %p343, %p344
    %p346 = scmp.ne.s32.totalorder %s337, %s338
    %p347 = scmp.eq.s32.totalorder %s39, 0
    %p348 = por %p346, %p347
    %p349 = scmp.ne.s32.totalorder %s337, %s338
    %p350 = scmp.eq.s32.totalorder %s40, 1
    %p351 = por %p349, %p350
    %p353 = scmp.ne.s32.totalorder %s338, %s352
    %p354 = scmp.eq.s32.totalorder %s40, 0
    %p355 = por %p353, %p354
    %s357 = sadd.s32 %s356, 1
    %p360 = scmp.eq.s32.totalorder %s34, 1
    %p361 = scmp.ne.s32.totalorder %s356, %s358
    %p362 = scmp.eq.s32.totalorder %s34, 0
    %p363 = por %p361, %p362
    %p364 = scmp.ne.s32.totalorder %s356, %s358
    %p365 = scmp.eq.s32.totalorder %s39, 1
    %p366 = por %p364, %p365
    %p367 = scmp.ne.s32.totalorder %s358, %s359
    %p368 = scmp.eq.s32.totalorder %s39, 0
    %p369 = por %p367, %p368
    %p370 = scmp.ne.s32.totalorder %s358, %s359
    %p371 = scmp.eq.s32.totalorder %s40, 1
    %p372 = por %p370, %p371
    %p374 = scmp.ne.s32.totalorder %s359, %s373
    %p375 = scmp.eq.s32.totalorder %s40, 0
    %p376 = por %p374, %p375
    %s378 = sadd.s32 %s377, 1
    %p381 = scmp.eq.s32.totalorder %s34, 1
    %p382 = scmp.ne.s32.totalorder %s377, %s379
    %p383 = scmp.eq.s32.totalorder %s34, 0
    %p384 = por %p382, %p383
    %p385 = scmp.ne.s32.totalorder %s377, %s379
    %p386 = scmp.eq.s32.totalorder %s39, 1
    %p387 = por %p385, %p386
    %p388 = scmp.ne.s32.totalorder %s379, %s380
    %p389 = scmp.eq.s32.totalorder %s39, 0
    %p390 = por %p388, %p389
    %p391 = scmp.ne.s32.totalorder %s379, %s380
    %p392 = scmp.eq.s32.totalorder %s40, 1
    %p393 = por %p391, %p392
    %p395 = scmp.ne.s32.totalorder %s380, %s394
    %p396 = scmp.eq.s32.totalorder %s40, 0
    %p397 = por %p395, %p396
    %s399 = sadd.s32 %s398, 1
    %p402 = scmp.eq.s32.totalorder %s34, 1
    %p403 = scmp.ne.s32.totalorder %s398, %s400
    %p404 = scmp.eq.s32.totalorder %s34, 0
    %p405 = por %p403, %p404
    %p406 = scmp.ne.s32.totalorder %s398, %s400
    %p407 = scmp.eq.s32.totalorder %s39, 1
    %p408 = por %p406, %p407
    %p409 = scmp.ne.s32.totalorder %s400, %s401
    %p410 = scmp.eq.s32.totalorder %s39, 0
    %p411 = por %p409, %p410
    %p412 = scmp.ne.s32.totalorder %s400, %s401
    %p413 = scmp.eq.s32.totalorder %s40, 1
    %p414 = por %p412, %p413
    %p416 = scmp.ne.s32.totalorder %s401, %s415
    %p417 = scmp.eq.s32.totalorder %s40, 0
    %p418 = por %p416, %p417
    %s420 = sadd.s32 %s419, 1
    %p423 = scmp.eq.s32.totalorder %s34, 1
    %p424 = scmp.ne.s32.totalorder %s419, %s421
    %p425 = scmp.eq.s32.totalorder %s34, 0
    %p426 = por %p424, %p425
    %p427 = scmp.ne.s32.totalorder %s419, %s421
    %p428 = scmp.eq.s32.totalorder %s39, 1
    %p429 = por %p427, %p428
    %p430 = scmp.ne.s32.totalorder %s421, %s422
    %p431 = scmp.eq.s32.totalorder %s39, 0
    %p432 = por %p430, %p431
    %p433 = scmp.ne.s32.totalorder %s421, %s422
    %p434 = scmp.eq.s32.totalorder %s40, 1
    %p435 = por %p433, %p434
    %p437 = scmp.ne.s32.totalorder %s422, %s436
    %p438 = scmp.eq.s32.totalorder %s40, 0
    %p439 = por %p437, %p438
    %s441 = sadd.s32 %s440, 1
    %p444 = scmp.eq.s32.totalorder %s34, 1
    %p445 = scmp.ne.s32.totalorder %s440, %s442
    %p446 = scmp.eq.s32.totalorder %s34, 0
    %p447 = por %p445, %p446
    %p448 = scmp.ne.s32.totalorder %s440, %s442
    %p449 = scmp.eq.s32.totalorder %s39, 1
    %p450 = por %p448, %p449
    %p451 = scmp.ne.s32.totalorder %s442, %s443
    %p452 = scmp.eq.s32.totalorder %s39, 0
    %p453 = por %p451, %p452
    %p454 = scmp.ne.s32.totalorder %s442, %s443
    %p455 = scmp.eq.s32.totalorder %s40, 1
    %p456 = por %p454, %p455
    %p458 = scmp.ne.s32.totalorder %s443, %s457
    %p459 = scmp.eq.s32.totalorder %s40, 0
    %p460 = por %p458, %p459
    %s462 = sadd.s32 %s461, 1
    %p465 = scmp.eq.s32.totalorder %s34, 1
    %p466 = scmp.ne.s32.totalorder %s461, %s463
    %p467 = scmp.eq.s32.totalorder %s34, 0
    %p468 = por %p466, %p467
    %p469 = scmp.ne.s32.totalorder %s461, %s463
    %p470 = scmp.eq.s32.totalorder %s39, 1
    %p471 = por %p469, %p470
    %p472 = scmp.ne.s32.totalorder %s463, %s464
    %p473 = scmp.eq.s32.totalorder %s39, 0
    %p474 = por %p472, %p473
    %p475 = scmp.ne.s32.totalorder %s463, %s464
    %p476 = scmp.eq.s32.totalorder %s40, 1
    %p477 = por %p475, %p476
    %p479 = scmp.ne.s32.totalorder %s464, %s478
    %p480 = scmp.eq.s32.totalorder %s40, 0
    %p481 = por %p479, %p480
    %s483 = sadd.s32 %s482, 1
    %p486 = scmp.eq.s32.totalorder %s34, 1
    %p487 = scmp.ne.s32.totalorder %s482, %s484
    %p488 = scmp.eq.s32.totalorder %s34, 0
    %p489 = por %p487, %p488
    %p490 = scmp.ne.s32.totalorder %s482, %s484
    %p491 = scmp.eq.s32.totalorder %s39, 1
    %p492 = por %p490, %p491
    %p493 = scmp.ne.s32.totalorder %s484, %s485
    %p494 = scmp.eq.s32.totalorder %s39, 0
    %p495 = por %p493, %p494
    %p496 = scmp.ne.s32.totalorder %s484, %s485
    %p497 = scmp.eq.s32.totalorder %s40, 1
    %p498 = por %p496, %p497
    %p500 = scmp.ne.s32.totalorder %s485, %s499
    %p501 = scmp.eq.s32.totalorder %s40, 0
    %p502 = por %p500, %p501
    %s504 = sadd.s32 %s503, 1
    %p507 = scmp.eq.s32.totalorder %s34, 1
    %p508 = scmp.ne.s32.totalorder %s503, %s505
    %p509 = scmp.eq.s32.totalorder %s34, 0
    %p510 = por %p508, %p509
    %p511 = scmp.ne.s32.totalorder %s503, %s505
    %p512 = scmp.eq.s32.totalorder %s39, 1
    %p513 = por %p511, %p512
    %p514 = scmp.ne.s32.totalorder %s505, %s506
    %p515 = scmp.eq.s32.totalorder %s39, 0
    %p516 = por %p514, %p515
    %p517 = scmp.ne.s32.totalorder %s505, %s506
    %p518 = scmp.eq.s32.totalorder %s40, 1
    %p519 = por %p517, %p518
    %p521 = scmp.ne.s32.totalorder %s506, %s520
    %p522 = scmp.eq.s32.totalorder %s40, 0
    %p523 = por %p521, %p522
    %s525 = sadd.s32 %s524, 1
    %p528 = scmp.eq.s32.totalorder %s34, 1
    %p529 = scmp.ne.s32.totalorder %s524, %s526
    %p530 = scmp.eq.s32.totalorder %s34, 0
    %p531 = por %p529, %p530
    %p532 = scmp.ne.s32.totalorder %s524, %s526
    %p533 = scmp.eq.s32.totalorder %s39, 1
    %p534 = por %p532, %p533
    %p535 = scmp.ne.s32.totalorder %s526, %s527
    %p536 = scmp.eq.s32.totalorder %s39, 0
    %p537 = por %p535, %p536
    %p538 = scmp.ne.s32.totalorder %s526, %s527
    %p539 = scmp.eq.s32.totalorder %s40, 1
    %p540 = por %p538, %p539
    %p542 = scmp.ne.s32.totalorder %s527, %s541
    %p543 = scmp.eq.s32.totalorder %s40, 0
    %p544 = por %p542, %p543
    %s546 = sadd.s32 %s545, 1
    %p549 = scmp.eq.s32.totalorder %s34, 1
    %p550 = scmp.ne.s32.totalorder %s545, %s547
    %p551 = scmp.eq.s32.totalorder %s34, 0
    %p552 = por %p550, %p551
    %p553 = scmp.ne.s32.totalorder %s545, %s547
    %p554 = scmp.eq.s32.totalorder %s39, 1
    %p555 = por %p553, %p554
    %p556 = scmp.ne.s32.totalorder %s547, %s548
    %p557 = scmp.eq.s32.totalorder %s39, 0
    %p558 = por %p556, %p557
    %p559 = scmp.ne.s32.totalorder %s547, %s548
    %p560 = scmp.eq.s32.totalorder %s40, 1
    %p561 = por %p559, %p560
    %p563 = scmp.ne.s32.totalorder %s548, %s562
    %p564 = scmp.eq.s32.totalorder %s40, 0
    %p565 = por %p563, %p564
    %s567 = sadd.s32 %s566, 1
    %p570 = scmp.eq.s32.totalorder %s34, 1
    %p571 = scmp.ne.s32.totalorder %s566, %s568
    %p572 = scmp.eq.s32.totalorder %s34, 0
    %p573 = por %p571, %p572
    %p574 = scmp.ne.s32.totalorder %s566, %s568
    %p575 = scmp.eq.s32.totalorder %s39, 1
    %p576 = por %p574, %p575
    %p577 = scmp.ne.s32.totalorder %s568, %s569
    %p578 = scmp.eq.s32.totalorder %s39, 0
    %p579 = por %p577, %p578
    %p580 = scmp.ne.s32.totalorder %s568, %s569
    %p581 = scmp.eq.s32.totalorder %s40, 1
    %p582 = por %p580, %p581
    %p584 = scmp.ne.s32.totalorder %s569, %s583
    %p585 = scmp.eq.s32.totalorder %s40, 0
    %p586 = por %p584, %p585
    %s587 = ssub.s32 %s34, %s41
    %p588 = scmp.eq.s32.totalorder %s587, 0
    %s590 = sadd.s32 %s589, 1
    %s591 = scalar_select %p588, %s589, %s590
    %p594 = pneg %p588
    %p595 = scmp.eq.s32.totalorder %s34, 1
    %p596 = por %p594, %p595
    %p597 = scmp.ne.s32.totalorder %s589, %s592
    %p598 = scmp.eq.s32.totalorder %s34, 0
    %p599 = por %p597, %p598
    %p600 = scmp.ne.s32.totalorder %s589, %s592
    %p601 = scmp.eq.s32.totalorder %s39, 1
    %p602 = por %p600, %p601
    %p603 = scmp.ne.s32.totalorder %s592, %s593
    %p604 = scmp.eq.s32.totalorder %s39, 0
    %p605 = por %p603, %p604
    %p606 = scmp.ne.s32.totalorder %s592, %s593
    %p607 = scmp.eq.s32.totalorder %s40, 1
    %p608 = por %p606, %p607
    %p610 = scmp.ne.s32.totalorder %s593, %s609
    %p611 = scmp.eq.s32.totalorder %s40, 0
    %p612 = por %p610, %p611
    %s613 = ssub.s32 %s34, %s41
    %p614 = scmp.eq.s32.totalorder %s613, 0
    %s616 = sadd.s32 %s615, 1
    %s617 = scalar_select %p614, %s615, %s616
    %p620 = pneg %p614
    %p621 = scmp.eq.s32.totalorder %s34, 1
    %p622 = por %p620, %p621
    %p623 = scmp.ne.s32.totalorder %s615, %s618
    %p624 = scmp.eq.s32.totalorder %s34, 0
    %p625 = por %p623, %p624
    %p626 = scmp.ne.s32.totalorder %s615, %s618
    %p627 = scmp.eq.s32.totalorder %s39, 1
    %p628 = por %p626, %p627
    %p629 = scmp.ne.s32.totalorder %s618, %s619
    %p630 = scmp.eq.s32.totalorder %s39, 0
    %p631 = por %p629, %p630
    %p632 = scmp.ne.s32.totalorder %s618, %s619
    %p633 = scmp.eq.s32.totalorder %s40, 1
    %p634 = por %p632, %p633
    %p636 = scmp.ne.s32.totalorder %s619, %s635
    %p637 = scmp.eq.s32.totalorder %s40, 0
    %p638 = por %p636, %p637
    %s639 = ssub.s32 %s34, %s41
    %p640 = scmp.eq.s32.totalorder %s639, 0
    %s642 = sadd.s32 %s641, 1
    %s643 = scalar_select %p640, %s641, %s642
    %p646 = pneg %p640
    %p647 = scmp.eq.s32.totalorder %s34, 1
    %p648 = por %p646, %p647
    %p649 = scmp.ne.s32.totalorder %s641, %s644
    %p650 = scmp.eq.s32.totalorder %s34, 0
    %p651 = por %p649, %p650
    %p652 = scmp.ne.s32.totalorder %s641, %s644
    %p653 = scmp.eq.s32.totalorder %s39, 1
    %p654 = por %p652, %p653
    %p655 = scmp.ne.s32.totalorder %s644, %s645
    %p656 = scmp.eq.s32.totalorder %s39, 0
    %p657 = por %p655, %p656
    %p658 = scmp.ne.s32.totalorder %s644, %s645
    %p659 = scmp.eq.s32.totalorder %s40, 1
    %p660 = por %p658, %p659
    %p662 = scmp.ne.s32.totalorder %s645, %s661
    %p663 = scmp.eq.s32.totalorder %s40, 0
    %p664 = por %p662, %p663
    %p665 = scmp.le.s32.totalorder 1, %s34
    %p666 = scmp.lt.s32.totalorder %s34, 3
    %p667 = pnand %p665, %p666
    %p668 = pneg %p667
    // Predicated region
    $region9: #{simmim_forward.1} parent=5 // pred_check
      _
    $region10: #{simmim_forward.1} parent=5 // pred_check_branch
      %670 = sbr.rel (%p667) target = $region12
    $region11: #{simmim_forward.1} parent=5 // pred_region
      %s671 = ssub.s32 %s34, 1
      // Predicated region
      $region13: #{simmim_forward.1} parent=11 // pred_check
        %p672 = pneg %p159
      $region14: #{simmim_forward.1} parent=11 // pred_check_branch
        %674 = sbr.rel (%p672) target = $region16
      $region15: #{simmim_forward.1} parent=11 // pred_region
        _
      $region16: #{simmim_forward.1} parent=11 // pred_fallthru
        _
      // Predicated region
      $region17: #{simmim_forward.1} parent=11 // pred_check
        %p675 = pneg %p180
      $region18: #{simmim_forward.1} parent=11 // pred_check_branch
        %677 = sbr.rel (%p675) target = $region20
      $region19: #{simmim_forward.1} parent=11 // pred_region
        _
      $region20: #{simmim_forward.1} parent=11 // pred_fallthru
        _
      // Predicated region
      $region21: #{simmim_forward.1} parent=11 // pred_check
        %p678 = pneg %p201
      $region22: #{simmim_forward.1} parent=11 // pred_check_branch
        %680 = sbr.rel (%p678) target = $region24
      $region23: #{simmim_forward.1} parent=11 // pred_region
        _
      $region24: #{simmim_forward.1} parent=11 // pred_fallthru
        _
      // Predicated region
      $region25: #{simmim_forward.1} parent=11 // pred_check
        %p681 = pneg %p222
      $region26: #{simmim_forward.1} parent=11 // pred_check_branch
        %683 = sbr.rel (%p681) target = $region28
      $region27: #{simmim_forward.1} parent=11 // pred_region
        _
      $region28: #{simmim_forward.1} parent=11 // pred_fallthru
        _
      // Predicated region
      $region29: #{simmim_forward.1} parent=11 // pred_check
        %p684 = pneg %p243
      $region30: #{simmim_forward.1} parent=11 // pred_check_branch
        %686 = sbr.rel (%p684) target = $region32
      $region31: #{simmim_forward.1} parent=11 // pred_region
        _
      $region32: #{simmim_forward.1} parent=11 // pred_fallthru
        _
      // Predicated region
      $region33: #{simmim_forward.1} parent=11 // pred_check
        %p687 = pneg %p264
      $region34: #{simmim_forward.1} parent=11 // pred_check_branch
        %689 = sbr.rel (%p687) target = $region36
      $region35: #{simmim_forward.1} parent=11 // pred_region
        _
      $region36: #{simmim_forward.1} parent=11 // pred_fallthru
        _
      // Predicated region
      $region37: #{simmim_forward.1} parent=11 // pred_check
        %p690 = pneg %p285
      $region38: #{simmim_forward.1} parent=11 // pred_check_branch
        %692 = sbr.rel (%p690) target = $region40
      $region39: #{simmim_forward.1} parent=11 // pred_region
        _
      $region40: #{simmim_forward.1} parent=11 // pred_fallthru
        _
      // Predicated region
      $region41: #{simmim_forward.1} parent=11 // pred_check
        %p693 = pneg %p306
      $region42: #{simmim_forward.1} parent=11 // pred_check_branch
        %695 = sbr.rel (%p693) target = $region44
      $region43: #{simmim_forward.1} parent=11 // pred_region
        _
      $region44: #{simmim_forward.1} parent=11 // pred_fallthru
        _
      // Predicated region
      $region45: #{simmim_forward.1} parent=11 // pred_check
        %p696 = pneg %p327
      $region46: #{simmim_forward.1} parent=11 // pred_check_branch
        %698 = sbr.rel (%p696) target = $region48
      $region47: #{simmim_forward.1} parent=11 // pred_region
        _
      $region48: #{simmim_forward.1} parent=11 // pred_fallthru
        _
      // Predicated region
      $region49: #{simmim_forward.1} parent=11 // pred_check
        %p699 = pneg %p348
      $region50: #{simmim_forward.1} parent=11 // pred_check_branch
        %701 = sbr.rel (%p699) target = $region52
      $region51: #{simmim_forward.1} parent=11 // pred_region
        _
      $region52: #{simmim_forward.1} parent=11 // pred_fallthru
        _
      // Predicated region
      $region53: #{simmim_forward.1} parent=11 // pred_check
        %p702 = pneg %p369
      $region54: #{simmim_forward.1} parent=11 // pred_check_branch
        %704 = sbr.rel (%p702) target = $region56
      $region55: #{simmim_forward.1} parent=11 // pred_region
        _
      $region56: #{simmim_forward.1} parent=11 // pred_fallthru
        _
      // Predicated region
      $region57: #{simmim_forward.1} parent=11 // pred_check
        %p705 = pneg %p390
      $region58: #{simmim_forward.1} parent=11 // pred_check_branch
        %707 = sbr.rel (%p705) target = $region60
      $region59: #{simmim_forward.1} parent=11 // pred_region
        _
      $region60: #{simmim_forward.1} parent=11 // pred_fallthru
        _
      // Predicated region
      $region61: #{simmim_forward.1} parent=11 // pred_check
        %p708 = pneg %p411
      $region62: #{simmim_forward.1} parent=11 // pred_check_branch
        %710 = sbr.rel (%p708) target = $region64
      $region63: #{simmim_forward.1} parent=11 // pred_region
        _
      $region64: #{simmim_forward.1} parent=11 // pred_fallthru
        _
      // Predicated region
      $region65: #{simmim_forward.1} parent=11 // pred_check
        %p711 = pneg %p432
      $region66: #{simmim_forward.1} parent=11 // pred_check_branch
        %713 = sbr.rel (%p711) target = $region68
      $region67: #{simmim_forward.1} parent=11 // pred_region
        _
      $region68: #{simmim_forward.1} parent=11 // pred_fallthru
        _
      // Predicated region
      $region69: #{simmim_forward.1} parent=11 // pred_check
        %p714 = pneg %p453
      $region70: #{simmim_forward.1} parent=11 // pred_check_branch
        %716 = sbr.rel (%p714) target = $region72
      $region71: #{simmim_forward.1} parent=11 // pred_region
        _
      $region72: #{simmim_forward.1} parent=11 // pred_fallthru
        _
      // Predicated region
      $region73: #{simmim_forward.1} parent=11 // pred_check
        %p717 = pneg %p474
      $region74: #{simmim_forward.1} parent=11 // pred_check_branch
        %719 = sbr.rel (%p717) target = $region76
      $region75: #{simmim_forward.1} parent=11 // pred_region
        _
      $region76: #{simmim_forward.1} parent=11 // pred_fallthru
        _
      // Predicated region
      $region77: #{simmim_forward.1} parent=11 // pred_check
        %p720 = pneg %p495
      $region78: #{simmim_forward.1} parent=11 // pred_check_branch
        %722 = sbr.rel (%p720) target = $region80
      $region79: #{simmim_forward.1} parent=11 // pred_region
        _
      $region80: #{simmim_forward.1} parent=11 // pred_fallthru
        _
      // Predicated region
      $region81: #{simmim_forward.1} parent=11 // pred_check
        %p723 = pneg %p516
      $region82: #{simmim_forward.1} parent=11 // pred_check_branch
        %725 = sbr.rel (%p723) target = $region84
      $region83: #{simmim_forward.1} parent=11 // pred_region
        _
      $region84: #{simmim_forward.1} parent=11 // pred_fallthru
        _
      // Predicated region
      $region85: #{simmim_forward.1} parent=11 // pred_check
        %p726 = pneg %p537
      $region86: #{simmim_forward.1} parent=11 // pred_check_branch
        %728 = sbr.rel (%p726) target = $region88
      $region87: #{simmim_forward.1} parent=11 // pred_region
        _
      $region88: #{simmim_forward.1} parent=11 // pred_fallthru
        _
      // Predicated region
      $region89: #{simmim_forward.1} parent=11 // pred_check
        %p729 = pneg %p558
      $region90: #{simmim_forward.1} parent=11 // pred_check_branch
        %731 = sbr.rel (%p729) target = $region92
      $region91: #{simmim_forward.1} parent=11 // pred_region
        _
      $region92: #{simmim_forward.1} parent=11 // pred_fallthru
        _
      // Predicated region
      $region93: #{simmim_forward.1} parent=11 // pred_check
        %p732 = pneg %p579
      $region94: #{simmim_forward.1} parent=11 // pred_check_branch
        %734 = sbr.rel (%p732) target = $region96
      $region95: #{simmim_forward.1} parent=11 // pred_region
        _
      $region96: #{simmim_forward.1} parent=11 // pred_fallthru
        _
    $region12: #{simmim_forward.1} parent=5 // pred_fallthru
      _
    %p735 = scmp.lt.s32.totalorder %s34, 2
    // Predicated region
    $region97: #{simmim_forward.1} parent=5 // pred_check
      %p736 = pneg %p735
    $region98: #{simmim_forward.1} parent=5 // pred_check_branch
      %738 = sbr.rel (%p736) target = $region100
    $region99: #{simmim_forward.1} parent=5 // pred_region
      // Predicated region
      $region101: #{simmim_forward.1} parent=99 // pred_check
        %p739 = pneg %p54
      $region102: #{simmim_forward.1} parent=99 // pred_check_branch
        %741 = sbr.rel (%p739) target = $region104
      $region103: #{simmim_forward.1} parent=99 // pred_region
        %p742 = scmp.lt.s32.totalorder %s34, 1
        %s743 = scalar_select %p742, %s34, 1
        %s744 = smul.addr %s743, 2
        %s745 = smul.addr %s744, 8
        %s746 = scalar_lea.vmem %s0, %s745
      $region104: #{simmim_forward.1} parent=99 // pred_fallthru
        _
      // Predicated region
      $region105: #{simmim_forward.1} parent=99 // pred_check
        %p747 = pneg %p80
      $region106: #{simmim_forward.1} parent=99 // pred_check_branch
        %749 = sbr.rel (%p747) target = $region108
      $region107: #{simmim_forward.1} parent=99 // pred_region
        %p750 = scmp.lt.s32.totalorder %s34, 1
        %s751 = scalar_select %p750, %s34, 1
        %s752 = smul.addr %s751, 2
        %s753 = smul.addr %s752, 8
        %s754 = scalar_lea.vmem %s1, %s753
      $region108: #{simmim_forward.1} parent=99 // pred_fallthru
        _
      // Predicated region
      $region109: #{simmim_forward.1} parent=99 // pred_check
        %p755 = pneg %p106
      $region110: #{simmim_forward.1} parent=99 // pred_check_branch
        %757 = sbr.rel (%p755) target = $region112
      $region111: #{simmim_forward.1} parent=99 // pred_region
        %p758 = scmp.lt.s32.totalorder %s34, 1
        %s759 = scalar_select %p758, %s34, 1
        %s760 = smul.addr %s759, 2
        %s761 = smul.addr %s760, 8
        %s762 = scalar_lea.vmem %s2, %s761
      $region112: #{simmim_forward.1} parent=99 // pred_fallthru
        _
      // Predicated region
      $region113: #{simmim_forward.1} parent=99 // pred_check
        %p763 = pneg %p132
      $region114: #{simmim_forward.1} parent=99 // pred_check_branch
        %765 = sbr.rel (%p763) target = $region116
      $region115: #{simmim_forward.1} parent=99 // pred_region
        %p766 = scmp.lt.s32.totalorder %s34, 1
        %s767 = scalar_select %p766, %s34, 1
        %s768 = smul.addr %s767, 2
        %s769 = smul.addr %s768, 8
        %s770 = scalar_lea.vmem %s3, %s769
      $region116: #{simmim_forward.1} parent=99 // pred_fallthru
        _
    $region100: #{simmim_forward.1} parent=5 // pred_fallthru
      _
    %p771 = scmp.le.s32.totalorder 1, %s34
    %p772 = scmp.lt.s32.totalorder %s34, 3
    %p773 = pnand %p771, %p772
    %p774 = pneg %p773
    // Predicated region
    $region117: #{simmim_forward.1} parent=5 // pred_check
      _
    $region118: #{simmim_forward.1} parent=5 // pred_check_branch
      %776 = sbr.rel (%p773) target = $region120
    $region119: #{simmim_forward.1} parent=5 // pred_region
      %s777 = ssub.s32 %s34, 1
      %p778 = scmp.lt.s32.totalorder %s39, 1
      %s779 = scalar_select %p778, %s39, 1
      %s780 = smul.addr %s779, 2
      %s781 = smul.addr %s780, 8
      %s782 = scalar_lea.vmem %s0, %s781
      %p783 = pneg %p60
      %p784 = pneg %p57
      %p785 = scmp.lt.s32.totalorder %s39, 1
      %s786 = scalar_select %p785, %s39, 1
      %s787 = smul.addr %s786, 2
      %s788 = smul.addr %s787, 8
      %s789 = scalar_lea.vmem %s1, %s788
      %p790 = pneg %p86
      %p791 = pneg %p83
      %p792 = scmp.lt.s32.totalorder %s39, 1
      %s793 = scalar_select %p792, %s39, 1
      %s794 = smul.addr %s793, 2
      %s795 = smul.addr %s794, 8
      %s796 = scalar_lea.vmem %s2, %s795
      %p797 = pneg %p112
      %p798 = pneg %p109
      %p799 = scmp.lt.s32.totalorder %s39, 1
      %s800 = scalar_select %p799, %s39, 1
      %s801 = smul.addr %s800, 2
      %s802 = smul.addr %s801, 8
      %s803 = scalar_lea.vmem %s3, %s802
      %p804 = pneg %p138
      %p805 = pneg %p135
      %p806 = pneg %p159
      %p807 = pneg %p156
      %p808 = pneg %p180
      %p809 = pneg %p177
      %p810 = pneg %p201
      %p811 = pneg %p198
      %p812 = pneg %p222
      %p813 = pneg %p219
      %p814 = pneg %p243
      %p815 = pneg %p240
      %p816 = pneg %p264
      %p817 = pneg %p261
      %p818 = pneg %p285
      %p819 = pneg %p282
      %p820 = pneg %p306
      %p821 = pneg %p303
      %p822 = pneg %p327
      %p823 = pneg %p324
      %p824 = pneg %p348
      %p825 = pneg %p345
      %p826 = pneg %p369
      %p827 = pneg %p366
      %p828 = pneg %p390
      %p829 = pneg %p387
      %p830 = pneg %p411
      %p831 = pneg %p408
      %p832 = pneg %p432
      %p833 = pneg %p429
      %p834 = pneg %p453
      %p835 = pneg %p450
      %p836 = pneg %p474
      %p837 = pneg %p471
      %p838 = pneg %p495
      %p839 = pneg %p492
      %p840 = pneg %p516
      %p841 = pneg %p513
      %p842 = pneg %p537
      %p843 = pneg %p534
      %p844 = pneg %p558
      %p845 = pneg %p555
      %p846 = pneg %p579
      %p847 = pneg %p576
      %p848 = pneg %p605
      %p849 = pneg %p602
      %p850 = scmp.lt.s32.totalorder %s39, 1
      %s851 = scalar_select %p850, %s39, 1
      %s852 = smul.addr %s851, 2
      %s853 = smul.addr %s852, 8
      %s854 = scalar_lea.vmem %s25, %s853
      %p855 = pneg %p631
      %p856 = pneg %p628
      %p857 = scmp.lt.s32.totalorder %s39, 1
      %s858 = scalar_select %p857, %s39, 1
      %s859 = scalar_lea.vmem %s26, %s858
      %p860 = pneg %p657
      %p861 = pneg %p654
      %p862 = scmp.lt.s32.totalorder %s39, 1
      %s863 = scalar_select %p862, %s39, 1
      %s864 = scalar_lea.vmem %s27, %s863
      %p865 = scmp.lt.s32.totalorder %s39, 1
      %s866 = scalar_select %p865, %s39, 1
      %s867 = smul.addr %s866, 2
      %s868 = smul.addr %s867, 8
      %s869 = scalar_lea.vmem %s0, %s868
      %p870 = scmp.lt.s32.totalorder %s39, 1
      %s871 = scalar_select %p870, %s39, 1
      %s872 = smul.addr %s871, 2
      %s873 = smul.addr %s872, 8
      %s874 = scalar_lea.vmem %s1, %s873
      %p875 = scmp.lt.s32.totalorder %s39, 1
      %s876 = scalar_select %p875, %s39, 1
      %s877 = smul.addr %s876, 2
      %s878 = smul.addr %s877, 8
      %s879 = scalar_lea.vmem %s2, %s878
      %p880 = scmp.lt.s32.totalorder %s39, 1
      %s881 = scalar_select %p880, %s39, 1
      %s882 = smul.addr %s881, 2
      %s883 = smul.addr %s882, 8
      %s884 = scalar_lea.vmem %s3, %s883
      %p885 = scmp.lt.s32.totalorder %s39, 1
      %s886 = scalar_select %p885, %s39, 1
      %s887 = smul.addr %s886, 2
      %s888 = smul.addr %s887, 8
      %s889 = scalar_lea.vmem %s25, %s888
      %p890 = scmp.lt.s32.totalorder %s39, 1
      %s891 = scalar_select %p890, %s39, 1
      %s892 = scalar_lea.vmem %s26, %s891
      %p893 = scmp.lt.s32.totalorder %s39, 1
      %s894 = scalar_select %p893, %s39, 1
      %s895 = scalar_lea.vmem %s27, %s894
      %v897 = vld [vmem:[%s874] sm:$0xff]
      %v898 = vld [vmem:[%s874 + $0x8] sm:$0xff]
      %v899 = vld [vmem:[%s869] sm:$0xff]
      %v900 = vld [vmem:[%s869 + $0x8] sm:$0xff]
      %v901 = vld [vmem:[%s5] sm:$0xf]
      %v902 = vld [vmem:[%s5 + $0x4] sm:$0xf]
      %v903 = vld [vmem:[%s5 + $0x8] sm:$0xf]
      %v904 = vld [vmem:[%s5 + $0xc] sm:$0xf]
      %v905 = vld [vmem:[%s5 + $0x10] sm:$0xf]
      %v906 = vld [vmem:[%s5 + $0x14] sm:$0xf]
      %v907 = vpack.c.bf16 %v900, %v899
      %v908 = vld [vmem:[%s6] sm:$0x1]
      %v910 = vlaneseq
      %v911 = vshrl.u32 %v910, 7
      %v912 = vsub.s32 0, %v911
      %v913 = vrot.slane %v908, %v912
      %v921 = vunpack.c.l.b16 %v901
      %v922 = vunpack.c.l.b16 %v902
      %v923 = vunpack.c.l.b16 %v903
      %v924 = vunpack.c.l.b16 %v904
      %v925 = vunpack.c.l.b16 %v905
      %v926 = vunpack.c.l.b16 %v906
      %v927 = vpack.c.b16 %v922, %v921
      %v928 = vpack.c.b16 %v924, %v923
      %v929 = vpack.c.b16 %v926, %v925
      %vm933 = vcmask 392192
      %v935 = vsel %vm933, %v907, 0
      %937 = vmatprep.subr.bf16.mxu0 0
      %938 = vmatpush1.bf16.msra.mxu0 0
      %939 = vmatprep.subr.bf16.mxu0 0
      %940 = vmatpush1.bf16.msra.mxu0 0
      %941 = vmatprep.subr.bf16.mxu0 0
      %942 = vmatpush1.bf16.msra.mxu0 0
      %943 = vmatprep.subr.bf16.mxu0 0
      %944 = vmatpush1.bf16.msra.mxu0 0
      %945 = vmatprep.subr.bf16.mxu0 0
      %946 = vmatpush1.bf16.msra.mxu0 0
      %947 = vmatprep.subr.bf16.mxu0 0
      %948 = vmatpush1.bf16.msra.mxu0 %v929
      %949 = vmatprep.subr.bf16.mxu0 0
      %950 = vmatpush1.bf16.msra.mxu0 %v928
      %951 = vmatprep.subr.bf16.mxu0 0
      %952 = vmatpush1.bf16.msra.mxu0 %v927
      %953 = vmatprep.subr.bf16.mxu0 0
      %954 = vmatpush2.bf16.msra.mxu0 0
      %955 = vmatprep.subr.bf16.mxu0 0
      %956 = vmatpush2.bf16.msra.mxu0 0
      %957 = vmatprep.subr.bf16.mxu0 0
      %958 = vmatpush2.bf16.msra.mxu0 0
      %959 = vmatprep.subr.bf16.mxu0 0
      %960 = vmatpush2.bf16.msra.mxu0 0
      %961 = vmatprep.subr.bf16.mxu0 0
      %962 = vmatpush2.bf16.msra.mxu0 0
      %963 = vmatprep.subr.bf16.mxu0 0
      %964 = vmatpush2.bf16.msra.mxu0 0
      %965 = vmatprep.subr.bf16.mxu0 0
      %966 = vmatpush2.bf16.msra.mxu0 0
      %967 = vmatprep.subr.bf16.mxu0 0
      %968 = vmatpush2.bf16.msra.mxu0 0
      %969 = vmatprep.mubr.bf16.mxu0 0
      %970 = vmatmul.mubr.bf16.gmra.mxu0 %v935
      %v971 = vpop.f32.mrf.mxu0
      %v972 = vadd.f32 %v913, %v971
      %v973 = vpop.f32.mrf.mxu0
      %v974 = vpop.f32.mrf.mxu0
      %v975 = vadd.f32 %v913, %v974
      %v976 = vpop.f32.mrf.mxu0
      %977 = vdwg.mxu0
      %v978 = vsub.f32 1.0, %v897
      %v979 = vsub.f32 1.0, %v898
      %981 = vset.pattern.permute.xlu0 0
      %982 = vperm.xlu0 %981, %v978
      %v983 = vpop.permute.xlu0 %982
      %986 = vset.pattern.permute.xlu0 0
      %987 = vperm.xlu0 %986, %v979
      %v988 = vpop.permute.xlu0 %987
      %v990 = vmul.f32 %v972, %v983
      %v991 = vmul.f32 %v975, %v988
      %v992 = vld [vmem:[%s7] sm:$0x1]
      %v994 = vlaneseq
      %v995 = vshrl.u32 %v994, 7
      %v996 = vsub.s32 0, %v995
      %v997 = vrot.slane %v992, %v996
      %1000 = vset.pattern.permute.xlu0 0
      %1001 = vperm.xlu0 %1000, %v897
      %v1002 = vpop.permute.xlu0 %1001
      %1005 = vset.pattern.permute.xlu0 0
      %1006 = vperm.xlu0 %1005, %v898
      %v1007 = vpop.permute.xlu0 %1006
      %v1009 = vmul.f32 %v997, %v1002
      %v1010 = vmul.f32 %v997, %v1007
      %v1011 = vadd.f32 %v990, %v1009
      %v1012 = vadd.f32 %v991, %v1010
      %v1013 = vld [vmem:[%s4] sm:$0xff]
      %v1014 = vld [vmem:[%s4 + $0x8] sm:$0xff]
      %v1015 = vadd.f32 %v1011, %v1013
      %v1016 = vadd.f32 %v1012, %v1014
      %vm1017 = vcmask 261120
      %1018 = vst.msk [vmem:[#allocation2] sm:$0xff] %vm1017, %v1015
      %1019 = vst.msk [vmem:[#allocation2 + $0x8] sm:$0xff] %vm1017, %v1016
      %v1020 = vld [vmem:[%s8] sm:$0x1]
      %v1021 = vld [vmem:[%s4 + $0x10] sm:$0x1]
      %v1022 = vadd.f32 %v1020, %v1021
      %vm1023 = vcmask 253952
      %1024 = vst.msk [vmem:[#allocation2 + $0x10] sm:$0x1] %vm1023, %v1022
      %v1025 = vld [vmem:[#allocation2] sm:$0xff]
      %v1026 = vld [vmem:[#allocation2 + $0x8] sm:$0xff]
      %v1027 = vld [vmem:[#allocation2 + $0x10] sm:$0x1]
      %v1028 = vld [vmem:[%s9] sm:$0xf]
      %v1029 = vld [vmem:[%s9 + $0x4] sm:$0xf]
      %v1030 = vld [vmem:[%s9 + $0x8] sm:$0xf]
      %v1031 = vld [vmem:[%s9 + $0xc] sm:$0xf]
      %v1032 = vpack.c.bf16 %v1026, %v1025
      %v1033 = vpack.c.bf16 %v1027, %v1027
      %v1034 = vld [vmem:[%s10] sm:$0x1]
      %v1036 = vlaneseq
      %v1037 = vshrl.u32 %v1036, 7
      %v1038 = vsub.s32 0, %v1037
      %v1039 = vrot.slane %v1034, %v1038
      %v1045 = vunpack.c.l.b16 %v1028
      %v1046 = vunpack.c.l.b16 %v1029
      %v1047 = vunpack.c.l.b16 %v1030
      %v1048 = vunpack.c.l.b16 %v1031
      %v1049 = vpack.c.b16 %v1046, %v1045
      %v1050 = vpack.c.b16 %v1048, %v1047
      %v1054 = vsel %vm1017, %v1032, 0
      %v1057 = vsel %vm1017, %v1033, 0
      %1059 = vmatprep.subr.bf16.mxu0 0
      %1060 = vmatpush1.bf16.msra.mxu0 0
      %1061 = vmatprep.subr.bf16.mxu0 0
      %1062 = vmatpush1.bf16.msra.mxu0 0
      %1063 = vmatprep.subr.bf16.mxu0 0
      %1064 = vmatpush1.bf16.msra.mxu0 0
      %1065 = vmatprep.subr.bf16.mxu0 0
      %1066 = vmatpush1.bf16.msra.mxu0 0
      %1067 = vmatprep.subr.bf16.mxu0 0
      %1068 = vmatpush1.bf16.msra.mxu0 0
      %1069 = vmatprep.subr.bf16.mxu0 0
      %1070 = vmatpush1.bf16.msra.mxu0 0
      %1071 = vmatprep.subr.bf16.mxu0 0
      %1072 = vmatpush1.bf16.msra.mxu0 %v1050
      %1073 = vmatprep.subr.bf16.mxu0 0
      %1074 = vmatpush1.bf16.msra.mxu0 %v1049
      %1075 = vmatprep.subr.bf16.mxu0 0
      %1076 = vmatpush2.bf16.msra.mxu0 0
      %1077 = vmatprep.subr.bf16.mxu0 0
      %1078 = vmatpush2.bf16.msra.mxu0 0
      %1079 = vmatprep.subr.bf16.mxu0 0
      %1080 = vmatpush2.bf16.msra.mxu0 0
      %1081 = vmatprep.subr.bf16.mxu0 0
      %1082 = vmatpush2.bf16.msra.mxu0 0
      %1083 = vmatprep.subr.bf16.mxu0 0
      %1084 = vmatpush2.bf16.msra.mxu0 0
      %1085 = vmatprep.subr.bf16.mxu0 0
      %1086 = vmatpush2.bf16.msra.mxu0 0
      %1087 = vmatprep.subr.bf16.mxu0 0
      %1088 = vmatpush2.bf16.msra.mxu0 0
      %1089 = vmatprep.subr.bf16.mxu0 0
      %1090 = vmatpush2.bf16.msra.mxu0 0
      %1091 = vmatprep.mubr.bf16.mxu0 0
      %1092 = vmatmul.mubr.bf16.gmra.mxu0 %v1054
      %v1093 = vpop.f32.mrf.mxu0
      %v1094 = vadd.f32 %v1039, %v1093
      %v1095 = vpop.f32.mrf.mxu0
      %v1096 = vpop.f32.mrf.mxu0
      %v1097 = vadd.f32 %v1039, %v1096
      %v1098 = vpop.f32.mrf.mxu0
      %1099 = vmatprep.mubr.bf16.mxu0 0
      %1100 = vmatmul.mubr.bf16.gmra.mxu0 %v1057
      %v1101 = vpop.f32.mrf.mxu0
      %v1102 = vadd.f32 %v1039, %v1101
      %v1103 = vpop.f32.mrf.mxu0
      %v1104 = vpop.f32.mrf.mxu0
      %v1105 = vpop.f32.mrf.mxu0
      %1106 = vdwg.mxu0
      %v1107 = vpack.c.bf16 %v1097, %v1094
      %v1108 = vpack.c.bf16 %v1102, %v1102
      %1111 = vrot.lane.b32.xlu0 %v1107, 96
      %v1112 = vpop.permute.xlu0 %1111
      %1113 = vrot.lane.b32.xlu0 %v1108, 96
      %v1114 = vpop.permute.xlu0 %1113
      %vm1115 = vcmask 64512
      %v1117 = vsel %vm1115, %v1107, 0
      %v1120 = vsel %vm1115, %v1108, 0
      %v1123 = vsel %vm1115, %v1112, 0
      %v1126 = vsel %vm1115, %v1114, 0
      %1128 = vmatprep.subr.bf16.mxu0 0
      %1129 = vmatpush1.bf16.xpose.msra.mxu0 0
      %1130 = vmatprep.subr.bf16.mxu0 0
      %1131 = vmatpush1.bf16.xpose.msra.mxu0 0
      %1132 = vmatprep.subr.bf16.mxu0 0
      %1133 = vmatpush1.bf16.xpose.msra.mxu0 0
      %1134 = vmatprep.subr.bf16.mxu0 0
      %1135 = vmatpush1.bf16.xpose.msra.mxu0 0
      %1136 = vmatprep.subr.bf16.mxu0 0
      %1137 = vmatpush1.bf16.xpose.msra.mxu0 0
      %1138 = vmatprep.subr.bf16.mxu0 0
      %1139 = vmatpush1.bf16.xpose.msra.mxu0 0
      %1140 = vmatprep.subr.bf16.mxu0 0
      %1141 = vmatpush1.bf16.xpose.msra.mxu0 %v1126
      %1142 = vmatprep.subr.bf16.mxu0 0
      %1143 = vmatpush1.bf16.xpose.msra.mxu0 %v1123
      %1144 = vmatprep.subr.bf16.mxu0 0
      %1145 = vmatpush2.bf16.xpose.msra.mxu0 0
      %1146 = vmatprep.subr.bf16.mxu0 0
      %1147 = vmatpush2.bf16.xpose.msra.mxu0 0
      %1148 = vmatprep.subr.bf16.mxu0 0
      %1149 = vmatpush2.bf16.xpose.msra.mxu0 0
      %1150 = vmatprep.subr.bf16.mxu0 0
      %1151 = vmatpush2.bf16.xpose.msra.mxu0 0
      %1152 = vmatprep.subr.bf16.mxu0 0
      %1153 = vmatpush2.bf16.xpose.msra.mxu0 0
      %1154 = vmatprep.subr.bf16.mxu0 0
      %1155 = vmatpush2.bf16.xpose.msra.mxu0 0
      %1156 = vmatprep.subr.bf16.mxu0 0
      %1157 = vmatpush2.bf16.xpose.msra.mxu0 0
      %1158 = vmatprep.subr.bf16.mxu0 0
      %1159 = vmatpush2.bf16.xpose.msra.mxu0 0
      %1160 = vmatprep.mubr.bf16.mxu0 0
      %1161 = vmatmul.mubr.bf16.gmra.mxu0 %v1117
      %v1162 = vpop.f32.mrf.mxu0
      %v1163 = vadd.f32 0.0, %v1162
      %v1164 = vpop.f32.mrf.mxu0
      %v1165 = vpop.f32.mrf.mxu0
      %v1166 = vadd.f32 0.0, %v1165
      %v1167 = vpop.f32.mrf.mxu0
      %1168 = vmatprep.mubr.bf16.mxu0 0
      %1169 = vmatmul.mubr.bf16.gmra.mxu0 %v1120
      %v1170 = vpop.f32.mrf.mxu0
      %v1171 = vadd.f32 0.0, %v1170
      %v1172 = vpop.f32.mrf.mxu0
      %v1173 = vpop.f32.mrf.mxu0
      %v1174 = vpop.f32.mrf.mxu0
      %1175 = vdwg.mxu0
      %v1176 = vmul.f32 %v1163, 0.35355338
      %v1177 = vmul.f32 %v1166, 0.35355338
      %v1178 = vmul.f32 %v1171, 0.35355338
      %vm1179 = vcmask 138240
      %v1180 = vsel %vm1179, %v1176, -inf
      %1181 = vmax.xlane.f32.xlu0 %v1180
      %v1182 = vpop.xlane.xlu0 %1181
      %v1183 = vsel %vm1179, %v1177, -inf
      %1184 = vmax.xlane.f32.xlu0 %v1183
      %v1185 = vpop.xlane.xlu0 %1184
      %vm1186 = vcmask 131072
      %v1187 = vsel %vm1186, %v1178, -inf
      %1188 = vmax.xlane.f32.xlu0 %v1187
      %v1189 = vpop.xlane.xlu0 %1188
      %v1190 = vsub.f32 %v1176, %v1182
      %v1191 = vsub.f32 %v1177, %v1185
      %v1192 = vsub.f32 %v1178, %v1189
      %v1193 = vmul.f32 %v1190, 1.442695
      %v1194 = vpow.pop %v1193
      %v1195 = vmul.f32 %v1191, 1.442695
      %v1196 = vpow.pop %v1195
      %v1197 = vmul.f32 %v1192, 1.442695
      %v1198 = vpow.pop %v1197
      %v1199 = vsel %vm1179, %v1194, 0.0
      %1200 = vadd.xlane.f32.xlu0 %v1199
      %v1201 = vpop.xlane.xlu0 %1200
      %v1202 = vsel %vm1179, %v1196, 0.0
      %1203 = vadd.xlane.f32.xlu0 %v1202
      %v1204 = vpop.xlane.xlu0 %1203
      %v1205 = vsel %vm1186, %v1198, 0.0
      %1206 = vadd.xlane.f32.xlu0 %v1205
      %v1207 = vpop.xlane.xlu0 %1206
      %v1208 = vrcp.pop %v1201
      %v1209 = vrcp.pop %v1204
      %v1210 = vrcp.pop %v1207
      %v1211 = vmul.f32 %v1194, %v1208
      %v1212 = vmul.f32 %v1196, %v1209
      %v1213 = vmul.f32 %v1198, %v1210
      %v1214 = vpack.c.bf16 %v1212, %v1211
      %v1215 = vpack.c.bf16 %v1213, %v1213
      %1216 = vrot.lane.b32.xlu0 %v1107, 64
      %v1217 = vpop.permute.xlu0 %1216
      %1218 = vrot.lane.b32.xlu0 %v1108, 64
      %v1219 = vpop.permute.xlu0 %1218
      %v1222 = vsel %vm1179, %v1214, 0
      %v1225 = vsel %vm1179, %v1215, 0
      %vm1227 = vcmask 1040384
      %v1228 = vsel 0, 4294967295, 65535
      %v1229 = vsel %vm1227, %v1228, 0
      %v1231 = vand.u32 %v1219, %v1229
      %1233 = vmatprep.subr.bf16.mxu0 0
      %1234 = vmatpush1.bf16.msra.mxu0 0
      %1235 = vmatprep.subr.bf16.mxu0 0
      %1236 = vmatpush1.bf16.msra.mxu0 0
      %1237 = vmatprep.subr.bf16.mxu0 0
      %1238 = vmatpush1.bf16.msra.mxu0 0
      %1239 = vmatprep.subr.bf16.mxu0 0
      %1240 = vmatpush1.bf16.msra.mxu0 0
      %1241 = vmatprep.subr.bf16.mxu0 0
      %1242 = vmatpush1.bf16.msra.mxu0 0
      %1243 = vmatprep.subr.bf16.mxu0 0
      %1244 = vmatpush1.bf16.msra.mxu0 0
      %1245 = vmatprep.subr.bf16.mxu0 0
      %1246 = vmatpush1.bf16.msra.mxu0 %v1231
      %1247 = vmatprep.subr.bf16.mxu0 0
      %1248 = vmatpush1.bf16.msra.mxu0 %v1217
      %1249 = vmatprep.subr.bf16.mxu0 0
      %1250 = vmatpush2.bf16.msra.mxu0 0
      %1251 = vmatprep.subr.bf16.mxu0 0
      %1252 = vmatpush2.bf16.msra.mxu0 0
      %1253 = vmatprep.subr.bf16.mxu0 0
      %1254 = vmatpush2.bf16.msra.mxu0 0
      %1255 = vmatprep.subr.bf16.mxu0 0
      %1256 = vmatpush2.bf16.msra.mxu0 0
      %1257 = vmatprep.subr.bf16.mxu0 0
      %1258 = vmatpush2.bf16.msra.mxu0 0
      %1259 = vmatprep.subr.bf16.mxu0 0
      %1260 = vmatpush2.bf16.msra.mxu0 0
      %1261 = vmatprep.subr.bf16.mxu0 0
      %1262 = vmatpush2.bf16.msra.mxu0 0
      %1263 = vmatprep.subr.bf16.mxu0 0
      %1264 = vmatpush2.bf16.msra.mxu0 0
      %1265 = vmatprep.mubr.bf16.mxu0 0
      %1266 = vmatmul.mubr.bf16.gmra.mxu0 %v1222
      %v1267 = vpop.f32.mrf.mxu0
      %v1268 = vadd.f32 0.0, %v1267
      %v1269 = vpop.f32.mrf.mxu0
      %v1270 = vpop.f32.mrf.mxu0
      %v1271 = vadd.f32 0.0, %v1270
      %v1272 = vpop.f32.mrf.mxu0
      %1273 = vmatprep.mubr.bf16.mxu0 0
      %1274 = vmatmul.mubr.bf16.gmra.mxu0 %v1225
      %v1275 = vpop.f32.mrf.mxu0
      %v1276 = vadd.f32 0.0, %v1275
      %v1277 = vpop.f32.mrf.mxu0
      %v1278 = vpop.f32.mrf.mxu0
      %v1279 = vpop.f32.mrf.mxu0
      %1280 = vdwg.mxu0
      %1281 = vrot.lane.b32.xlu0 %v1107, 120
      %v1282 = vpop.permute.xlu0 %1281
      %1283 = vrot.lane.b32.xlu0 %v1108, 120
      %v1284 = vpop.permute.xlu0 %1283
      %1285 = vrot.lane.b32.xlu0 %v1107, 88
      %v1286 = vpop.permute.xlu0 %1285
      %1287 = vrot.lane.b32.xlu0 %v1108, 88
      %v1288 = vpop.permute.xlu0 %1287
      %v1290 = vsel %vm1115, %v1282, 0
      %v1293 = vsel %vm1115, %v1284, 0
      %v1296 = vsel %vm1115, %v1286, 0
      %v1299 = vsel %vm1115, %v1288, 0
      %1301 = vmatprep.subr.bf16.mxu0 0
      %1302 = vmatpush1.bf16.xpose.msra.mxu0 0
      %1303 = vmatprep.subr.bf16.mxu0 0
      %1304 = vmatpush1.bf16.xpose.msra.mxu0 0
      %1305 = vmatprep.subr.bf16.mxu0 0
      %1306 = vmatpush1.bf16.xpose.msra.mxu0 0
      %1307 = vmatprep.subr.bf16.mxu0 0
      %1308 = vmatpush1.bf16.xpose.msra.mxu0 0
      %1309 = vmatprep.subr.bf16.mxu0 0
      %1310 = vmatpush1.bf16.xpose.msra.mxu0 0
      %1311 = vmatprep.subr.bf16.mxu0 0
      %1312 = vmatpush1.bf16.xpose.msra.mxu0 0
      %1313 = vmatprep.subr.bf16.mxu0 0
      %1314 = vmatpush1.bf16.xpose.msra.mxu0 %v1299
      %1315 = vmatprep.subr.bf16.mxu0 0
      %1316 = vmatpush1.bf16.xpose.msra.mxu0 %v1296
      %1317 = vmatprep.subr.bf16.mxu0 0
      %1318 = vmatpush2.bf16.xpose.msra.mxu0 0
      %1319 = vmatprep.subr.bf16.mxu0 0
      %1320 = vmatpush2.bf16.xpose.msra.mxu0 0
      %1321 = vmatprep.subr.bf16.mxu0 0
      %1322 = vmatpush2.bf16.xpose.msra.mxu0 0
      %1323 = vmatprep.subr.bf16.mxu0 0
      %1324 = vmatpush2.bf16.xpose.msra.mxu0 0
      %1325 = vmatprep.subr.bf16.mxu0 0
      %1326 = vmatpush2.bf16.xpose.msra.mxu0 0
      %1327 = vmatprep.subr.bf16.mxu0 0
      %1328 = vmatpush2.bf16.xpose.msra.mxu0 0
      %1329 = vmatprep.subr.bf16.mxu0 0
      %1330 = vmatpush2.bf16.xpose.msra.mxu0 0
      %1331 = vmatprep.subr.bf16.mxu0 0
      %1332 = vmatpush2.bf16.xpose.msra.mxu0 0
      %1333 = vmatprep.mubr.bf16.mxu0 0
      %1334 = vmatmul.mubr.bf16.gmra.mxu0 %v1290
      %v1335 = vpop.f32.mrf.mxu0
      %v1336 = vadd.f32 0.0, %v1335
      %v1337 = vpop.f32.mrf.mxu0
      %v1338 = vpop.f32.mrf.mxu0
      %v1339 = vadd.f32 0.0, %v1338
      %v1340 = vpop.f32.mrf.mxu0
      %1341 = vmatprep.mubr.bf16.mxu0 0
      %1342 = vmatmul.mubr.bf16.gmra.mxu0 %v1293
      %v1343 = vpop.f32.mrf.mxu0
      %v1344 = vadd.f32 0.0, %v1343
      %v1345 = vpop.f32.mrf.mxu0
      %v1346 = vpop.f32.mrf.mxu0
      %v1347 = vpop.f32.mrf.mxu0
      %1348 = vdwg.mxu0
      %v1349 = vmul.f32 %v1336, 0.35355338
      %v1350 = vmul.f32 %v1339, 0.35355338
      %v1351 = vmul.f32 %v1344, 0.35355338
      %v1352 = vsel %vm1179, %v1349, -inf
      %1353 = vmax.xlane.f32.xlu0 %v1352
      %v1354 = vpop.xlane.xlu0 %1353
      %v1355 = vsel %vm1179, %v1350, -inf
      %1356 = vmax.xlane.f32.xlu0 %v1355
      %v1357 = vpop.xlane.xlu0 %1356
      %v1358 = vsel %vm1186, %v1351, -inf
      %1359 = vmax.xlane.f32.xlu0 %v1358
      %v1360 = vpop.xlane.xlu0 %1359
      %v1361 = vsub.f32 %v1349, %v1354
      %v1362 = vsub.f32 %v1350, %v1357
      %v1363 = vsub.f32 %v1351, %v1360
      %v1364 = vmul.f32 %v1361, 1.442695
      %v1365 = vpow.pop %v1364
      %v1366 = vmul.f32 %v1362, 1.442695
      %v1367 = vpow.pop %v1366
      %v1368 = vmul.f32 %v1363, 1.442695
      %v1369 = vpow.pop %v1368
      %v1370 = vsel %vm1179, %v1365, 0.0
      %1371 = vadd.xlane.f32.xlu0 %v1370
      %v1372 = vpop.xlane.xlu0 %1371
      %v1373 = vsel %vm1179, %v1367, 0.0
      %1374 = vadd.xlane.f32.xlu0 %v1373
      %v1375 = vpop.xlane.xlu0 %1374
      %v1376 = vsel %vm1186, %v1369, 0.0
      %1377 = vadd.xlane.f32.xlu0 %v1376
      %v1378 = vpop.xlane.xlu0 %1377
      %v1379 = vrcp.pop %v1372
      %v1380 = vrcp.pop %v1375
      %v1381 = vrcp.pop %v1378
      %v1382 = vmul.f32 %v1365, %v1379
      %v1383 = vmul.f32 %v1367, %v1380
      %v1384 = vmul.f32 %v1369, %v1381
      %v1385 = vpack.c.bf16 %v1383, %v1382
      %v1386 = vpack.c.bf16 %v1384, %v1384
      %1387 = vrot.lane.b32.xlu0 %v1107, 56
      %v1388 = vpop.permute.xlu0 %1387
      %1389 = vrot.lane.b32.xlu0 %v1108, 56
      %v1390 = vpop.permute.xlu0 %1389
      %v1393 = vsel %vm1179, %v1385, 0
      %v1396 = vsel %vm1179, %v1386, 0
      %v1399 = vand.u32 %v1390, %v1229
      %1401 = vmatprep.subr.bf16.mxu0 0
      %1402 = vmatpush1.bf16.msra.mxu0 0
      %1403 = vmatprep.subr.bf16.mxu0 0
      %1404 = vmatpush1.bf16.msra.mxu0 0
      %1405 = vmatprep.subr.bf16.mxu0 0
      %1406 = vmatpush1.bf16.msra.mxu0 0
      %1407 = vmatprep.subr.bf16.mxu0 0
      %1408 = vmatpush1.bf16.msra.mxu0 0
      %1409 = vmatprep.subr.bf16.mxu0 0
      %1410 = vmatpush1.bf16.msra.mxu0 0
      %1411 = vmatprep.subr.bf16.mxu0 0
      %1412 = vmatpush1.bf16.msra.mxu0 0
      %1413 = vmatprep.subr.bf16.mxu0 0
      %1414 = vmatpush1.bf16.msra.mxu0 %v1399
      %1415 = vmatprep.subr.bf16.mxu0 0
      %1416 = vmatpush1.bf16.msra.mxu0 %v1388
      %1417 = vmatprep.subr.bf16.mxu0 0
      %1418 = vmatpush2.bf16.msra.mxu0 0
      %1419 = vmatprep.subr.bf16.mxu0 0
      %1420 = vmatpush2.bf16.msra.mxu0 0
      %1421 = vmatprep.subr.bf16.mxu0 0
      %1422 = vmatpush2.bf16.msra.mxu0 0
      %1423 = vmatprep.subr.bf16.mxu0 0
      %1424 = vmatpush2.bf16.msra.mxu0 0
      %1425 = vmatprep.subr.bf16.mxu0 0
      %1426 = vmatpush2.bf16.msra.mxu0 0
      %1427 = vmatprep.subr.bf16.mxu0 0
      %1428 = vmatpush2.bf16.msra.mxu0 0
      %1429 = vmatprep.subr.bf16.mxu0 0
      %1430 = vmatpush2.bf16.msra.mxu0 0
      %1431 = vmatprep.subr.bf16.mxu0 0
      %1432 = vmatpush2.bf16.msra.mxu0 0
      %1433 = vmatprep.mubr.bf16.mxu0 0
      %1434 = vmatmul.mubr.bf16.gmra.mxu0 %v1393
      %v1435 = vpop.f32.mrf.mxu0
      %v1436 = vadd.f32 0.0, %v1435
      %v1437 = vpop.f32.mrf.mxu0
      %v1438 = vpop.f32.mrf.mxu0
      %v1439 = vadd.f32 0.0, %v1438
      %v1440 = vpop.f32.mrf.mxu0
      %1441 = vmatprep.mubr.bf16.mxu0 0
      %1442 = vmatmul.mubr.bf16.gmra.mxu0 %v1396
      %v1443 = vpop.f32.mrf.mxu0
      %v1444 = vadd.f32 0.0, %v1443
      %v1445 = vpop.f32.mrf.mxu0
      %v1446 = vpop.f32.mrf.mxu0
      %v1447 = vpop.f32.mrf.mxu0
      %1448 = vdwg.mxu0
      %1449 = vrot.lane.b32.xlu0 %v1107, 112
      %v1450 = vpop.permute.xlu0 %1449
      %1451 = vrot.lane.b32.xlu0 %v1108, 112
      %v1452 = vpop.permute.xlu0 %1451
      %1453 = vrot.lane.b32.xlu0 %v1107, 80
      %v1454 = vpop.permute.xlu0 %1453
      %1455 = vrot.lane.b32.xlu0 %v1108, 80
      %v1456 = vpop.permute.xlu0 %1455
      %v1458 = vsel %vm1115, %v1450, 0
      %v1461 = vsel %vm1115, %v1452, 0
      %v1464 = vsel %vm1115, %v1454, 0
      %v1467 = vsel %vm1115, %v1456, 0
      %1469 = vmatprep.subr.bf16.mxu0 0
      %1470 = vmatpush1.bf16.xpose.msra.mxu0 0
      %1471 = vmatprep.subr.bf16.mxu0 0
      %1472 = vmatpush1.bf16.xpose.msra.mxu0 0
      %1473 = vmatprep.subr.bf16.mxu0 0
      %1474 = vmatpush1.bf16.xpose.msra.mxu0 0
      %1475 = vmatprep.subr.bf16.mxu0 0
      %1476 = vmatpush1.bf16.xpose.msra.mxu0 0
      %1477 = vmatprep.subr.bf16.mxu0 0
      %1478 = vmatpush1.bf16.xpose.msra.mxu0 0
      %1479 = vmatprep.subr.bf16.mxu0 0
      %1480 = vmatpush1.bf16.xpose.msra.mxu0 0
      %1481 = vmatprep.subr.bf16.mxu0 0
      %1482 = vmatpush1.bf16.xpose.msra.mxu0 %v1467
      %1483 = vmatprep.subr.bf16.mxu0 0
      %1484 = vmatpush1.bf16.xpose.msra.mxu0 %v1464
      %1485 = vmatprep.subr.bf16.mxu0 0
      %1486 = vmatpush2.bf16.xpose.msra.mxu0 0
      %1487 = vmatprep.subr.bf16.mxu0 0
      %1488 = vmatpush2.bf16.xpose.msra.mxu0 0
      %1489 = vmatprep.subr.bf16.mxu0 0
      %1490 = vmatpush2.bf16.xpose.msra.mxu0 0
      %1491 = vmatprep.subr.bf16.mxu0 0
      %1492 = vmatpush2.bf16.xpose.msra.mxu0 0
      %1493 = vmatprep.subr.bf16.mxu0 0
      %1494 = vmatpush2.bf16.xpose.msra.mxu0 0
      %1495 = vmatprep.subr.bf16.mxu0 0
      %1496 = vmatpush2.bf16.xpose.msra.mxu0 0
      %1497 = vmatprep.subr.bf16.mxu0 0
      %1498 = vmatpush2.bf16.xpose.msra.mxu0 0
      %1499 = vmatprep.subr.bf16.mxu0 0
      %1500 = vmatpush2.bf16.xpose.msra.mxu0 0
      %1501 = vmatprep.mubr.bf16.mxu0 0
      %1502 = vmatmul.mubr.bf16.gmra.mxu0 %v1458
      %v1503 = vpop.f32.mrf.mxu0
      %v1504 = vadd.f32 0.0, %v1503
      %v1505 = vpop.f32.mrf.mxu0
      %v1506 = vpop.f32.mrf.mxu0
      %v1507 = vadd.f32 0.0, %v1506
      %v1508 = vpop.f32.mrf.mxu0
      %1509 = vmatprep.mubr.bf16.mxu0 0
      %1510 = vmatmul.mubr.bf16.gmra.mxu0 %v1461
      %v1511 = vpop.f32.mrf.mxu0
      %v1512 = vadd.f32 0.0, %v1511
      %v1513 = vpop.f32.mrf.mxu0
      %v1514 = vpop.f32.mrf.mxu0
      %v1515 = vpop.f32.mrf.mxu0
      %1516 = vdwg.mxu0
      %v1517 = vmul.f32 %v1504, 0.35355338
      %v1518 = vmul.f32 %v1507, 0.35355338
      %v1519 = vmul.f32 %v1512, 0.35355338
      %v1520 = vsel %vm1179, %v1517, -inf
      %1521 = vmax.xlane.f32.xlu0 %v1520
      %v1522 = vpop.xlane.xlu0 %1521
      %v1523 = vsel %vm1179, %v1518, -inf
      %1524 = vmax.xlane.f32.xlu0 %v1523
      %v1525 = vpop.xlane.xlu0 %1524
      %v1526 = vsel %vm1186, %v1519, -inf
      %1527 = vmax.xlane.f32.xlu0 %v1526
      %v1528 = vpop.xlane.xlu0 %1527
      %v1529 = vsub.f32 %v1517, %v1522
      %v1530 = vsub.f32 %v1518, %v1525
      %v1531 = vsub.f32 %v1519, %v1528
      %v1532 = vmul.f32 %v1529, 1.442695
      %v1533 = vpow.pop %v1532
      %v1534 = vmul.f32 %v1530, 1.442695
      %v1535 = vpow.pop %v1534
      %v1536 = vmul.f32 %v1531, 1.442695
      %v1537 = vpow.pop %v1536
      %v1538 = vsel %vm1179, %v1533, 0.0
      %1539 = vadd.xlane.f32.xlu0 %v1538
      %v1540 = vpop.xlane.xlu0 %1539
      %v1541 = vsel %vm1179, %v1535, 0.0
      %1542 = vadd.xlane.f32.xlu0 %v1541
      %v1543 = vpop.xlane.xlu0 %1542
      %v1544 = vsel %vm1186, %v1537, 0.0
      %1545 = vadd.xlane.f32.xlu0 %v1544
      %v1546 = vpop.xlane.xlu0 %1545
      %v1547 = vrcp.pop %v1540
      %v1548 = vrcp.pop %v1543
      %v1549 = vrcp.pop %v1546
      %v1550 = vmul.f32 %v1533, %v1547
      %v1551 = vmul.f32 %v1535, %v1548
      %v1552 = vmul.f32 %v1537, %v1549
      %v1553 = vpack.c.bf16 %v1551, %v1550
      %v1554 = vpack.c.bf16 %v1552, %v1552
      %1555 = vrot.lane.b32.xlu0 %v1107, 48
      %v1556 = vpop.permute.xlu0 %1555
      %1557 = vrot.lane.b32.xlu0 %v1108, 48
      %v1558 = vpop.permute.xlu0 %1557
      %v1561 = vsel %vm1179, %v1553, 0
      %v1564 = vsel %vm1179, %v1554, 0
      %v1567 = vand.u32 %v1558, %v1229
      %1569 = vmatprep.subr.bf16.mxu0 0
      %1570 = vmatpush1.bf16.msra.mxu0 0
      %1571 = vmatprep.subr.bf16.mxu0 0
      %1572 = vmatpush1.bf16.msra.mxu0 0
      %1573 = vmatprep.subr.bf16.mxu0 0
      %1574 = vmatpush1.bf16.msra.mxu0 0
      %1575 = vmatprep.subr.bf16.mxu0 0
      %1576 = vmatpush1.bf16.msra.mxu0 0
      %1577 = vmatprep.subr.bf16.mxu0 0
      %1578 = vmatpush1.bf16.msra.mxu0 0
      %1579 = vmatprep.subr.bf16.mxu0 0
      %1580 = vmatpush1.bf16.msra.mxu0 0
      %1581 = vmatprep.subr.bf16.mxu0 0
      %1582 = vmatpush1.bf16.msra.mxu0 %v1567
      %1583 = vmatprep.subr.bf16.mxu0 0
      %1584 = vmatpush1.bf16.msra.mxu0 %v1556
      %1585 = vmatprep.subr.bf16.mxu0 0
      %1586 = vmatpush2.bf16.msra.mxu0 0
      %1587 = vmatprep.subr.bf16.mxu0 0
      %1588 = vmatpush2.bf16.msra.mxu0 0
      %1589 = vmatprep.subr.bf16.mxu0 0
      %1590 = vmatpush2.bf16.msra.mxu0 0
      %1591 = vmatprep.subr.bf16.mxu0 0
      %1592 = vmatpush2.bf16.msra.mxu0 0
      %1593 = vmatprep.subr.bf16.mxu0 0
      %1594 = vmatpush2.bf16.msra.mxu0 0
      %1595 = vmatprep.subr.bf16.mxu0 0
      %1596 = vmatpush2.bf16.msra.mxu0 0
      %1597 = vmatprep.subr.bf16.mxu0 0
      %1598 = vmatpush2.bf16.msra.mxu0 0
      %1599 = vmatprep.subr.bf16.mxu0 0
      %1600 = vmatpush2.bf16.msra.mxu0 0
      %1601 = vmatprep.mubr.bf16.mxu0 0
      %1602 = vmatmul.mubr.bf16.gmra.mxu0 %v1561
      %v1603 = vpop.f32.mrf.mxu0
      %v1604 = vadd.f32 0.0, %v1603
      %v1605 = vpop.f32.mrf.mxu0
      %v1606 = vpop.f32.mrf.mxu0
      %v1607 = vadd.f32 0.0, %v1606
      %v1608 = vpop.f32.mrf.mxu0
      %1609 = vmatprep.mubr.bf16.mxu0 0
      %1610 = vmatmul.mubr.bf16.gmra.mxu0 %v1564
      %v1611 = vpop.f32.mrf.mxu0
      %v1612 = vadd.f32 0.0, %v1611
      %v1613 = vpop.f32.mrf.mxu0
      %v1614 = vpop.f32.mrf.mxu0
      %v1615 = vpop.f32.mrf.mxu0
      %1616 = vdwg.mxu0
      %1617 = vrot.lane.b32.xlu0 %v1107, 104
      %v1618 = vpop.permute.xlu0 %1617
      %1619 = vrot.lane.b32.xlu0 %v1108, 104
      %v1620 = vpop.permute.xlu0 %1619
      %1621 = vrot.lane.b32.xlu0 %v1107, 72
      %v1622 = vpop.permute.xlu0 %1621
      %1623 = vrot.lane.b32.xlu0 %v1108, 72
      %v1624 = vpop.permute.xlu0 %1623
      %v1626 = vsel %vm1115, %v1618, 0
      %v1629 = vsel %vm1115, %v1620, 0
      %v1632 = vsel %vm1115, %v1622, 0
      %v1635 = vsel %vm1115, %v1624, 0
      %1637 = vmatprep.subr.bf16.mxu0 0
      %1638 = vmatpush1.bf16.xpose.msra.mxu0 0
      %1639 = vmatprep.subr.bf16.mxu0 0
      %1640 = vmatpush1.bf16.xpose.msra.mxu0 0
      %1641 = vmatprep.subr.bf16.mxu0 0
      %1642 = vmatpush1.bf16.xpose.msra.mxu0 0
      %1643 = vmatprep.subr.bf16.mxu0 0
      %1644 = vmatpush1.bf16.xpose.msra.mxu0 0
      %1645 = vmatprep.subr.bf16.mxu0 0
      %1646 = vmatpush1.bf16.xpose.msra.mxu0 0
      %1647 = vmatprep.subr.bf16.mxu0 0
      %1648 = vmatpush1.bf16.xpose.msra.mxu0 0
      %1649 = vmatprep.subr.bf16.mxu0 0
      %1650 = vmatpush1.bf16.xpose.msra.mxu0 %v1635
      %1651 = vmatprep.subr.bf16.mxu0 0
      %1652 = vmatpush1.bf16.xpose.msra.mxu0 %v1632
      %1653 = vmatprep.subr.bf16.mxu0 0
      %1654 = vmatpush2.bf16.xpose.msra.mxu0 0
      %1655 = vmatprep.subr.bf16.mxu0 0
      %1656 = vmatpush2.bf16.xpose.msra.mxu0 0
      %1657 = vmatprep.subr.bf16.mxu0 0
      %1658 = vmatpush2.bf16.xpose.msra.mxu0 0
      %1659 = vmatprep.subr.bf16.mxu0 0
      %1660 = vmatpush2.bf16.xpose.msra.mxu0 0
      %1661 = vmatprep.subr.bf16.mxu0 0
      %1662 = vmatpush2.bf16.xpose.msra.mxu0 0
      %1663 = vmatprep.subr.bf16.mxu0 0
      %1664 = vmatpush2.bf16.xpose.msra.mxu0 0
      %1665 = vmatprep.subr.bf16.mxu0 0
      %1666 = vmatpush2.bf16.xpose.msra.mxu0 0
      %1667 = vmatprep.subr.bf16.mxu0 0
      %1668 = vmatpush2.bf16.xpose.msra.mxu0 0
      %1669 = vmatprep.mubr.bf16.mxu0 0
      %1670 = vmatmul.mubr.bf16.gmra.mxu0 %v1626
      %v1671 = vpop.f32.mrf.mxu0
      %v1672 = vadd.f32 0.0, %v1671
      %v1673 = vpop.f32.mrf.mxu0
      %v1674 = vpop.f32.mrf.mxu0
      %v1675 = vadd.f32 0.0, %v1674
      %v1676 = vpop.f32.mrf.mxu0
      %1677 = vmatprep.mubr.bf16.mxu0 0
      %1678 = vmatmul.mubr.bf16.gmra.mxu0 %v1629
      %v1679 = vpop.f32.mrf.mxu0
      %v1680 = vadd.f32 0.0, %v1679
      %v1681 = vpop.f32.mrf.mxu0
      %v1682 = vpop.f32.mrf.mxu0
      %v1683 = vpop.f32.mrf.mxu0
      %1684 = vdwg.mxu0
      %v1685 = vmul.f32 %v1672, 0.35355338
      %v1686 = vmul.f32 %v1675, 0.35355338
      %v1687 = vmul.f32 %v1680, 0.35355338
      %v1688 = vsel %vm1179, %v1685, -inf
      %1689 = vmax.xlane.f32.xlu0 %v1688
      %v1690 = vpop.xlane.xlu0 %1689
      %v1691 = vsel %vm1179, %v1686, -inf
      %1692 = vmax.xlane.f32.xlu0 %v1691
      %v1693 = vpop.xlane.xlu0 %1692
      %v1694 = vsel %vm1186, %v1687, -inf
      %1695 = vmax.xlane.f32.xlu0 %v1694
      %v1696 = vpop.xlane.xlu0 %1695
      %v1697 = vsub.f32 %v1685, %v1690
      %v1698 = vsub.f32 %v1686, %v1693
      %v1699 = vsub.f32 %v1687, %v1696
      %v1700 = vmul.f32 %v1697, 1.442695
      %v1701 = vpow.pop %v1700
      %v1702 = vmul.f32 %v1698, 1.442695
      %v1703 = vpow.pop %v1702
      %v1704 = vmul.f32 %v1699, 1.442695
      %v1705 = vpow.pop %v1704
      %v1706 = vsel %vm1179, %v1701, 0.0
      %1707 = vadd.xlane.f32.xlu0 %v1706
      %v1708 = vpop.xlane.xlu0 %1707
      %v1709 = vsel %vm1179, %v1703, 0.0
      %1710 = vadd.xlane.f32.xlu0 %v1709
      %v1711 = vpop.xlane.xlu0 %1710
      %v1712 = vsel %vm1186, %v1705, 0.0
      %1713 = vadd.xlane.f32.xlu0 %v1712
      %v1714 = vpop.xlane.xlu0 %1713
      %v1715 = vrcp.pop %v1708
      %v1716 = vrcp.pop %v1711
      %v1717 = vrcp.pop %v1714
      %v1718 = vmul.f32 %v1701, %v1715
      %v1719 = vmul.f32 %v1703, %v1716
      %v1720 = vmul.f32 %v1705, %v1717
      %v1721 = vpack.c.bf16 %v1719, %v1718
      %v1722 = vpack.c.bf16 %v1720, %v1720
      %1723 = vrot.lane.b32.xlu0 %v1107, 40
      %v1724 = vpop.permute.xlu0 %1723
      %1725 = vrot.lane.b32.xlu0 %v1108, 40
      %v1726 = vpop.permute.xlu0 %1725
      %v1729 = vsel %vm1179, %v1721, 0
      %v1732 = vsel %vm1179, %v1722, 0
      %v1735 = vand.u32 %v1726, %v1229
      %1737 = vmatprep.subr.bf16.mxu0 0
      %1738 = vmatpush1.bf16.msra.mxu0 0
      %1739 = vmatprep.subr.bf16.mxu0 0
      %1740 = vmatpush1.bf16.msra.mxu0 0
      %1741 = vmatprep.subr.bf16.mxu0 0
      %1742 = vmatpush1.bf16.msra.mxu0 0
      %1743 = vmatprep.subr.bf16.mxu0 0
      %1744 = vmatpush1.bf16.msra.mxu0 0
      %1745 = vmatprep.subr.bf16.mxu0 0
      %1746 = vmatpush1.bf16.msra.mxu0 0
      %1747 = vmatprep.subr.bf16.mxu0 0
      %1748 = vmatpush1.bf16.msra.mxu0 0
      %1749 = vmatprep.subr.bf16.mxu0 0
      %1750 = vmatpush1.bf16.msra.mxu0 %v1735
      %1751 = vmatprep.subr.bf16.mxu0 0
      %1752 = vmatpush1.bf16.msra.mxu0 %v1724
      %1753 = vmatprep.subr.bf16.mxu0 0
      %1754 = vmatpush2.bf16.msra.mxu0 0
      %1755 = vmatprep.subr.bf16.mxu0 0
      %1756 = vmatpush2.bf16.msra.mxu0 0
      %1757 = vmatprep.subr.bf16.mxu0 0
      %1758 = vmatpush2.bf16.msra.mxu0 0
      %1759 = vmatprep.subr.bf16.mxu0 0
      %1760 = vmatpush2.bf16.msra.mxu0 0
      %1761 = vmatprep.subr.bf16.mxu0 0
      %1762 = vmatpush2.bf16.msra.mxu0 0
      %1763 = vmatprep.subr.bf16.mxu0 0
      %1764 = vmatpush2.bf16.msra.mxu0 0
      %1765 = vmatprep.subr.bf16.mxu0 0
      %1766 = vmatpush2.bf16.msra.mxu0 0
      %1767 = vmatprep.subr.bf16.mxu0 0
      %1768 = vmatpush2.bf16.msra.mxu0 0
      %1769 = vmatprep.mubr.bf16.mxu0 0
      %1770 = vmatmul.mubr.bf16.gmra.mxu0 %v1729
      %v1771 = vpop.f32.mrf.mxu0
      %v1772 = vadd.f32 0.0, %v1771
      %v1773 = vpop.f32.mrf.mxu0
      %v1774 = vpop.f32.mrf.mxu0
      %v1775 = vadd.f32 0.0, %v1774
      %v1776 = vpop.f32.mrf.mxu0
      %1777 = vmatprep.mubr.bf16.mxu0 0
      %1778 = vmatmul.mubr.bf16.gmra.mxu0 %v1732
      %v1779 = vpop.f32.mrf.mxu0
      %v1780 = vadd.f32 0.0, %v1779
      %v1781 = vpop.f32.mrf.mxu0
      %v1782 = vpop.f32.mrf.mxu0
      %v1783 = vpop.f32.mrf.mxu0
      %1784 = vdwg.mxu0
      %1788 = vrot.lane.b32.xlu0 %v1436, 8
      %v1789 = vpop.permute.xlu0 %1788
      %1790 = vrot.lane.b32.xlu0 %v1439, 8
      %v1791 = vpop.permute.xlu0 %1790
      %1792 = vrot.lane.b32.xlu0 %v1444, 8
      %v1793 = vpop.permute.xlu0 %1792
      %1800 = vrot.lane.b32.xlu0 %v1604, 16
      %v1801 = vpop.permute.xlu0 %1800
      %1802 = vrot.lane.b32.xlu0 %v1607, 16
      %v1803 = vpop.permute.xlu0 %1802
      %1804 = vrot.lane.b32.xlu0 %v1612, 16
      %v1805 = vpop.permute.xlu0 %1804
      %1812 = vrot.lane.b32.xlu0 %v1772, 24
      %v1813 = vpop.permute.xlu0 %1812
      %1814 = vrot.lane.b32.xlu0 %v1775, 24
      %v1815 = vpop.permute.xlu0 %1814
      %1816 = vrot.lane.b32.xlu0 %v1780, 24
      %v1817 = vpop.permute.xlu0 %1816
      %v1821 = vsel %vm1115, %v1268, %v1789
      %v1822 = vsel %vm1115, %v1271, %v1791
      %v1823 = vsel %vm1115, %v1276, %v1793
      %vm1824 = vcmask 130048
      %v1825 = vsel %vm1824, %v1821, %v1801
      %v1826 = vsel %vm1824, %v1822, %v1803
      %v1827 = vsel %vm1824, %v1823, %v1805
      %vm1828 = vcmask 195584
      %v1829 = vsel %vm1828, %v1825, %v1813
      %v1830 = vsel %vm1828, %v1826, %v1815
      %v1831 = vsel %vm1828, %v1827, %v1817
      %v1832 = vld [vmem:[%s11] sm:$0xf]
      %v1833 = vld [vmem:[%s11 + $0x4] sm:$0xf]
      %v1834 = vld [vmem:[%s11 + $0x8] sm:$0xf]
      %v1835 = vld [vmem:[%s11 + $0xc] sm:$0xf]
      %v1836 = vpack.c.bf16 %v1830, %v1829
      %v1837 = vpack.c.bf16 %v1831, %v1831
      %v1838 = vld [vmem:[%s12] sm:$0x1]
      %v1840 = vlaneseq
      %v1841 = vshrl.u32 %v1840, 7
      %v1842 = vsub.s32 0, %v1841
      %v1843 = vrot.slane %v1838, %v1842
      %v1849 = vunpack.c.l.b16 %v1832
      %v1850 = vunpack.c.l.b16 %v1833
      %v1851 = vunpack.c.l.b16 %v1834
      %v1852 = vunpack.c.l.b16 %v1835
      %v1853 = vpack.c.b16 %v1850, %v1849
      %v1854 = vpack.c.b16 %v1852, %v1851
      %v1858 = vsel %vm1017, %v1836, 0
      %v1861 = vsel %vm1017, %v1837, 0
      %1863 = vmatprep.subr.bf16.mxu0 0
      %1864 = vmatpush1.bf16.msra.mxu0 0
      %1865 = vmatprep.subr.bf16.mxu0 0
      %1866 = vmatpush1.bf16.msra.mxu0 0
      %1867 = vmatprep.subr.bf16.mxu0 0
      %1868 = vmatpush1.bf16.msra.mxu0 0
      %1869 = vmatprep.subr.bf16.mxu0 0
      %1870 = vmatpush1.bf16.msra.mxu0 0
      %1871 = vmatprep.subr.bf16.mxu0 0
      %1872 = vmatpush1.bf16.msra.mxu0 0
      %1873 = vmatprep.subr.bf16.mxu0 0
      %1874 = vmatpush1.bf16.msra.mxu0 0
      %1875 = vmatprep.subr.bf16.mxu0 0
      %1876 = vmatpush1.bf16.msra.mxu0 %v1854
      %1877 = vmatprep.subr.bf16.mxu0 0
      %1878 = vmatpush1.bf16.msra.mxu0 %v1853
      %1879 = vmatprep.subr.bf16.mxu0 0
      %1880 = vmatpush2.bf16.msra.mxu0 0
      %1881 = vmatprep.subr.bf16.mxu0 0
      %1882 = vmatpush2.bf16.msra.mxu0 0
      %1883 = vmatprep.subr.bf16.mxu0 0
      %1884 = vmatpush2.bf16.msra.mxu0 0
      %1885 = vmatprep.subr.bf16.mxu0 0
      %1886 = vmatpush2.bf16.msra.mxu0 0
      %1887 = vmatprep.subr.bf16.mxu0 0
      %1888 = vmatpush2.bf16.msra.mxu0 0
      %1889 = vmatprep.subr.bf16.mxu0 0
      %1890 = vmatpush2.bf16.msra.mxu0 0
      %1891 = vmatprep.subr.bf16.mxu0 0
      %1892 = vmatpush2.bf16.msra.mxu0 0
      %1893 = vmatprep.subr.bf16.mxu0 0
      %1894 = vmatpush2.bf16.msra.mxu0 0
      %1895 = vmatprep.mubr.bf16.mxu0 0
      %1896 = vmatmul.mubr.bf16.gmra.mxu0 %v1858
      %v1897 = vpop.f32.mrf.mxu0
      %v1898 = vadd.f32 %v1843, %v1897
      %v1899 = vpop.f32.mrf.mxu0
      %v1900 = vpop.f32.mrf.mxu0
      %v1901 = vadd.f32 %v1843, %v1900
      %v1902 = vpop.f32.mrf.mxu0
      %1903 = vmatprep.mubr.bf16.mxu0 0
      %1904 = vmatmul.mubr.bf16.gmra.mxu0 %v1861
      %v1905 = vpop.f32.mrf.mxu0
      %v1906 = vadd.f32 %v1843, %v1905
      %v1907 = vpop.f32.mrf.mxu0
      %v1908 = vpop.f32.mrf.mxu0
      %v1909 = vpop.f32.mrf.mxu0
      %1910 = vdwg.mxu0
      %v1911 = vadd.f32 %v1025, %v1898
      %v1912 = vadd.f32 %v1026, %v1901
      %v1913 = vadd.f32 %v1027, %v1906
      %v1914 = vld [vmem:[%s13] sm:$0x1]
      %v1915 = vld [vmem:[%s14] sm:$0x1]
      %v1916 = vsel %vm1017, %v1911, 0.0
      %1917 = vadd.xlane.f32.xlu0 %v1916
      %v1918 = vpop.xlane.xlu0 %1917
      %v1919 = vsel %vm1017, %v1912, 0.0
      %1920 = vadd.xlane.f32.xlu0 %v1919
      %v1921 = vpop.xlane.xlu0 %1920
      %v1922 = vsel %vm1023, %v1913, 0.0
      %1923 = vadd.xlane.f32.xlu0 %v1922
      %v1924 = vpop.xlane.xlu0 %1923
      %v1925 = vrcp.pop 32.0
      %v1926 = vmul.f32 %v1918, %v1925
      %v1927 = vmul.f32 %v1921, %v1925
      %v1928 = vmul.f32 %v1924, %v1925
      %v1929 = vsub.f32 %v1911, %v1926
      %v1930 = vsub.f32 %v1912, %v1927
      %v1931 = vsub.f32 %v1913, %v1928
      %v1932 = vmul.f32 %v1929, %v1929
      %v1933 = vmul.f32 %v1930, %v1930
      %v1934 = vmul.f32 %v1931, %v1931
      %v1935 = vsel %vm1017, %v1932, 0.0
      %1936 = vadd.xlane.f32.xlu0 %v1935
      %v1937 = vpop.xlane.xlu0 %1936
      %v1938 = vsel %vm1017, %v1933, 0.0
      %1939 = vadd.xlane.f32.xlu0 %v1938
      %v1940 = vpop.xlane.xlu0 %1939
      %v1941 = vsel %vm1023, %v1934, 0.0
      %1942 = vadd.xlane.f32.xlu0 %v1941
      %v1943 = vpop.xlane.xlu0 %1942
      %v1944 = vmul.f32 %v1937, %v1925
      %v1945 = vmul.f32 %v1940, %v1925
      %v1946 = vmul.f32 %v1943, %v1925
      %v1947 = vadd.f32 %v1944, 1e-05
      %v1948 = vadd.f32 %v1945, 1e-05
      %v1949 = vadd.f32 %v1946, 1e-05
      %v1950 = vrsqrt.pop %v1947
      %v1951 = vrsqrt.pop %v1948
      %v1952 = vrsqrt.pop %v1949
      %v1953 = vmul.f32 %v1929, %v1950
      %v1954 = vmul.f32 %v1930, %v1951
      %v1955 = vmul.f32 %v1931, %v1952
      %v1957 = vlaneseq
      %v1958 = vshrl.u32 %v1957, 7
      %v1959 = vsub.s32 0, %v1958
      %v1960 = vrot.slane %v1914, %v1959
      %v1962 = vmul.f32 %v1953, %v1960
      %v1963 = vmul.f32 %v1954, %v1960
      %v1964 = vmul.f32 %v1955, %v1960
      %v1966 = vlaneseq
      %v1967 = vshrl.u32 %v1966, 7
      %v1968 = vsub.s32 0, %v1967
      %v1969 = vrot.slane %v1915, %v1968
      %v1971 = vadd.f32 %v1962, %v1969
      %v1972 = vadd.f32 %v1963, %v1969
      %v1973 = vadd.f32 %v1964, %v1969
      %v1974 = vld [vmem:[%s17] sm:$0xf]
      %v1975 = vld [vmem:[%s17 + $0x4] sm:$0xf]
      %v1976 = vld [vmem:[%s17 + $0x8] sm:$0xf]
      %v1977 = vld [vmem:[%s17 + $0xc] sm:$0xf]
      %v1978 = vpack.c.bf16 %v1972, %v1971
      %v1979 = vpack.c.bf16 %v1973, %v1973
      %v1980 = vld [vmem:[%s18] sm:$0x1]
      %v1982 = vlaneseq
      %v1983 = vshrl.u32 %v1982, 7
      %v1984 = vsub.s32 0, %v1983
      %v1985 = vrot.slane %v1980, %v1984
      %v1991 = vunpack.c.l.b16 %v1974
      %v1992 = vunpack.c.l.b16 %v1975
      %v1993 = vunpack.c.l.b16 %v1976
      %v1994 = vunpack.c.l.b16 %v1977
      %v1995 = vpack.c.b16 %v1992, %v1991
      %v1996 = vpack.c.b16 %v1994, %v1993
      %v2000 = vsel %vm1017, %v1978, 0
      %v2003 = vsel %vm1017, %v1979, 0
      %2005 = vmatprep.subr.bf16.mxu0 0
      %2006 = vmatpush1.bf16.msra.mxu0 0
      %2007 = vmatprep.subr.bf16.mxu0 0
      %2008 = vmatpush1.bf16.msra.mxu0 0
      %2009 = vmatprep.subr.bf16.mxu0 0
      %2010 = vmatpush1.bf16.msra.mxu0 0
      %2011 = vmatprep.subr.bf16.mxu0 0
      %2012 = vmatpush1.bf16.msra.mxu0 0
      %2013 = vmatprep.subr.bf16.mxu0 0
      %2014 = vmatpush1.bf16.msra.mxu0 0
      %2015 = vmatprep.subr.bf16.mxu0 0
      %2016 = vmatpush1.bf16.msra.mxu0 0
      %2017 = vmatprep.subr.bf16.mxu0 0
      %2018 = vmatpush1.bf16.msra.mxu0 %v1996
      %2019 = vmatprep.subr.bf16.mxu0 0
      %2020 = vmatpush1.bf16.msra.mxu0 %v1995
      %2021 = vmatprep.subr.bf16.mxu0 0
      %2022 = vmatpush2.bf16.msra.mxu0 0
      %2023 = vmatprep.subr.bf16.mxu0 0
      %2024 = vmatpush2.bf16.msra.mxu0 0
      %2025 = vmatprep.subr.bf16.mxu0 0
      %2026 = vmatpush2.bf16.msra.mxu0 0
      %2027 = vmatprep.subr.bf16.mxu0 0
      %2028 = vmatpush2.bf16.msra.mxu0 0
      %2029 = vmatprep.subr.bf16.mxu0 0
      %2030 = vmatpush2.bf16.msra.mxu0 0
      %2031 = vmatprep.subr.bf16.mxu0 0
      %2032 = vmatpush2.bf16.msra.mxu0 0
      %2033 = vmatprep.subr.bf16.mxu0 0
      %2034 = vmatpush2.bf16.msra.mxu0 0
      %2035 = vmatprep.subr.bf16.mxu0 0
      %2036 = vmatpush2.bf16.msra.mxu0 0
      %2037 = vmatprep.mubr.bf16.mxu0 0
      %2038 = vmatmul.mubr.bf16.gmra.mxu0 %v2000
      %v2039 = vpop.f32.mrf.mxu0
      %v2040 = vadd.f32 %v1985, %v2039
      %v2041 = vpop.f32.mrf.mxu0
      %v2042 = vpop.f32.mrf.mxu0
      %v2043 = vadd.f32 %v1985, %v2042
      %v2044 = vpop.f32.mrf.mxu0
      %2045 = vmatprep.mubr.bf16.mxu0 0
      %2046 = vmatmul.mubr.bf16.gmra.mxu0 %v2003
      %v2047 = vpop.f32.mrf.mxu0
      %v2048 = vadd.f32 %v1985, %v2047
      %v2049 = vpop.f32.mrf.mxu0
      %v2050 = vpop.f32.mrf.mxu0
      %v2051 = vpop.f32.mrf.mxu0
      %2052 = vdwg.mxu0
      %v2053 = vmul.f32 %v2040, %v2040
      %v2054 = vmul.f32 %v2043, %v2043
      %v2055 = vmul.f32 %v2048, %v2048
      %v2056 = vmul.f32 %v2040, %v2053
      %v2057 = vmul.f32 %v2043, %v2054
      %v2058 = vmul.f32 %v2048, %v2055
      %v2059 = vmul.f32 %v2056, 0.044715
      %v2060 = vmul.f32 %v2057, 0.044715
      %v2061 = vmul.f32 %v2058, 0.044715
      %v2062 = vadd.f32 %v2040, %v2059
      %v2063 = vadd.f32 %v2043, %v2060
      %v2064 = vadd.f32 %v2048, %v2061
      %v2065 = vmul.f32 %v2062, 0.7978846
      %v2066 = vmul.f32 %v2063, 0.7978846
      %v2067 = vmul.f32 %v2064, 0.7978846
      %v2068 = vtanh.pop %v2065
      %v2069 = vtanh.pop %v2066
      %v2070 = vtanh.pop %v2067
      %v2071 = vadd.f32 %v2068, 1.0
      %v2072 = vadd.f32 %v2069, 1.0
      %v2073 = vadd.f32 %v2070, 1.0
      %v2074 = vmul.f32 %v2071, 0.5
      %v2075 = vmul.f32 %v2072, 0.5
      %v2076 = vmul.f32 %v2073, 0.5
      %v2077 = vmul.f32 %v2040, %v2074
      %v2078 = vmul.f32 %v2043, %v2075
      %v2079 = vmul.f32 %v2048, %v2076
      %v2080 = vld [vmem:[%s19] sm:$0xf]
      %v2081 = vld [vmem:[%s19 + $0x4] sm:$0xf]
      %v2082 = vld [vmem:[%s19 + $0x8] sm:$0xf]
      %v2083 = vld [vmem:[%s19 + $0xc] sm:$0xf]
      %v2084 = vld [vmem:[%s19 + $0x10] sm:$0xf]
      %v2085 = vld [vmem:[%s19 + $0x14] sm:$0xf]
      %v2086 = vld [vmem:[%s19 + $0x18] sm:$0xf]
      %v2087 = vld [vmem:[%s19 + $0x1c] sm:$0xf]
      %v2088 = vld [vmem:[%s19 + $0x20] sm:$0xf]
      %v2089 = vld [vmem:[%s19 + $0x24] sm:$0xf]
      %v2090 = vld [vmem:[%s19 + $0x28] sm:$0xf]
      %v2091 = vld [vmem:[%s19 + $0x2c] sm:$0xf]
      %v2092 = vld [vmem:[%s19 + $0x30] sm:$0xf]
      %v2093 = vld [vmem:[%s19 + $0x34] sm:$0xf]
      %v2094 = vld [vmem:[%s19 + $0x38] sm:$0xf]
      %v2095 = vld [vmem:[%s19 + $0x3c] sm:$0xf]
      %v2096 = vpack.c.bf16 %v2078, %v2077
      %v2097 = vpack.c.bf16 %v2079, %v2079
      %v2114 = vunpack.c.l.b16 %v2080
      %v2115 = vunpack.c.l.b16 %v2081
      %v2116 = vunpack.c.l.b16 %v2082
      %v2117 = vunpack.c.l.b16 %v2083
      %v2118 = vunpack.c.l.b16 %v2084
      %v2119 = vunpack.c.l.b16 %v2085
      %v2120 = vunpack.c.l.b16 %v2086
      %v2121 = vunpack.c.l.b16 %v2087
      %v2122 = vunpack.c.l.b16 %v2088
      %v2123 = vunpack.c.l.b16 %v2089
      %v2124 = vunpack.c.l.b16 %v2090
      %v2125 = vunpack.c.l.b16 %v2091
      %v2126 = vunpack.c.l.b16 %v2092
      %v2127 = vunpack.c.l.b16 %v2093
      %v2128 = vunpack.c.l.b16 %v2094
      %v2129 = vunpack.c.l.b16 %v2095
      %v2130 = vpack.c.b16 %v2115, %v2114
      %v2131 = vpack.c.b16 %v2117, %v2116
      %v2132 = vpack.c.b16 %v2119, %v2118
      %v2133 = vpack.c.b16 %v2121, %v2120
      %v2134 = vpack.c.b16 %v2123, %v2122
      %v2135 = vpack.c.b16 %v2125, %v2124
      %v2136 = vpack.c.b16 %v2127, %v2126
      %v2137 = vpack.c.b16 %v2129, %v2128
      %2146 = vmatprep.subr.bf16.mxu0 0
      %2147 = vmatpush1.bf16.msra.mxu0 %v2137
      %2148 = vmatprep.subr.bf16.mxu0 0
      %2149 = vmatpush1.bf16.msra.mxu0 %v2136
      %2150 = vmatprep.subr.bf16.mxu0 0
      %2151 = vmatpush1.bf16.msra.mxu0 %v2135
      %2152 = vmatprep.subr.bf16.mxu0 0
      %2153 = vmatpush1.bf16.msra.mxu0 %v2134
      %2154 = vmatprep.subr.bf16.mxu0 0
      %2155 = vmatpush1.bf16.msra.mxu0 %v2133
      %2156 = vmatprep.subr.bf16.mxu0 0
      %2157 = vmatpush1.bf16.msra.mxu0 %v2132
      %2158 = vmatprep.subr.bf16.mxu0 0
      %2159 = vmatpush1.bf16.msra.mxu0 %v2131
      %2160 = vmatprep.subr.bf16.mxu0 0
      %2161 = vmatpush1.bf16.msra.mxu0 %v2130
      %2162 = vmatprep.subr.bf16.mxu0 0
      %2163 = vmatpush2.bf16.msra.mxu0 0
      %2164 = vmatprep.subr.bf16.mxu0 0
      %2165 = vmatpush2.bf16.msra.mxu0 0
      %2166 = vmatprep.subr.bf16.mxu0 0
      %2167 = vmatpush2.bf16.msra.mxu0 0
      %2168 = vmatprep.subr.bf16.mxu0 0
      %2169 = vmatpush2.bf16.msra.mxu0 0
      %2170 = vmatprep.subr.bf16.mxu0 0
      %2171 = vmatpush2.bf16.msra.mxu0 0
      %2172 = vmatprep.subr.bf16.mxu0 0
      %2173 = vmatpush2.bf16.msra.mxu0 0
      %2174 = vmatprep.subr.bf16.mxu0 0
      %2175 = vmatpush2.bf16.msra.mxu0 0
      %2176 = vmatprep.subr.bf16.mxu0 0
      %2177 = vmatpush2.bf16.msra.mxu0 0
      %2178 = vmatprep.mubr.bf16.mxu0 0
      %2179 = vmatmul.mubr.bf16.gmra.mxu0 %v2096
      %v2180 = vpop.f32.mrf.mxu0
      %v2181 = vadd.f32 0.0, %v2180
      %v2182 = vpop.f32.mrf.mxu0
      %v2183 = vpop.f32.mrf.mxu0
      %v2184 = vadd.f32 0.0, %v2183
      %v2185 = vpop.f32.mrf.mxu0
      %2186 = vmatprep.mubr.bf16.mxu0 0
      %2187 = vmatmul.mubr.bf16.gmra.mxu0 %v2097
      %v2188 = vpop.f32.mrf.mxu0
      %v2189 = vadd.f32 0.0, %v2188
      %v2190 = vpop.f32.mrf.mxu0
      %v2191 = vpop.f32.mrf.mxu0
      %v2192 = vpop.f32.mrf.mxu0
      %2193 = vdwg.mxu0
      %v2194 = vadd.f32 %v1971, %v2181
      %v2195 = vadd.f32 %v1972, %v2184
      %v2196 = vadd.f32 %v1973, %v2189
      %v2197 = vld [vmem:[%s20] sm:$0x1]
      %v2199 = vlaneseq
      %v2200 = vshrl.u32 %v2199, 7
      %v2201 = vsub.s32 0, %v2200
      %v2202 = vrot.slane %v2197, %v2201
      %v2204 = vadd.f32 %v2194, %v2202
      %v2205 = vadd.f32 %v2195, %v2202
      %v2206 = vadd.f32 %v2196, %v2202
      %v2207 = vld [vmem:[%s15] sm:$0x1]
      %v2208 = vld [vmem:[%s16] sm:$0x1]
      %v2209 = vsel %vm1017, %v2204, 0.0
      %2210 = vadd.xlane.f32.xlu0 %v2209
      %v2211 = vpop.xlane.xlu0 %2210
      %v2212 = vsel %vm1017, %v2205, 0.0
      %2213 = vadd.xlane.f32.xlu0 %v2212
      %v2214 = vpop.xlane.xlu0 %2213
      %v2215 = vsel %vm1023, %v2206, 0.0
      %2216 = vadd.xlane.f32.xlu0 %v2215
      %v2217 = vpop.xlane.xlu0 %2216
      %v2218 = vmul.f32 %v2211, %v1925
      %v2219 = vmul.f32 %v2214, %v1925
      %v2220 = vmul.f32 %v2217, %v1925
      %v2221 = vsub.f32 %v2204, %v2218
      %v2222 = vsub.f32 %v2205, %v2219
      %v2223 = vsub.f32 %v2206, %v2220
      %v2224 = vmul.f32 %v2221, %v2221
      %v2225 = vmul.f32 %v2222, %v2222
      %v2226 = vmul.f32 %v2223, %v2223
      %v2227 = vsel %vm1017, %v2224, 0.0
      %2228 = vadd.xlane.f32.xlu0 %v2227
      %v2229 = vpop.xlane.xlu0 %2228
      %v2230 = vsel %vm1017, %v2225, 0.0
      %2231 = vadd.xlane.f32.xlu0 %v2230
      %v2232 = vpop.xlane.xlu0 %2231
      %v2233 = vsel %vm1023, %v2226, 0.0
      %2234 = vadd.xlane.f32.xlu0 %v2233
      %v2235 = vpop.xlane.xlu0 %2234
      %v2236 = vmul.f32 %v2229, %v1925
      %v2237 = vmul.f32 %v2232, %v1925
      %v2238 = vmul.f32 %v2235, %v1925
      %v2239 = vadd.f32 %v2236, 1e-05
      %v2240 = vadd.f32 %v2237, 1e-05
      %v2241 = vadd.f32 %v2238, 1e-05
      %v2242 = vrsqrt.pop %v2239
      %v2243 = vrsqrt.pop %v2240
      %v2244 = vrsqrt.pop %v2241
      %v2245 = vmul.f32 %v2221, %v2242
      %v2246 = vmul.f32 %v2222, %v2243
      %v2247 = vmul.f32 %v2223, %v2244
      %v2249 = vlaneseq
      %v2250 = vshrl.u32 %v2249, 7
      %v2251 = vsub.s32 0, %v2250
      %v2252 = vrot.slane %v2207, %v2251
      %v2254 = vmul.f32 %v2245, %v2252
      %v2255 = vmul.f32 %v2246, %v2252
      %v2256 = vmul.f32 %v2247, %v2252
      %v2258 = vlaneseq
      %v2259 = vshrl.u32 %v2258, 7
      %v2260 = vsub.s32 0, %v2259
      %v2261 = vrot.slane %v2208, %v2260
      %v2263 = vadd.f32 %v2254, %v2261
      %v2264 = vadd.f32 %v2255, %v2261
      %v2265 = vadd.f32 %v2256, %v2261
      %s2266 = scalar_lea.vmem %s9, 16
      %v2267 = vld [vmem:[%s2266] sm:$0xf]
      %v2268 = vld [vmem:[%s2266 + $0x4] sm:$0xf]
      %v2269 = vld [vmem:[%s2266 + $0x8] sm:$0xf]
      %v2270 = vld [vmem:[%s2266 + $0xc] sm:$0xf]
      %v2271 = vpack.c.bf16 %v2264, %v2263
      %v2272 = vpack.c.bf16 %v2265, %v2265
      %s2273 = scalar_lea.vmem %s10, 1
      %v2274 = vld [vmem:[%s2273] sm:$0x1]
      %v2276 = vlaneseq
      %v2277 = vshrl.u32 %v2276, 7
      %v2278 = vsub.s32 0, %v2277
      %v2279 = vrot.slane %v2274, %v2278
      %v2285 = vunpack.c.l.b16 %v2267
      %v2286 = vunpack.c.l.b16 %v2268
      %v2287 = vunpack.c.l.b16 %v2269
      %v2288 = vunpack.c.l.b16 %v2270
      %v2289 = vpack.c.b16 %v2286, %v2285
      %v2290 = vpack.c.b16 %v2288, %v2287
      %v2294 = vsel %vm1017, %v2271, 0
      %v2297 = vsel %vm1017, %v2272, 0
      %2299 = vmatprep.subr.bf16.mxu0 0
      %2300 = vmatpush1.bf16.msra.mxu0 0
      %2301 = vmatprep.subr.bf16.mxu0 0
      %2302 = vmatpush1.bf16.msra.mxu0 0
      %2303 = vmatprep.subr.bf16.mxu0 0
      %2304 = vmatpush1.bf16.msra.mxu0 0
      %2305 = vmatprep.subr.bf16.mxu0 0
      %2306 = vmatpush1.bf16.msra.mxu0 0
      %2307 = vmatprep.subr.bf16.mxu0 0
      %2308 = vmatpush1.bf16.msra.mxu0 0
      %2309 = vmatprep.subr.bf16.mxu0 0
      %2310 = vmatpush1.bf16.msra.mxu0 0
      %2311 = vmatprep.subr.bf16.mxu0 0
      %2312 = vmatpush1.bf16.msra.mxu0 %v2290
      %2313 = vmatprep.subr.bf16.mxu0 0
      %2314 = vmatpush1.bf16.msra.mxu0 %v2289
      %2315 = vmatprep.subr.bf16.mxu0 0
      %2316 = vmatpush2.bf16.msra.mxu0 0
      %2317 = vmatprep.subr.bf16.mxu0 0
      %2318 = vmatpush2.bf16.msra.mxu0 0
      %2319 = vmatprep.subr.bf16.mxu0 0
      %2320 = vmatpush2.bf16.msra.mxu0 0
      %2321 = vmatprep.subr.bf16.mxu0 0
      %2322 = vmatpush2.bf16.msra.mxu0 0
      %2323 = vmatprep.subr.bf16.mxu0 0
      %2324 = vmatpush2.bf16.msra.mxu0 0
      %2325 = vmatprep.subr.bf16.mxu0 0
      %2326 = vmatpush2.bf16.msra.mxu0 0
      %2327 = vmatprep.subr.bf16.mxu0 0
      %2328 = vmatpush2.bf16.msra.mxu0 0
      %2329 = vmatprep.subr.bf16.mxu0 0
      %2330 = vmatpush2.bf16.msra.mxu0 0
      %2331 = vmatprep.mubr.bf16.mxu0 0
      %2332 = vmatmul.mubr.bf16.gmra.mxu0 %v2294
      %v2333 = vpop.f32.mrf.mxu0
      %v2334 = vadd.f32 %v2279, %v2333
      %v2335 = vpop.f32.mrf.mxu0
      %v2336 = vpop.f32.mrf.mxu0
      %v2337 = vadd.f32 %v2279, %v2336
      %v2338 = vpop.f32.mrf.mxu0
      %2339 = vmatprep.mubr.bf16.mxu0 0
      %2340 = vmatmul.mubr.bf16.gmra.mxu0 %v2297
      %v2341 = vpop.f32.mrf.mxu0
      %v2342 = vadd.f32 %v2279, %v2341
      %v2343 = vpop.f32.mrf.mxu0
      %v2344 = vpop.f32.mrf.mxu0
      %v2345 = vpop.f32.mrf.mxu0
      %2346 = vdwg.mxu0
      %v2347 = vpack.c.bf16 %v2337, %v2334
      %v2348 = vpack.c.bf16 %v2342, %v2342
      %2351 = vrot.lane.b32.xlu0 %v2347, 96
      %v2352 = vpop.permute.xlu0 %2351
      %2353 = vrot.lane.b32.xlu0 %v2348, 96
      %v2354 = vpop.permute.xlu0 %2353
      %v2356 = vsel %vm1115, %v2347, 0
      %v2359 = vsel %vm1115, %v2348, 0
      %v2362 = vsel %vm1115, %v2352, 0
      %v2365 = vsel %vm1115, %v2354, 0
      %2367 = vmatprep.subr.bf16.mxu0 0
      %2368 = vmatpush1.bf16.xpose.msra.mxu0 0
      %2369 = vmatprep.subr.bf16.mxu0 0
      %2370 = vmatpush1.bf16.xpose.msra.mxu0 0
      %2371 = vmatprep.subr.bf16.mxu0 0
      %2372 = vmatpush1.bf16.xpose.msra.mxu0 0
      %2373 = vmatprep.subr.bf16.mxu0 0
      %2374 = vmatpush1.bf16.xpose.msra.mxu0 0
      %2375 = vmatprep.subr.bf16.mxu0 0
      %2376 = vmatpush1.bf16.xpose.msra.mxu0 0
      %2377 = vmatprep.subr.bf16.mxu0 0
      %2378 = vmatpush1.bf16.xpose.msra.mxu0 0
      %2379 = vmatprep.subr.bf16.mxu0 0
      %2380 = vmatpush1.bf16.xpose.msra.mxu0 %v2365
      %2381 = vmatprep.subr.bf16.mxu0 0
      %2382 = vmatpush1.bf16.xpose.msra.mxu0 %v2362
      %2383 = vmatprep.subr.bf16.mxu0 0
      %2384 = vmatpush2.bf16.xpose.msra.mxu0 0
      %2385 = vmatprep.subr.bf16.mxu0 0
      %2386 = vmatpush2.bf16.xpose.msra.mxu0 0
      %2387 = vmatprep.subr.bf16.mxu0 0
      %2388 = vmatpush2.bf16.xpose.msra.mxu0 0
      %2389 = vmatprep.subr.bf16.mxu0 0
      %2390 = vmatpush2.bf16.xpose.msra.mxu0 0
      %2391 = vmatprep.subr.bf16.mxu0 0
      %2392 = vmatpush2.bf16.xpose.msra.mxu0 0
      %2393 = vmatprep.subr.bf16.mxu0 0
      %2394 = vmatpush2.bf16.xpose.msra.mxu0 0
      %2395 = vmatprep.subr.bf16.mxu0 0
      %2396 = vmatpush2.bf16.xpose.msra.mxu0 0
      %2397 = vmatprep.subr.bf16.mxu0 0
      %2398 = vmatpush2.bf16.xpose.msra.mxu0 0
      %2399 = vmatprep.mubr.bf16.mxu0 0
      %2400 = vmatmul.mubr.bf16.gmra.mxu0 %v2356
      %v2401 = vpop.f32.mrf.mxu0
      %v2402 = vadd.f32 0.0, %v2401
      %v2403 = vpop.f32.mrf.mxu0
      %v2404 = vpop.f32.mrf.mxu0
      %v2405 = vadd.f32 0.0, %v2404
      %v2406 = vpop.f32.mrf.mxu0
      %2407 = vmatprep.mubr.bf16.mxu0 0
      %2408 = vmatmul.mubr.bf16.gmra.mxu0 %v2359
      %v2409 = vpop.f32.mrf.mxu0
      %v2410 = vadd.f32 0.0, %v2409
      %v2411 = vpop.f32.mrf.mxu0
      %v2412 = vpop.f32.mrf.mxu0
      %v2413 = vpop.f32.mrf.mxu0
      %2414 = vdwg.mxu0
      %v2415 = vmul.f32 %v2402, 0.35355338
      %v2416 = vmul.f32 %v2405, 0.35355338
      %v2417 = vmul.f32 %v2410, 0.35355338
      %v2418 = vsel %vm1179, %v2415, -inf
      %2419 = vmax.xlane.f32.xlu0 %v2418
      %v2420 = vpop.xlane.xlu0 %2419
      %v2421 = vsel %vm1179, %v2416, -inf
      %2422 = vmax.xlane.f32.xlu0 %v2421
      %v2423 = vpop.xlane.xlu0 %2422
      %v2424 = vsel %vm1186, %v2417, -inf
      %2425 = vmax.xlane.f32.xlu0 %v2424
      %v2426 = vpop.xlane.xlu0 %2425
      %v2427 = vsub.f32 %v2415, %v2420
      %v2428 = vsub.f32 %v2416, %v2423
      %v2429 = vsub.f32 %v2417, %v2426
      %v2430 = vmul.f32 %v2427, 1.442695
      %v2431 = vpow.pop %v2430
      %v2432 = vmul.f32 %v2428, 1.442695
      %v2433 = vpow.pop %v2432
      %v2434 = vmul.f32 %v2429, 1.442695
      %v2435 = vpow.pop %v2434
      %v2436 = vsel %vm1179, %v2431, 0.0
      %2437 = vadd.xlane.f32.xlu0 %v2436
      %v2438 = vpop.xlane.xlu0 %2437
      %v2439 = vsel %vm1179, %v2433, 0.0
      %2440 = vadd.xlane.f32.xlu0 %v2439
      %v2441 = vpop.xlane.xlu0 %2440
      %v2442 = vsel %vm1186, %v2435, 0.0
      %2443 = vadd.xlane.f32.xlu0 %v2442
      %v2444 = vpop.xlane.xlu0 %2443
      %v2445 = vrcp.pop %v2438
      %v2446 = vrcp.pop %v2441
      %v2447 = vrcp.pop %v2444
      %v2448 = vmul.f32 %v2431, %v2445
      %v2449 = vmul.f32 %v2433, %v2446
      %v2450 = vmul.f32 %v2435, %v2447
      %v2451 = vpack.c.bf16 %v2449, %v2448
      %v2452 = vpack.c.bf16 %v2450, %v2450
      %2453 = vrot.lane.b32.xlu0 %v2347, 64
      %v2454 = vpop.permute.xlu0 %2453
      %2455 = vrot.lane.b32.xlu0 %v2348, 64
      %v2456 = vpop.permute.xlu0 %2455
      %v2459 = vsel %vm1179, %v2451, 0
      %v2462 = vsel %vm1179, %v2452, 0
      %v2465 = vand.u32 %v2456, %v1229
      %2467 = vmatprep.subr.bf16.mxu0 0
      %2468 = vmatpush1.bf16.msra.mxu0 0
      %2469 = vmatprep.subr.bf16.mxu0 0
      %2470 = vmatpush1.bf16.msra.mxu0 0
      %2471 = vmatprep.subr.bf16.mxu0 0
      %2472 = vmatpush1.bf16.msra.mxu0 0
      %2473 = vmatprep.subr.bf16.mxu0 0
      %2474 = vmatpush1.bf16.msra.mxu0 0
      %2475 = vmatprep.subr.bf16.mxu0 0
      %2476 = vmatpush1.bf16.msra.mxu0 0
      %2477 = vmatprep.subr.bf16.mxu0 0
      %2478 = vmatpush1.bf16.msra.mxu0 0
      %2479 = vmatprep.subr.bf16.mxu0 0
      %2480 = vmatpush1.bf16.msra.mxu0 %v2465
      %2481 = vmatprep.subr.bf16.mxu0 0
      %2482 = vmatpush1.bf16.msra.mxu0 %v2454
      %2483 = vmatprep.subr.bf16.mxu0 0
      %2484 = vmatpush2.bf16.msra.mxu0 0
      %2485 = vmatprep.subr.bf16.mxu0 0
      %2486 = vmatpush2.bf16.msra.mxu0 0
      %2487 = vmatprep.subr.bf16.mxu0 0
      %2488 = vmatpush2.bf16.msra.mxu0 0
      %2489 = vmatprep.subr.bf16.mxu0 0
      %2490 = vmatpush2.bf16.msra.mxu0 0
      %2491 = vmatprep.subr.bf16.mxu0 0
      %2492 = vmatpush2.bf16.msra.mxu0 0
      %2493 = vmatprep.subr.bf16.mxu0 0
      %2494 = vmatpush2.bf16.msra.mxu0 0
      %2495 = vmatprep.subr.bf16.mxu0 0
      %2496 = vmatpush2.bf16.msra.mxu0 0
      %2497 = vmatprep.subr.bf16.mxu0 0
      %2498 = vmatpush2.bf16.msra.mxu0 0
      %2499 = vmatprep.mubr.bf16.mxu0 0
      %2500 = vmatmul.mubr.bf16.gmra.mxu0 %v2459
      %v2501 = vpop.f32.mrf.mxu0
      %v2502 = vadd.f32 0.0, %v2501
      %v2503 = vpop.f32.mrf.mxu0
      %v2504 = vpop.f32.mrf.mxu0
      %v2505 = vadd.f32 0.0, %v2504
      %v2506 = vpop.f32.mrf.mxu0
      %2507 = vmatprep.mubr.bf16.mxu0 0
      %2508 = vmatmul.mubr.bf16.gmra.mxu0 %v2462
      %v2509 = vpop.f32.mrf.mxu0
      %v2510 = vadd.f32 0.0, %v2509
      %v2511 = vpop.f32.mrf.mxu0
      %v2512 = vpop.f32.mrf.mxu0
      %v2513 = vpop.f32.mrf.mxu0
      %2514 = vdwg.mxu0
      %2515 = vrot.lane.b32.xlu0 %v2347, 120
      %v2516 = vpop.permute.xlu0 %2515
      %2517 = vrot.lane.b32.xlu0 %v2348, 120
      %v2518 = vpop.permute.xlu0 %2517
      %2519 = vrot.lane.b32.xlu0 %v2347, 88
      %v2520 = vpop.permute.xlu0 %2519
      %2521 = vrot.lane.b32.xlu0 %v2348, 88
      %v2522 = vpop.permute.xlu0 %2521
      %v2524 = vsel %vm1115, %v2516, 0
      %v2527 = vsel %vm1115, %v2518, 0
      %v2530 = vsel %vm1115, %v2520, 0
      %v2533 = vsel %vm1115, %v2522, 0
      %2535 = vmatprep.subr.bf16.mxu0 0
      %2536 = vmatpush1.bf16.xpose.msra.mxu0 0
      %2537 = vmatprep.subr.bf16.mxu0 0
      %2538 = vmatpush1.bf16.xpose.msra.mxu0 0
      %2539 = vmatprep.subr.bf16.mxu0 0
      %2540 = vmatpush1.bf16.xpose.msra.mxu0 0
      %2541 = vmatprep.subr.bf16.mxu0 0
      %2542 = vmatpush1.bf16.xpose.msra.mxu0 0
      %2543 = vmatprep.subr.bf16.mxu0 0
      %2544 = vmatpush1.bf16.xpose.msra.mxu0 0
      %2545 = vmatprep.subr.bf16.mxu0 0
      %2546 = vmatpush1.bf16.xpose.msra.mxu0 0
      %2547 = vmatprep.subr.bf16.mxu0 0
      %2548 = vmatpush1.bf16.xpose.msra.mxu0 %v2533
      %2549 = vmatprep.subr.bf16.mxu0 0
      %2550 = vmatpush1.bf16.xpose.msra.mxu0 %v2530
      %2551 = vmatprep.subr.bf16.mxu0 0
      %2552 = vmatpush2.bf16.xpose.msra.mxu0 0
      %2553 = vmatprep.subr.bf16.mxu0 0
      %2554 = vmatpush2.bf16.xpose.msra.mxu0 0
      %2555 = vmatprep.subr.bf16.mxu0 0
      %2556 = vmatpush2.bf16.xpose.msra.mxu0 0
      %2557 = vmatprep.subr.bf16.mxu0 0
      %2558 = vmatpush2.bf16.xpose.msra.mxu0 0
      %2559 = vmatprep.subr.bf16.mxu0 0
      %2560 = vmatpush2.bf16.xpose.msra.mxu0 0
      %2561 = vmatprep.subr.bf16.mxu0 0
      %2562 = vmatpush2.bf16.xpose.msra.mxu0 0
      %2563 = vmatprep.subr.bf16.mxu0 0
      %2564 = vmatpush2.bf16.xpose.msra.mxu0 0
      %2565 = vmatprep.subr.bf16.mxu0 0
      %2566 = vmatpush2.bf16.xpose.msra.mxu0 0
      %2567 = vmatprep.mubr.bf16.mxu0 0
      %2568 = vmatmul.mubr.bf16.gmra.mxu0 %v2524
      %v2569 = vpop.f32.mrf.mxu0
      %v2570 = vadd.f32 0.0, %v2569
      %v2571 = vpop.f32.mrf.mxu0
      %v2572 = vpop.f32.mrf.mxu0
      %v2573 = vadd.f32 0.0, %v2572
      %v2574 = vpop.f32.mrf.mxu0
      %2575 = vmatprep.mubr.bf16.mxu0 0
      %2576 = vmatmul.mubr.bf16.gmra.mxu0 %v2527
      %v2577 = vpop.f32.mrf.mxu0
      %v2578 = vadd.f32 0.0, %v2577
      %v2579 = vpop.f32.mrf.mxu0
      %v2580 = vpop.f32.mrf.mxu0
      %v2581 = vpop.f32.mrf.mxu0
      %2582 = vdwg.mxu0
      %v2583 = vmul.f32 %v2570, 0.35355338
      %v2584 = vmul.f32 %v2573, 0.35355338
      %v2585 = vmul.f32 %v2578, 0.35355338
      %v2586 = vsel %vm1179, %v2583, -inf
      %2587 = vmax.xlane.f32.xlu0 %v2586
      %v2588 = vpop.xlane.xlu0 %2587
      %v2589 = vsel %vm1179, %v2584, -inf
      %2590 = vmax.xlane.f32.xlu0 %v2589
      %v2591 = vpop.xlane.xlu0 %2590
      %v2592 = vsel %vm1186, %v2585, -inf
      %2593 = vmax.xlane.f32.xlu0 %v2592
      %v2594 = vpop.xlane.xlu0 %2593
      %v2595 = vsub.f32 %v2583, %v2588
      %v2596 = vsub.f32 %v2584, %v2591
      %v2597 = vsub.f32 %v2585, %v2594
      %v2598 = vmul.f32 %v2595, 1.442695
      %v2599 = vpow.pop %v2598
      %v2600 = vmul.f32 %v2596, 1.442695
      %v2601 = vpow.pop %v2600
      %v2602 = vmul.f32 %v2597, 1.442695
      %v2603 = vpow.pop %v2602
      %v2604 = vsel %vm1179, %v2599, 0.0
      %2605 = vadd.xlane.f32.xlu0 %v2604
      %v2606 = vpop.xlane.xlu0 %2605
      %v2607 = vsel %vm1179, %v2601, 0.0
      %2608 = vadd.xlane.f32.xlu0 %v2607
      %v2609 = vpop.xlane.xlu0 %2608
      %v2610 = vsel %vm1186, %v2603, 0.0
      %2611 = vadd.xlane.f32.xlu0 %v2610
      %v2612 = vpop.xlane.xlu0 %2611
      %v2613 = vrcp.pop %v2606
      %v2614 = vrcp.pop %v2609
      %v2615 = vrcp.pop %v2612
      %v2616 = vmul.f32 %v2599, %v2613
      %v2617 = vmul.f32 %v2601, %v2614
      %v2618 = vmul.f32 %v2603, %v2615
      %v2619 = vpack.c.bf16 %v2617, %v2616
      %v2620 = vpack.c.bf16 %v2618, %v2618
      %2621 = vrot.lane.b32.xlu0 %v2347, 56
      %v2622 = vpop.permute.xlu0 %2621
      %2623 = vrot.lane.b32.xlu0 %v2348, 56
      %v2624 = vpop.permute.xlu0 %2623
      %v2627 = vsel %vm1179, %v2619, 0
      %v2630 = vsel %vm1179, %v2620, 0
      %v2633 = vand.u32 %v2624, %v1229
      %2635 = vmatprep.subr.bf16.mxu0 0
      %2636 = vmatpush1.bf16.msra.mxu0 0
      %2637 = vmatprep.subr.bf16.mxu0 0
      %2638 = vmatpush1.bf16.msra.mxu0 0
      %2639 = vmatprep.subr.bf16.mxu0 0
      %2640 = vmatpush1.bf16.msra.mxu0 0
      %2641 = vmatprep.subr.bf16.mxu0 0
      %2642 = vmatpush1.bf16.msra.mxu0 0
      %2643 = vmatprep.subr.bf16.mxu0 0
      %2644 = vmatpush1.bf16.msra.mxu0 0
      %2645 = vmatprep.subr.bf16.mxu0 0
      %2646 = vmatpush1.bf16.msra.mxu0 0
      %2647 = vmatprep.subr.bf16.mxu0 0
      %2648 = vmatpush1.bf16.msra.mxu0 %v2633
      %2649 = vmatprep.subr.bf16.mxu0 0
      %2650 = vmatpush1.bf16.msra.mxu0 %v2622
      %2651 = vmatprep.subr.bf16.mxu0 0
      %2652 = vmatpush2.bf16.msra.mxu0 0
      %2653 = vmatprep.subr.bf16.mxu0 0
      %2654 = vmatpush2.bf16.msra.mxu0 0
      %2655 = vmatprep.subr.bf16.mxu0 0
      %2656 = vmatpush2.bf16.msra.mxu0 0
      %2657 = vmatprep.subr.bf16.mxu0 0
      %2658 = vmatpush2.bf16.msra.mxu0 0
      %2659 = vmatprep.subr.bf16.mxu0 0
      %2660 = vmatpush2.bf16.msra.mxu0 0
      %2661 = vmatprep.subr.bf16.mxu0 0
      %2662 = vmatpush2.bf16.msra.mxu0 0
      %2663 = vmatprep.subr.bf16.mxu0 0
      %2664 = vmatpush2.bf16.msra.mxu0 0
      %2665 = vmatprep.subr.bf16.mxu0 0
      %2666 = vmatpush2.bf16.msra.mxu0 0
      %2667 = vmatprep.mubr.bf16.mxu0 0
      %2668 = vmatmul.mubr.bf16.gmra.mxu0 %v2627
      %v2669 = vpop.f32.mrf.mxu0
      %v2670 = vadd.f32 0.0, %v2669
      %v2671 = vpop.f32.mrf.mxu0
      %v2672 = vpop.f32.mrf.mxu0
      %v2673 = vadd.f32 0.0, %v2672
      %v2674 = vpop.f32.mrf.mxu0
      %2675 = vmatprep.mubr.bf16.mxu0 0
      %2676 = vmatmul.mubr.bf16.gmra.mxu0 %v2630
      %v2677 = vpop.f32.mrf.mxu0
      %v2678 = vadd.f32 0.0, %v2677
      %v2679 = vpop.f32.mrf.mxu0
      %v2680 = vpop.f32.mrf.mxu0
      %v2681 = vpop.f32.mrf.mxu0
      %2682 = vdwg.mxu0
      %2683 = vrot.lane.b32.xlu0 %v2347, 112
      %v2684 = vpop.permute.xlu0 %2683
      %2685 = vrot.lane.b32.xlu0 %v2348, 112
      %v2686 = vpop.permute.xlu0 %2685
      %2687 = vrot.lane.b32.xlu0 %v2347, 80
      %v2688 = vpop.permute.xlu0 %2687
      %2689 = vrot.lane.b32.xlu0 %v2348, 80
      %v2690 = vpop.permute.xlu0 %2689
      %v2692 = vsel %vm1115, %v2684, 0
      %v2695 = vsel %vm1115, %v2686, 0
      %v2698 = vsel %vm1115, %v2688, 0
      %v2701 = vsel %vm1115, %v2690, 0
      %2703 = vmatprep.subr.bf16.mxu0 0
      %2704 = vmatpush1.bf16.xpose.msra.mxu0 0
      %2705 = vmatprep.subr.bf16.mxu0 0
      %2706 = vmatpush1.bf16.xpose.msra.mxu0 0
      %2707 = vmatprep.subr.bf16.mxu0 0
      %2708 = vmatpush1.bf16.xpose.msra.mxu0 0
      %2709 = vmatprep.subr.bf16.mxu0 0
      %2710 = vmatpush1.bf16.xpose.msra.mxu0 0
      %2711 = vmatprep.subr.bf16.mxu0 0
      %2712 = vmatpush1.bf16.xpose.msra.mxu0 0
      %2713 = vmatprep.subr.bf16.mxu0 0
      %2714 = vmatpush1.bf16.xpose.msra.mxu0 0
      %2715 = vmatprep.subr.bf16.mxu0 0
      %2716 = vmatpush1.bf16.xpose.msra.mxu0 %v2701
      %2717 = vmatprep.subr.bf16.mxu0 0
      %2718 = vmatpush1.bf16.xpose.msra.mxu0 %v2698
      %2719 = vmatprep.subr.bf16.mxu0 0
      %2720 = vmatpush2.bf16.xpose.msra.mxu0 0
      %2721 = vmatprep.subr.bf16.mxu0 0
      %2722 = vmatpush2.bf16.xpose.msra.mxu0 0
      %2723 = vmatprep.subr.bf16.mxu0 0
      %2724 = vmatpush2.bf16.xpose.msra.mxu0 0
      %2725 = vmatprep.subr.bf16.mxu0 0
      %2726 = vmatpush2.bf16.xpose.msra.mxu0 0
      %2727 = vmatprep.subr.bf16.mxu0 0
      %2728 = vmatpush2.bf16.xpose.msra.mxu0 0
      %2729 = vmatprep.subr.bf16.mxu0 0
      %2730 = vmatpush2.bf16.xpose.msra.mxu0 0
      %2731 = vmatprep.subr.bf16.mxu0 0
      %2732 = vmatpush2.bf16.xpose.msra.mxu0 0
      %2733 = vmatprep.subr.bf16.mxu0 0
      %2734 = vmatpush2.bf16.xpose.msra.mxu0 0
      %2735 = vmatprep.mubr.bf16.mxu0 0
      %2736 = vmatmul.mubr.bf16.gmra.mxu0 %v2692
      %v2737 = vpop.f32.mrf.mxu0
      %v2738 = vadd.f32 0.0, %v2737
      %v2739 = vpop.f32.mrf.mxu0
      %v2740 = vpop.f32.mrf.mxu0
      %v2741 = vadd.f32 0.0, %v2740
      %v2742 = vpop.f32.mrf.mxu0
      %2743 = vmatprep.mubr.bf16.mxu0 0
      %2744 = vmatmul.mubr.bf16.gmra.mxu0 %v2695
      %v2745 = vpop.f32.mrf.mxu0
      %v2746 = vadd.f32 0.0, %v2745
      %v2747 = vpop.f32.mrf.mxu0
      %v2748 = vpop.f32.mrf.mxu0
      %v2749 = vpop.f32.mrf.mxu0
      %2750 = vdwg.mxu0
      %v2751 = vmul.f32 %v2738, 0.35355338
      %v2752 = vmul.f32 %v2741, 0.35355338
      %v2753 = vmul.f32 %v2746, 0.35355338
      %v2754 = vsel %vm1179, %v2751, -inf
      %2755 = vmax.xlane.f32.xlu0 %v2754
      %v2756 = vpop.xlane.xlu0 %2755
      %v2757 = vsel %vm1179, %v2752, -inf
      %2758 = vmax.xlane.f32.xlu0 %v2757
      %v2759 = vpop.xlane.xlu0 %2758
      %v2760 = vsel %vm1186, %v2753, -inf
      %2761 = vmax.xlane.f32.xlu0 %v2760
      %v2762 = vpop.xlane.xlu0 %2761
      %v2763 = vsub.f32 %v2751, %v2756
      %v2764 = vsub.f32 %v2752, %v2759
      %v2765 = vsub.f32 %v2753, %v2762
      %v2766 = vmul.f32 %v2763, 1.442695
      %v2767 = vpow.pop %v2766
      %v2768 = vmul.f32 %v2764, 1.442695
      %v2769 = vpow.pop %v2768
      %v2770 = vmul.f32 %v2765, 1.442695
      %v2771 = vpow.pop %v2770
      %v2772 = vsel %vm1179, %v2767, 0.0
      %2773 = vadd.xlane.f32.xlu0 %v2772
      %v2774 = vpop.xlane.xlu0 %2773
      %v2775 = vsel %vm1179, %v2769, 0.0
      %2776 = vadd.xlane.f32.xlu0 %v2775
      %v2777 = vpop.xlane.xlu0 %2776
      %v2778 = vsel %vm1186, %v2771, 0.0
      %2779 = vadd.xlane.f32.xlu0 %v2778
      %v2780 = vpop.xlane.xlu0 %2779
      %v2781 = vrcp.pop %v2774
      %v2782 = vrcp.pop %v2777
      %v2783 = vrcp.pop %v2780
      %v2784 = vmul.f32 %v2767, %v2781
      %v2785 = vmul.f32 %v2769, %v2782
      %v2786 = vmul.f32 %v2771, %v2783
      %v2787 = vpack.c.bf16 %v2785, %v2784
      %v2788 = vpack.c.bf16 %v2786, %v2786
      %2789 = vrot.lane.b32.xlu0 %v2347, 48
      %v2790 = vpop.permute.xlu0 %2789
      %2791 = vrot.lane.b32.xlu0 %v2348, 48
      %v2792 = vpop.permute.xlu0 %2791
      %v2795 = vsel %vm1179, %v2787, 0
      %v2798 = vsel %vm1179, %v2788, 0
      %v2801 = vand.u32 %v2792, %v1229
      %2803 = vmatprep.subr.bf16.mxu0 0
      %2804 = vmatpush1.bf16.msra.mxu0 0
      %2805 = vmatprep.subr.bf16.mxu0 0
      %2806 = vmatpush1.bf16.msra.mxu0 0
      %2807 = vmatprep.subr.bf16.mxu0 0
      %2808 = vmatpush1.bf16.msra.mxu0 0
      %2809 = vmatprep.subr.bf16.mxu0 0
      %2810 = vmatpush1.bf16.msra.mxu0 0
      %2811 = vmatprep.subr.bf16.mxu0 0
      %2812 = vmatpush1.bf16.msra.mxu0 0
      %2813 = vmatprep.subr.bf16.mxu0 0
      %2814 = vmatpush1.bf16.msra.mxu0 0
      %2815 = vmatprep.subr.bf16.mxu0 0
      %2816 = vmatpush1.bf16.msra.mxu0 %v2801
      %2817 = vmatprep.subr.bf16.mxu0 0
      %2818 = vmatpush1.bf16.msra.mxu0 %v2790
      %2819 = vmatprep.subr.bf16.mxu0 0
      %2820 = vmatpush2.bf16.msra.mxu0 0
      %2821 = vmatprep.subr.bf16.mxu0 0
      %2822 = vmatpush2.bf16.msra.mxu0 0
      %2823 = vmatprep.subr.bf16.mxu0 0
      %2824 = vmatpush2.bf16.msra.mxu0 0
      %2825 = vmatprep.subr.bf16.mxu0 0
      %2826 = vmatpush2.bf16.msra.mxu0 0
      %2827 = vmatprep.subr.bf16.mxu0 0
      %2828 = vmatpush2.bf16.msra.mxu0 0
      %2829 = vmatprep.subr.bf16.mxu0 0
      %2830 = vmatpush2.bf16.msra.mxu0 0
      %2831 = vmatprep.subr.bf16.mxu0 0
      %2832 = vmatpush2.bf16.msra.mxu0 0
      %2833 = vmatprep.subr.bf16.mxu0 0
      %2834 = vmatpush2.bf16.msra.mxu0 0
      %2835 = vmatprep.mubr.bf16.mxu0 0
      %2836 = vmatmul.mubr.bf16.gmra.mxu0 %v2795
      %v2837 = vpop.f32.mrf.mxu0
      %v2838 = vadd.f32 0.0, %v2837
      %v2839 = vpop.f32.mrf.mxu0
      %v2840 = vpop.f32.mrf.mxu0
      %v2841 = vadd.f32 0.0, %v2840
      %v2842 = vpop.f32.mrf.mxu0
      %2843 = vmatprep.mubr.bf16.mxu0 0
      %2844 = vmatmul.mubr.bf16.gmra.mxu0 %v2798
      %v2845 = vpop.f32.mrf.mxu0
      %v2846 = vadd.f32 0.0, %v2845
      %v2847 = vpop.f32.mrf.mxu0
      %v2848 = vpop.f32.mrf.mxu0
      %v2849 = vpop.f32.mrf.mxu0
      %2850 = vdwg.mxu0
      %2851 = vrot.lane.b32.xlu0 %v2347, 104
      %v2852 = vpop.permute.xlu0 %2851
      %2853 = vrot.lane.b32.xlu0 %v2348, 104
      %v2854 = vpop.permute.xlu0 %2853
      %2855 = vrot.lane.b32.xlu0 %v2347, 72
      %v2856 = vpop.permute.xlu0 %2855
      %2857 = vrot.lane.b32.xlu0 %v2348, 72
      %v2858 = vpop.permute.xlu0 %2857
      %v2860 = vsel %vm1115, %v2852, 0
      %v2863 = vsel %vm1115, %v2854, 0
      %v2866 = vsel %vm1115, %v2856, 0
      %v2869 = vsel %vm1115, %v2858, 0
      %2871 = vmatprep.subr.bf16.mxu0 0
      %2872 = vmatpush1.bf16.xpose.msra.mxu0 0
      %2873 = vmatprep.subr.bf16.mxu0 0
      %2874 = vmatpush1.bf16.xpose.msra.mxu0 0
      %2875 = vmatprep.subr.bf16.mxu0 0
      %2876 = vmatpush1.bf16.xpose.msra.mxu0 0
      %2877 = vmatprep.subr.bf16.mxu0 0
      %2878 = vmatpush1.bf16.xpose.msra.mxu0 0
      %2879 = vmatprep.subr.bf16.mxu0 0
      %2880 = vmatpush1.bf16.xpose.msra.mxu0 0
      %2881 = vmatprep.subr.bf16.mxu0 0
      %2882 = vmatpush1.bf16.xpose.msra.mxu0 0
      %2883 = vmatprep.subr.bf16.mxu0 0
      %2884 = vmatpush1.bf16.xpose.msra.mxu0 %v2869
      %2885 = vmatprep.subr.bf16.mxu0 0
      %2886 = vmatpush1.bf16.xpose.msra.mxu0 %v2866
      %2887 = vmatprep.subr.bf16.mxu0 0
      %2888 = vmatpush2.bf16.xpose.msra.mxu0 0
      %2889 = vmatprep.subr.bf16.mxu0 0
      %2890 = vmatpush2.bf16.xpose.msra.mxu0 0
      %2891 = vmatprep.subr.bf16.mxu0 0
      %2892 = vmatpush2.bf16.xpose.msra.mxu0 0
      %2893 = vmatprep.subr.bf16.mxu0 0
      %2894 = vmatpush2.bf16.xpose.msra.mxu0 0
      %2895 = vmatprep.subr.bf16.mxu0 0
      %2896 = vmatpush2.bf16.xpose.msra.mxu0 0
      %2897 = vmatprep.subr.bf16.mxu0 0
      %2898 = vmatpush2.bf16.xpose.msra.mxu0 0
      %2899 = vmatprep.subr.bf16.mxu0 0
      %2900 = vmatpush2.bf16.xpose.msra.mxu0 0
      %2901 = vmatprep.subr.bf16.mxu0 0
      %2902 = vmatpush2.bf16.xpose.msra.mxu0 0
      %2903 = vmatprep.mubr.bf16.mxu0 0
      %2904 = vmatmul.mubr.bf16.gmra.mxu0 %v2860
      %v2905 = vpop.f32.mrf.mxu0
      %v2906 = vadd.f32 0.0, %v2905
      %v2907 = vpop.f32.mrf.mxu0
      %v2908 = vpop.f32.mrf.mxu0
      %v2909 = vadd.f32 0.0, %v2908
      %v2910 = vpop.f32.mrf.mxu0
      %2911 = vmatprep.mubr.bf16.mxu0 0
      %2912 = vmatmul.mubr.bf16.gmra.mxu0 %v2863
      %v2913 = vpop.f32.mrf.mxu0
      %v2914 = vadd.f32 0.0, %v2913
      %v2915 = vpop.f32.mrf.mxu0
      %v2916 = vpop.f32.mrf.mxu0
      %v2917 = vpop.f32.mrf.mxu0
      %2918 = vdwg.mxu0
      %v2919 = vmul.f32 %v2906, 0.35355338
      %v2920 = vmul.f32 %v2909, 0.35355338
      %v2921 = vmul.f32 %v2914, 0.35355338
      %v2922 = vsel %vm1179, %v2919, -inf
      %2923 = vmax.xlane.f32.xlu0 %v2922
      %v2924 = vpop.xlane.xlu0 %2923
      %v2925 = vsel %vm1179, %v2920, -inf
      %2926 = vmax.xlane.f32.xlu0 %v2925
      %v2927 = vpop.xlane.xlu0 %2926
      %v2928 = vsel %vm1186, %v2921, -inf
      %2929 = vmax.xlane.f32.xlu0 %v2928
      %v2930 = vpop.xlane.xlu0 %2929
      %v2931 = vsub.f32 %v2919, %v2924
      %v2932 = vsub.f32 %v2920, %v2927
      %v2933 = vsub.f32 %v2921, %v2930
      %v2934 = vmul.f32 %v2931, 1.442695
      %v2935 = vpow.pop %v2934
      %v2936 = vmul.f32 %v2932, 1.442695
      %v2937 = vpow.pop %v2936
      %v2938 = vmul.f32 %v2933, 1.442695
      %v2939 = vpow.pop %v2938
      %v2940 = vsel %vm1179, %v2935, 0.0
      %2941 = vadd.xlane.f32.xlu0 %v2940
      %v2942 = vpop.xlane.xlu0 %2941
      %v2943 = vsel %vm1179, %v2937, 0.0
      %2944 = vadd.xlane.f32.xlu0 %v2943
      %v2945 = vpop.xlane.xlu0 %2944
      %v2946 = vsel %vm1186, %v2939, 0.0
      %2947 = vadd.xlane.f32.xlu0 %v2946
      %v2948 = vpop.xlane.xlu0 %2947
      %v2949 = vrcp.pop %v2942
      %v2950 = vrcp.pop %v2945
      %v2951 = vrcp.pop %v2948
      %v2952 = vmul.f32 %v2935, %v2949
      %v2953 = vmul.f32 %v2937, %v2950
      %v2954 = vmul.f32 %v2939, %v2951
      %v2955 = vpack.c.bf16 %v2953, %v2952
      %v2956 = vpack.c.bf16 %v2954, %v2954
      %2957 = vrot.lane.b32.xlu0 %v2347, 40
      %v2958 = vpop.permute.xlu0 %2957
      %2959 = vrot.lane.b32.xlu0 %v2348, 40
      %v2960 = vpop.permute.xlu0 %2959
      %v2963 = vsel %vm1179, %v2955, 0
      %v2966 = vsel %vm1179, %v2956, 0
      %v2969 = vand.u32 %v2960, %v1229
      %2971 = vmatprep.subr.bf16.mxu0 0
      %2972 = vmatpush1.bf16.msra.mxu0 0
      %2973 = vmatprep.subr.bf16.mxu0 0
      %2974 = vmatpush1.bf16.msra.mxu0 0
      %2975 = vmatprep.subr.bf16.mxu0 0
      %2976 = vmatpush1.bf16.msra.mxu0 0
      %2977 = vmatprep.subr.bf16.mxu0 0
      %2978 = vmatpush1.bf16.msra.mxu0 0
      %2979 = vmatprep.subr.bf16.mxu0 0
      %2980 = vmatpush1.bf16.msra.mxu0 0
      %2981 = vmatprep.subr.bf16.mxu0 0
      %2982 = vmatpush1.bf16.msra.mxu0 0
      %2983 = vmatprep.subr.bf16.mxu0 0
      %2984 = vmatpush1.bf16.msra.mxu0 %v2969
      %2985 = vmatprep.subr.bf16.mxu0 0
      %2986 = vmatpush1.bf16.msra.mxu0 %v2958
      %2987 = vmatprep.subr.bf16.mxu0 0
      %2988 = vmatpush2.bf16.msra.mxu0 0
      %2989 = vmatprep.subr.bf16.mxu0 0
      %2990 = vmatpush2.bf16.msra.mxu0 0
      %2991 = vmatprep.subr.bf16.mxu0 0
      %2992 = vmatpush2.bf16.msra.mxu0 0
      %2993 = vmatprep.subr.bf16.mxu0 0
      %2994 = vmatpush2.bf16.msra.mxu0 0
      %2995 = vmatprep.subr.bf16.mxu0 0
      %2996 = vmatpush2.bf16.msra.mxu0 0
      %2997 = vmatprep.subr.bf16.mxu0 0
      %2998 = vmatpush2.bf16.msra.mxu0 0
      %2999 = vmatprep.subr.bf16.mxu0 0
      %3000 = vmatpush2.bf16.msra.mxu0 0
      %3001 = vmatprep.subr.bf16.mxu0 0
      %3002 = vmatpush2.bf16.msra.mxu0 0
      %3003 = vmatprep.mubr.bf16.mxu0 0
      %3004 = vmatmul.mubr.bf16.gmra.mxu0 %v2963
      %v3005 = vpop.f32.mrf.mxu0
      %v3006 = vadd.f32 0.0, %v3005
      %v3007 = vpop.f32.mrf.mxu0
      %v3008 = vpop.f32.mrf.mxu0
      %v3009 = vadd.f32 0.0, %v3008
      %v3010 = vpop.f32.mrf.mxu0
      %3011 = vmatprep.mubr.bf16.mxu0 0
      %3012 = vmatmul.mubr.bf16.gmra.mxu0 %v2966
      %v3013 = vpop.f32.mrf.mxu0
      %v3014 = vadd.f32 0.0, %v3013
      %v3015 = vpop.f32.mrf.mxu0
      %v3016 = vpop.f32.mrf.mxu0
      %v3017 = vpop.f32.mrf.mxu0
      %3018 = vdwg.mxu0
      %3022 = vrot.lane.b32.xlu0 %v2670, 8
      %v3023 = vpop.permute.xlu0 %3022
      %3024 = vrot.lane.b32.xlu0 %v2673, 8
      %v3025 = vpop.permute.xlu0 %3024
      %3026 = vrot.lane.b32.xlu0 %v2678, 8
      %v3027 = vpop.permute.xlu0 %3026
      %3034 = vrot.lane.b32.xlu0 %v2838, 16
      %v3035 = vpop.permute.xlu0 %3034
      %3036 = vrot.lane.b32.xlu0 %v2841, 16
      %v3037 = vpop.permute.xlu0 %3036
      %3038 = vrot.lane.b32.xlu0 %v2846, 16
      %v3039 = vpop.permute.xlu0 %3038
      %3046 = vrot.lane.b32.xlu0 %v3006, 24
      %v3047 = vpop.permute.xlu0 %3046
      %3048 = vrot.lane.b32.xlu0 %v3009, 24
      %v3049 = vpop.permute.xlu0 %3048
      %3050 = vrot.lane.b32.xlu0 %v3014, 24
      %v3051 = vpop.permute.xlu0 %3050
      %v3055 = vsel %vm1115, %v2502, %v3023
      %v3056 = vsel %vm1115, %v2505, %v3025
      %v3057 = vsel %vm1115, %v2510, %v3027
      %v3058 = vsel %vm1824, %v3055, %v3035
      %v3059 = vsel %vm1824, %v3056, %v3037
      %v3060 = vsel %vm1824, %v3057, %v3039
      %v3061 = vsel %vm1828, %v3058, %v3047
      %v3062 = vsel %vm1828, %v3059, %v3049
      %v3063 = vsel %vm1828, %v3060, %v3051
      %s3064 = scalar_lea.vmem %s11, 16
      %v3065 = vld [vmem:[%s3064] sm:$0xf]
      %v3066 = vld [vmem:[%s3064 + $0x4] sm:$0xf]
      %v3067 = vld [vmem:[%s3064 + $0x8] sm:$0xf]
      %v3068 = vld [vmem:[%s3064 + $0xc] sm:$0xf]
      %v3069 = vpack.c.bf16 %v3062, %v3061
      %v3070 = vpack.c.bf16 %v3063, %v3063
      %s3071 = scalar_lea.vmem %s12, 1
      %v3072 = vld [vmem:[%s3071] sm:$0x1]
      %v3074 = vlaneseq
      %v3075 = vshrl.u32 %v3074, 7
      %v3076 = vsub.s32 0, %v3075
      %v3077 = vrot.slane %v3072, %v3076
      %v3083 = vunpack.c.l.b16 %v3065
      %v3084 = vunpack.c.l.b16 %v3066
      %v3085 = vunpack.c.l.b16 %v3067
      %v3086 = vunpack.c.l.b16 %v3068
      %v3087 = vpack.c.b16 %v3084, %v3083
      %v3088 = vpack.c.b16 %v3086, %v3085
      %v3092 = vsel %vm1017, %v3069, 0
      %v3095 = vsel %vm1017, %v3070, 0
      %3097 = vmatprep.subr.bf16.mxu0 0
      %3098 = vmatpush1.bf16.msra.mxu0 0
      %3099 = vmatprep.subr.bf16.mxu0 0
      %3100 = vmatpush1.bf16.msra.mxu0 0
      %3101 = vmatprep.subr.bf16.mxu0 0
      %3102 = vmatpush1.bf16.msra.mxu0 0
      %3103 = vmatprep.subr.bf16.mxu0 0
      %3104 = vmatpush1.bf16.msra.mxu0 0
      %3105 = vmatprep.subr.bf16.mxu0 0
      %3106 = vmatpush1.bf16.msra.mxu0 0
      %3107 = vmatprep.subr.bf16.mxu0 0
      %3108 = vmatpush1.bf16.msra.mxu0 0
      %3109 = vmatprep.subr.bf16.mxu0 0
      %3110 = vmatpush1.bf16.msra.mxu0 %v3088
      %3111 = vmatprep.subr.bf16.mxu0 0
      %3112 = vmatpush1.bf16.msra.mxu0 %v3087
      %3113 = vmatprep.subr.bf16.mxu0 0
      %3114 = vmatpush2.bf16.msra.mxu0 0
      %3115 = vmatprep.subr.bf16.mxu0 0
      %3116 = vmatpush2.bf16.msra.mxu0 0
      %3117 = vmatprep.subr.bf16.mxu0 0
      %3118 = vmatpush2.bf16.msra.mxu0 0
      %3119 = vmatprep.subr.bf16.mxu0 0
      %3120 = vmatpush2.bf16.msra.mxu0 0
      %3121 = vmatprep.subr.bf16.mxu0 0
      %3122 = vmatpush2.bf16.msra.mxu0 0
      %3123 = vmatprep.subr.bf16.mxu0 0
      %3124 = vmatpush2.bf16.msra.mxu0 0
      %3125 = vmatprep.subr.bf16.mxu0 0
      %3126 = vmatpush2.bf16.msra.mxu0 0
      %3127 = vmatprep.subr.bf16.mxu0 0
      %3128 = vmatpush2.bf16.msra.mxu0 0
      %3129 = vmatprep.mubr.bf16.mxu0 0
      %3130 = vmatmul.mubr.bf16.gmra.mxu0 %v3092
      %v3131 = vpop.f32.mrf.mxu0
      %v3132 = vadd.f32 %v3077, %v3131
      %v3133 = vpop.f32.mrf.mxu0
      %v3134 = vpop.f32.mrf.mxu0
      %v3135 = vadd.f32 %v3077, %v3134
      %v3136 = vpop.f32.mrf.mxu0
      %3137 = vmatprep.mubr.bf16.mxu0 0
      %3138 = vmatmul.mubr.bf16.gmra.mxu0 %v3095
      %v3139 = vpop.f32.mrf.mxu0
      %v3140 = vadd.f32 %v3077, %v3139
      %v3141 = vpop.f32.mrf.mxu0
      %v3142 = vpop.f32.mrf.mxu0
      %v3143 = vpop.f32.mrf.mxu0
      %3144 = vdwg.mxu0
      %v3145 = vadd.f32 %v2263, %v3132
      %v3146 = vadd.f32 %v2264, %v3135
      %v3147 = vadd.f32 %v2265, %v3140
      %s3148 = scalar_lea.vmem %s13, 1
      %v3149 = vld [vmem:[%s3148] sm:$0x1]
      %s3150 = scalar_lea.vmem %s14, 1
      %v3151 = vld [vmem:[%s3150] sm:$0x1]
      %v3152 = vsel %vm1017, %v3145, 0.0
      %3153 = vadd.xlane.f32.xlu0 %v3152
      %v3154 = vpop.xlane.xlu0 %3153
      %v3155 = vsel %vm1017, %v3146, 0.0
      %3156 = vadd.xlane.f32.xlu0 %v3155
      %v3157 = vpop.xlane.xlu0 %3156
      %v3158 = vsel %vm1023, %v3147, 0.0
      %3159 = vadd.xlane.f32.xlu0 %v3158
      %v3160 = vpop.xlane.xlu0 %3159
      %v3161 = vmul.f32 %v3154, %v1925
      %v3162 = vmul.f32 %v3157, %v1925
      %v3163 = vmul.f32 %v3160, %v1925
      %v3164 = vsub.f32 %v3145, %v3161
      %v3165 = vsub.f32 %v3146, %v3162
      %v3166 = vsub.f32 %v3147, %v3163
      %v3167 = vmul.f32 %v3164, %v3164
      %v3168 = vmul.f32 %v3165, %v3165
      %v3169 = vmul.f32 %v3166, %v3166
      %v3170 = vsel %vm1017, %v3167, 0.0
      %3171 = vadd.xlane.f32.xlu0 %v3170
      %v3172 = vpop.xlane.xlu0 %3171
      %v3173 = vsel %vm1017, %v3168, 0.0
      %3174 = vadd.xlane.f32.xlu0 %v3173
      %v3175 = vpop.xlane.xlu0 %3174
      %v3176 = vsel %vm1023, %v3169, 0.0
      %3177 = vadd.xlane.f32.xlu0 %v3176
      %v3178 = vpop.xlane.xlu0 %3177
      %v3179 = vmul.f32 %v3172, %v1925
      %v3180 = vmul.f32 %v3175, %v1925
      %v3181 = vmul.f32 %v3178, %v1925
      %v3182 = vadd.f32 %v3179, 1e-05
      %v3183 = vadd.f32 %v3180, 1e-05
      %v3184 = vadd.f32 %v3181, 1e-05
      %v3185 = vrsqrt.pop %v3182
      %v3186 = vrsqrt.pop %v3183
      %v3187 = vrsqrt.pop %v3184
      %v3188 = vmul.f32 %v3164, %v3185
      %v3189 = vmul.f32 %v3165, %v3186
      %v3190 = vmul.f32 %v3166, %v3187
      %v3192 = vlaneseq
      %v3193 = vshrl.u32 %v3192, 7
      %v3194 = vsub.s32 0, %v3193
      %v3195 = vrot.slane %v3149, %v3194
      %v3197 = vmul.f32 %v3188, %v3195
      %v3198 = vmul.f32 %v3189, %v3195
      %v3199 = vmul.f32 %v3190, %v3195
      %v3201 = vlaneseq
      %v3202 = vshrl.u32 %v3201, 7
      %v3203 = vsub.s32 0, %v3202
      %v3204 = vrot.slane %v3151, %v3203
      %v3206 = vadd.f32 %v3197, %v3204
      %v3207 = vadd.f32 %v3198, %v3204
      %v3208 = vadd.f32 %v3199, %v3204
      %s3209 = scalar_lea.vmem %s17, 16
      %v3210 = vld [vmem:[%s3209] sm:$0xf]
      %v3211 = vld [vmem:[%s3209 + $0x4] sm:$0xf]
      %v3212 = vld [vmem:[%s3209 + $0x8] sm:$0xf]
      %v3213 = vld [vmem:[%s3209 + $0xc] sm:$0xf]
      %v3214 = vpack.c.bf16 %v3207, %v3206
      %v3215 = vpack.c.bf16 %v3208, %v3208
      %s3216 = scalar_lea.vmem %s18, 1
      %v3217 = vld [vmem:[%s3216] sm:$0x1]
      %v3219 = vlaneseq
      %v3220 = vshrl.u32 %v3219, 7
      %v3221 = vsub.s32 0, %v3220
      %v3222 = vrot.slane %v3217, %v3221
      %v3228 = vunpack.c.l.b16 %v3210
      %v3229 = vunpack.c.l.b16 %v3211
      %v3230 = vunpack.c.l.b16 %v3212
      %v3231 = vunpack.c.l.b16 %v3213
      %v3232 = vpack.c.b16 %v3229, %v3228
      %v3233 = vpack.c.b16 %v3231, %v3230
      %v3237 = vsel %vm1017, %v3214, 0
      %v3240 = vsel %vm1017, %v3215, 0
      %3242 = vmatprep.subr.bf16.mxu0 0
      %3243 = vmatpush1.bf16.msra.mxu0 0
      %3244 = vmatprep.subr.bf16.mxu0 0
      %3245 = vmatpush1.bf16.msra.mxu0 0
      %3246 = vmatprep.subr.bf16.mxu0 0
      %3247 = vmatpush1.bf16.msra.mxu0 0
      %3248 = vmatprep.subr.bf16.mxu0 0
      %3249 = vmatpush1.bf16.msra.mxu0 0
      %3250 = vmatprep.subr.bf16.mxu0 0
      %3251 = vmatpush1.bf16.msra.mxu0 0
      %3252 = vmatprep.subr.bf16.mxu0 0
      %3253 = vmatpush1.bf16.msra.mxu0 0
      %3254 = vmatprep.subr.bf16.mxu0 0
      %3255 = vmatpush1.bf16.msra.mxu0 %v3233
      %3256 = vmatprep.subr.bf16.mxu0 0
      %3257 = vmatpush1.bf16.msra.mxu0 %v3232
      %3258 = vmatprep.subr.bf16.mxu0 0
      %3259 = vmatpush2.bf16.msra.mxu0 0
      %3260 = vmatprep.subr.bf16.mxu0 0
      %3261 = vmatpush2.bf16.msra.mxu0 0
      %3262 = vmatprep.subr.bf16.mxu0 0
      %3263 = vmatpush2.bf16.msra.mxu0 0
      %3264 = vmatprep.subr.bf16.mxu0 0
      %3265 = vmatpush2.bf16.msra.mxu0 0
      %3266 = vmatprep.subr.bf16.mxu0 0
      %3267 = vmatpush2.bf16.msra.mxu0 0
      %3268 = vmatprep.subr.bf16.mxu0 0
      %3269 = vmatpush2.bf16.msra.mxu0 0
      %3270 = vmatprep.subr.bf16.mxu0 0
      %3271 = vmatpush2.bf16.msra.mxu0 0
      %3272 = vmatprep.subr.bf16.mxu0 0
      %3273 = vmatpush2.bf16.msra.mxu0 0
      %3274 = vmatprep.mubr.bf16.mxu0 0
      %3275 = vmatmul.mubr.bf16.gmra.mxu0 %v3237
      %v3276 = vpop.f32.mrf.mxu0
      %v3277 = vadd.f32 %v3222, %v3276
      %v3278 = vpop.f32.mrf.mxu0
      %v3279 = vpop.f32.mrf.mxu0
      %v3280 = vadd.f32 %v3222, %v3279
      %v3281 = vpop.f32.mrf.mxu0
      %3282 = vmatprep.mubr.bf16.mxu0 0
      %3283 = vmatmul.mubr.bf16.gmra.mxu0 %v3240
      %v3284 = vpop.f32.mrf.mxu0
      %v3285 = vadd.f32 %v3222, %v3284
      %v3286 = vpop.f32.mrf.mxu0
      %v3287 = vpop.f32.mrf.mxu0
      %v3288 = vpop.f32.mrf.mxu0
      %3289 = vdwg.mxu0
      %v3290 = vmul.f32 %v3277, %v3277
      %v3291 = vmul.f32 %v3280, %v3280
      %v3292 = vmul.f32 %v3285, %v3285
      %v3293 = vmul.f32 %v3277, %v3290
      %v3294 = vmul.f32 %v3280, %v3291
      %v3295 = vmul.f32 %v3285, %v3292
      %v3296 = vmul.f32 %v3293, 0.044715
      %v3297 = vmul.f32 %v3294, 0.044715
      %v3298 = vmul.f32 %v3295, 0.044715
      %v3299 = vadd.f32 %v3277, %v3296
      %v3300 = vadd.f32 %v3280, %v3297
      %v3301 = vadd.f32 %v3285, %v3298
      %v3302 = vmul.f32 %v3299, 0.7978846
      %v3303 = vmul.f32 %v3300, 0.7978846
      %v3304 = vmul.f32 %v3301, 0.7978846
      %v3305 = vtanh.pop %v3302
      %v3306 = vtanh.pop %v3303
      %v3307 = vtanh.pop %v3304
      %v3308 = vadd.f32 %v3305, 1.0
      %v3309 = vadd.f32 %v3306, 1.0
      %v3310 = vadd.f32 %v3307, 1.0
      %v3311 = vmul.f32 %v3308, 0.5
      %v3312 = vmul.f32 %v3309, 0.5
      %v3313 = vmul.f32 %v3310, 0.5
      %v3314 = vmul.f32 %v3277, %v3311
      %v3315 = vmul.f32 %v3280, %v3312
      %v3316 = vmul.f32 %v3285, %v3313
      %s3317 = scalar_lea.vmem %s19, 64
      %v3318 = vld [vmem:[%s3317] sm:$0xf]
      %v3319 = vld [vmem:[%s3317 + $0x4] sm:$0xf]
      %v3320 = vld [vmem:[%s3317 + $0x8] sm:$0xf]
      %v3321 = vld [vmem:[%s3317 + $0xc] sm:$0xf]
      %v3322 = vld [vmem:[%s3317 + $0x10] sm:$0xf]
      %v3323 = vld [vmem:[%s3317 + $0x14] sm:$0xf]
      %v3324 = vld [vmem:[%s3317 + $0x18] sm:$0xf]
      %v3325 = vld [vmem:[%s3317 + $0x1c] sm:$0xf]
      %v3326 = vld [vmem:[%s3317 + $0x20] sm:$0xf]
      %v3327 = vld [vmem:[%s3317 + $0x24] sm:$0xf]
      %v3328 = vld [vmem:[%s3317 + $0x28] sm:$0xf]
      %v3329 = vld [vmem:[%s3317 + $0x2c] sm:$0xf]
      %v3330 = vld [vmem:[%s3317 + $0x30] sm:$0xf]
      %v3331 = vld [vmem:[%s3317 + $0x34] sm:$0xf]
      %v3332 = vld [vmem:[%s3317 + $0x38] sm:$0xf]
      %v3333 = vld [vmem:[%s3317 + $0x3c] sm:$0xf]
      %v3334 = vpack.c.bf16 %v3315, %v3314
      %v3335 = vpack.c.bf16 %v3316, %v3316
      %v3352 = vunpack.c.l.b16 %v3318
      %v3353 = vunpack.c.l.b16 %v3319
      %v3354 = vunpack.c.l.b16 %v3320
      %v3355 = vunpack.c.l.b16 %v3321
      %v3356 = vunpack.c.l.b16 %v3322
      %v3357 = vunpack.c.l.b16 %v3323
      %v3358 = vunpack.c.l.b16 %v3324
      %v3359 = vunpack.c.l.b16 %v3325
      %v3360 = vunpack.c.l.b16 %v3326
      %v3361 = vunpack.c.l.b16 %v3327
      %v3362 = vunpack.c.l.b16 %v3328
      %v3363 = vunpack.c.l.b16 %v3329
      %v3364 = vunpack.c.l.b16 %v3330
      %v3365 = vunpack.c.l.b16 %v3331
      %v3366 = vunpack.c.l.b16 %v3332
      %v3367 = vunpack.c.l.b16 %v3333
      %v3368 = vpack.c.b16 %v3353, %v3352
      %v3369 = vpack.c.b16 %v3355, %v3354
      %v3370 = vpack.c.b16 %v3357, %v3356
      %v3371 = vpack.c.b16 %v3359, %v3358
      %v3372 = vpack.c.b16 %v3361, %v3360
      %v3373 = vpack.c.b16 %v3363, %v3362
      %v3374 = vpack.c.b16 %v3365, %v3364
      %v3375 = vpack.c.b16 %v3367, %v3366
      %3384 = vmatprep.subr.bf16.mxu0 0
      %3385 = vmatpush1.bf16.msra.mxu0 %v3375
      %3386 = vmatprep.subr.bf16.mxu0 0
      %3387 = vmatpush1.bf16.msra.mxu0 %v3374
      %3388 = vmatprep.subr.bf16.mxu0 0
      %3389 = vmatpush1.bf16.msra.mxu0 %v3373
      %3390 = vmatprep.subr.bf16.mxu0 0
      %3391 = vmatpush1.bf16.msra.mxu0 %v3372
      %3392 = vmatprep.subr.bf16.mxu0 0
      %3393 = vmatpush1.bf16.msra.mxu0 %v3371
      %3394 = vmatprep.subr.bf16.mxu0 0
      %3395 = vmatpush1.bf16.msra.mxu0 %v3370
      %3396 = vmatprep.subr.bf16.mxu0 0
      %3397 = vmatpush1.bf16.msra.mxu0 %v3369
      %3398 = vmatprep.subr.bf16.mxu0 0
      %3399 = vmatpush1.bf16.msra.mxu0 %v3368
      %3400 = vmatprep.subr.bf16.mxu0 0
      %3401 = vmatpush2.bf16.msra.mxu0 0
      %3402 = vmatprep.subr.bf16.mxu0 0
      %3403 = vmatpush2.bf16.msra.mxu0 0
      %3404 = vmatprep.subr.bf16.mxu0 0
      %3405 = vmatpush2.bf16.msra.mxu0 0
      %3406 = vmatprep.subr.bf16.mxu0 0
      %3407 = vmatpush2.bf16.msra.mxu0 0
      %3408 = vmatprep.subr.bf16.mxu0 0
      %3409 = vmatpush2.bf16.msra.mxu0 0
      %3410 = vmatprep.subr.bf16.mxu0 0
      %3411 = vmatpush2.bf16.msra.mxu0 0
      %3412 = vmatprep.subr.bf16.mxu0 0
      %3413 = vmatpush2.bf16.msra.mxu0 0
      %3414 = vmatprep.subr.bf16.mxu0 0
      %3415 = vmatpush2.bf16.msra.mxu0 0
      %3416 = vmatprep.mubr.bf16.mxu0 0
      %3417 = vmatmul.mubr.bf16.gmra.mxu0 %v3334
      %v3418 = vpop.f32.mrf.mxu0
      %v3419 = vadd.f32 0.0, %v3418
      %v3420 = vpop.f32.mrf.mxu0
      %v3421 = vpop.f32.mrf.mxu0
      %v3422 = vadd.f32 0.0, %v3421
      %v3423 = vpop.f32.mrf.mxu0
      %3424 = vmatprep.mubr.bf16.mxu0 0
      %3425 = vmatmul.mubr.bf16.gmra.mxu0 %v3335
      %v3426 = vpop.f32.mrf.mxu0
      %v3427 = vpop.f32.mrf.mxu0
      %v3428 = vpop.f32.mrf.mxu0
      %v3429 = vpop.f32.mrf.mxu0
      %3430 = vdwg.mxu0
      %v3431 = vadd.f32 %v3206, %v3419
      %v3432 = vadd.f32 %v3207, %v3422
      %s3433 = scalar_lea.vmem %s20, 1
      %v3434 = vld [vmem:[%s3433] sm:$0x1]
      %v3436 = vlaneseq
      %v3437 = vshrl.u32 %v3436, 7
      %v3438 = vsub.s32 0, %v3437
      %v3439 = vrot.slane %v3434, %v3438
      %v3441 = vadd.f32 %v3431, %v3439
      %v3442 = vadd.f32 %v3432, %v3439
      %s3443 = scalar_lea.vmem %s15, 1
      %v3444 = vld [vmem:[%s3443] sm:$0x1]
      %s3445 = scalar_lea.vmem %s16, 1
      %v3446 = vld [vmem:[%s3445] sm:$0x1]
      %v3447 = vsel %vm1017, %v3441, 0.0
      %3448 = vadd.xlane.f32.xlu0 %v3447
      %v3449 = vpop.xlane.xlu0 %3448
      %v3450 = vsel %vm1017, %v3442, 0.0
      %3451 = vadd.xlane.f32.xlu0 %v3450
      %v3452 = vpop.xlane.xlu0 %3451
      %v3453 = vmul.f32 %v3449, %v1925
      %v3454 = vmul.f32 %v3452, %v1925
      %v3455 = vsub.f32 %v3441, %v3453
      %v3456 = vsub.f32 %v3442, %v3454
      %v3457 = vmul.f32 %v3455, %v3455
      %v3458 = vmul.f32 %v3456, %v3456
      %v3459 = vsel %vm1017, %v3457, 0.0
      %3460 = vadd.xlane.f32.xlu0 %v3459
      %v3461 = vpop.xlane.xlu0 %3460
      %v3462 = vsel %vm1017, %v3458, 0.0
      %3463 = vadd.xlane.f32.xlu0 %v3462
      %v3464 = vpop.xlane.xlu0 %3463
      %v3465 = vmul.f32 %v3461, %v1925
      %v3466 = vmul.f32 %v3464, %v1925
      %v3467 = vadd.f32 %v3465, 1e-05
      %v3468 = vadd.f32 %v3466, 1e-05
      %v3469 = vrsqrt.pop %v3467
      %v3470 = vrsqrt.pop %v3468
      %v3471 = vmul.f32 %v3455, %v3469
      %v3472 = vmul.f32 %v3456, %v3470
      %v3474 = vlaneseq
      %v3475 = vshrl.u32 %v3474, 7
      %v3476 = vsub.s32 0, %v3475
      %v3477 = vrot.slane %v3444, %v3476
      %v3479 = vmul.f32 %v3471, %v3477
      %v3480 = vmul.f32 %v3472, %v3477
      %v3482 = vlaneseq
      %v3483 = vshrl.u32 %v3482, 7
      %v3484 = vsub.s32 0, %v3483
      %v3485 = vrot.slane %v3446, %v3484
      %v3487 = vadd.f32 %v3479, %v3485
      %v3488 = vadd.f32 %v3480, %v3485
      %v3489 = vld [vmem:[%s21] sm:$0x1]
      %v3490 = vld [vmem:[%s22] sm:$0x1]
      %v3491 = vsel %vm1017, %v3487, 0.0
      %3492 = vadd.xlane.f32.xlu0 %v3491
      %v3493 = vpop.xlane.xlu0 %3492
      %v3494 = vsel %vm1017, %v3488, 0.0
      %3495 = vadd.xlane.f32.xlu0 %v3494
      %v3496 = vpop.xlane.xlu0 %3495
      %v3497 = vmul.f32 %v3493, %v1925
      %v3498 = vmul.f32 %v3496, %v1925
      %v3499 = vsub.f32 %v3487, %v3497
      %v3500 = vsub.f32 %v3488, %v3498
      %v3501 = vmul.f32 %v3499, %v3499
      %v3502 = vmul.f32 %v3500, %v3500
      %v3503 = vsel %vm1017, %v3501, 0.0
      %3504 = vadd.xlane.f32.xlu0 %v3503
      %v3505 = vpop.xlane.xlu0 %3504
      %v3506 = vsel %vm1017, %v3502, 0.0
      %3507 = vadd.xlane.f32.xlu0 %v3506
      %v3508 = vpop.xlane.xlu0 %3507
      %v3509 = vmul.f32 %v3505, %v1925
      %v3510 = vmul.f32 %v3508, %v1925
      %v3511 = vadd.f32 %v3509, 1e-05
      %v3512 = vadd.f32 %v3510, 1e-05
      %v3513 = vrsqrt.pop %v3511
      %v3514 = vrsqrt.pop %v3512
      %v3515 = vmul.f32 %v3499, %v3513
      %v3516 = vmul.f32 %v3500, %v3514
      %v3518 = vlaneseq
      %v3519 = vshrl.u32 %v3518, 7
      %v3520 = vsub.s32 0, %v3519
      %v3521 = vrot.slane %v3489, %v3520
      %v3523 = vmul.f32 %v3515, %v3521
      %v3524 = vmul.f32 %v3516, %v3521
      %v3526 = vlaneseq
      %v3527 = vshrl.u32 %v3526, 7
      %v3528 = vsub.s32 0, %v3527
      %v3529 = vrot.slane %v3490, %v3528
      %v3531 = vadd.f32 %v3523, %v3529
      %v3532 = vadd.f32 %v3524, %v3529
      %v3533 = vld [vmem:[%s23] sm:$0xf]
      %v3534 = vld [vmem:[%s23 + $0x4] sm:$0xf]
      %v3535 = vld [vmem:[%s23 + $0x8] sm:$0xf]
      %v3536 = vld [vmem:[%s23 + $0xc] sm:$0xf]
      %v3537 = vpack.c.bf16 %v3532, %v3531
      %v3538 = vld [vmem:[%s24] sm:$0x1]
      %v3540 = vlaneseq
      %v3541 = vshrl.u32 %v3540, 7
      %v3542 = vsub.s32 0, %v3541
      %v3543 = vrot.slane %v3538, %v3542
      %v3549 = vunpack.c.l.b16 %v3533
      %v3550 = vunpack.c.l.b16 %v3534
      %v3551 = vunpack.c.l.b16 %v3535
      %v3552 = vunpack.c.l.b16 %v3536
      %v3553 = vpack.c.b16 %v3550, %v3549
      %v3554 = vpack.c.b16 %v3552, %v3551
      %v3558 = vsel %vm1017, %v3537, 0
      %3560 = vmatprep.subr.bf16.mxu0 0
      %3561 = vmatpush1.bf16.msra.mxu0 0
      %3562 = vmatprep.subr.bf16.mxu0 0
      %3563 = vmatpush1.bf16.msra.mxu0 0
      %3564 = vmatprep.subr.bf16.mxu0 0
      %3565 = vmatpush1.bf16.msra.mxu0 0
      %3566 = vmatprep.subr.bf16.mxu0 0
      %3567 = vmatpush1.bf16.msra.mxu0 0
      %3568 = vmatprep.subr.bf16.mxu0 0
      %3569 = vmatpush1.bf16.msra.mxu0 0
      %3570 = vmatprep.subr.bf16.mxu0 0
      %3571 = vmatpush1.bf16.msra.mxu0 0
      %3572 = vmatprep.subr.bf16.mxu0 0
      %3573 = vmatpush1.bf16.msra.mxu0 %v3554
      %3574 = vmatprep.subr.bf16.mxu0 0
      %3575 = vmatpush1.bf16.msra.mxu0 %v3553
      %3576 = vmatprep.subr.bf16.mxu0 0
      %3577 = vmatpush2.bf16.msra.mxu0 0
      %3578 = vmatprep.subr.bf16.mxu0 0
      %3579 = vmatpush2.bf16.msra.mxu0 0
      %3580 = vmatprep.subr.bf16.mxu0 0
      %3581 = vmatpush2.bf16.msra.mxu0 0
      %3582 = vmatprep.subr.bf16.mxu0 0
      %3583 = vmatpush2.bf16.msra.mxu0 0
      %3584 = vmatprep.subr.bf16.mxu0 0
      %3585 = vmatpush2.bf16.msra.mxu0 0
      %3586 = vmatprep.subr.bf16.mxu0 0
      %3587 = vmatpush2.bf16.msra.mxu0 0
      %3588 = vmatprep.subr.bf16.mxu0 0
      %3589 = vmatpush2.bf16.msra.mxu0 0
      %3590 = vmatprep.subr.bf16.mxu0 0
      %3591 = vmatpush2.bf16.msra.mxu0 0
      %3592 = vmatprep.mubr.bf16.mxu0 0
      %3593 = vmatmul.mubr.bf16.gmra.mxu0 %v3558
      %v3594 = vpop.f32.mrf.mxu0
      %v3595 = vadd.f32 %v3543, %v3594
      %v3596 = vpop.f32.mrf.mxu0
      %v3597 = vpop.f32.mrf.mxu0
      %v3598 = vadd.f32 %v3543, %v3597
      %v3599 = vpop.f32.mrf.mxu0
      %3600 = vdwg.mxu0
      %3601 = vst [vmem:[%s889] sm:$0xff] %v3595
      %3602 = vst [vmem:[%s889 + $0x8] sm:$0xff] %v3598
      %v3603 = vld [vmem:[%s879] sm:$0xff]
      %v3604 = vld [vmem:[%s879 + $0x8] sm:$0xff]
      %v3605 = vsub.f32 %v3595, %v3603
      %v3606 = vsub.f32 %v3598, %v3604
      %v3607 = vand.u32 2147483647, %v3605
      %v3608 = vand.u32 2147483647, %v3606
      %v3609 = vld [vmem:[%s884] sm:$0xff]
      %v3610 = vld [vmem:[%s884 + $0x8] sm:$0xff]
      %v3611 = vmul.f32 %v3607, %v3609
      %v3612 = vmul.f32 %v3608, %v3610
      %v3613 = vadd.f32 %v3611, %v3612
      %3614 = vadd.xlane.f32.xlu0 %v3613
      %v3615 = vpop.xlane.xlu0 %3614
      %v3616 = vrot.slane %v3615, 4
      %v3617 = vadd.f32 %v3615, %v3616
      %v3618 = vrot.slane %v3617, 2
      %v3619 = vadd.f32 %v3617, %v3618
      %v3620 = vrot.slane %v3619, 1
      %v3621 = vadd.f32 %v3619, %v3620
      %s3622 = vtos %v3621
      %v3623 = vstv %s3622
      %v3624 = vmul.f32 %v3623, 0.020833334
      %vm3625 = vcmask 0
      %3626 = vst.msk [vmem:[%s892] sm:$0x1] %vm3625, %v3624
      %vm3627 = vcmask 7168
      %v3628 = vsel %vm3627, %v897, 0.0
      %v3629 = vsel %vm3627, %v898, 0.0
      %v3630 = vadd.f32 %v3628, %v3629
      %3631 = vadd.xlane.f32.xlu0 %v3630
      %v3632 = vpop.xlane.xlu0 %3631
      %v3633 = vrot.slane %v3632, 4
      %v3634 = vadd.f32 %v3632, %v3633
      %v3635 = vrot.slane %v3634, 2
      %v3636 = vadd.f32 %v3634, %v3635
      %v3637 = vrot.slane %v3636, 1
      %v3638 = vadd.f32 %v3636, %v3637
      %s3639 = vtos %v3638
      %v3640 = vstv %s3639
      %3641 = vst.msk [vmem:[%s895] sm:$0x1] %vm3625, %v3640
      %p3642 = scmp.lt.s32.totalorder %s39, 1
      %s3643 = scalar_select %p3642, %s39, 1
      %s3644 = smul.addr %s3643, 2
      %s3645 = smul.addr %s3644, 8
      %s3646 = scalar_lea.vmem %s25, %s3645
      %p3647 = scmp.lt.s32.totalorder %s39, 1
      %s3648 = scalar_select %p3647, %s39, 1
      %s3649 = scalar_lea.vmem %s26, %s3648
      %p3650 = scmp.lt.s32.totalorder %s39, 1
      %s3651 = scalar_select %p3650, %s39, 1
      %s3652 = scalar_lea.vmem %s27, %s3651
      // Predicated region
      $region121: #{simmim_forward.1} parent=119 // pred_check
        %p3653 = pneg %p602
      $region122: #{simmim_forward.1} parent=119 // pred_check_branch
        %3655 = sbr.rel (%p3653) target = $region124
      $region123: #{simmim_forward.1} parent=119 // pred_region
        _
      $region124: #{simmim_forward.1} parent=119 // pred_fallthru
        _
      // Predicated region
      $region125: #{simmim_forward.1} parent=119 // pred_check
        %p3656 = pneg %p628
      $region126: #{simmim_forward.1} parent=119 // pred_check_branch
        %3658 = sbr.rel (%p3656) target = $region128
      $region127: #{simmim_forward.1} parent=119 // pred_region
        _
      $region128: #{simmim_forward.1} parent=119 // pred_fallthru
        _
      // Predicated region
      $region129: #{simmim_forward.1} parent=119 // pred_check
        %p3659 = pneg %p654
      $region130: #{simmim_forward.1} parent=119 // pred_check_branch
        %3661 = sbr.rel (%p3659) target = $region132
      $region131: #{simmim_forward.1} parent=119 // pred_region
        _
      $region132: #{simmim_forward.1} parent=119 // pred_fallthru
        _
    $region120: #{simmim_forward.1} parent=5 // pred_fallthru
      _
    %p3662 = scmp.le.s32.totalorder 2, %s34
    // Predicated region
    $region133: #{simmim_forward.1} parent=5 // pred_check
      %p3663 = pneg %p3662
    $region134: #{simmim_forward.1} parent=5 // pred_check_branch
      %3665 = sbr.rel (%p3663) target = $region136
    $region135: #{simmim_forward.1} parent=5 // pred_region
      %s3666 = ssub.s32 %s34, 2
      // Predicated region
      $region137: #{simmim_forward.1} parent=135 // pred_check
        %p3667 = pneg %p608
      $region138: #{simmim_forward.1} parent=135 // pred_check_branch
        %3669 = sbr.rel (%p3667) target = $region140
      $region139: #{simmim_forward.1} parent=135 // pred_region
        %p3670 = scmp.lt.s32.totalorder %s40, 1
        %s3671 = scalar_select %p3670, %s40, 1
        %s3672 = smul.addr %s3671, 2
        %s3673 = smul.addr %s3672, 8
        %s3674 = scalar_lea.vmem %s25, %s3673
      $region140: #{simmim_forward.1} parent=135 // pred_fallthru
        _
      // Predicated region
      $region141: #{simmim_forward.1} parent=135 // pred_check
        %p3675 = pneg %p634
      $region142: #{simmim_forward.1} parent=135 // pred_check_branch
        %3677 = sbr.rel (%p3675) target = $region144
      $region143: #{simmim_forward.1} parent=135 // pred_region
        %p3678 = scmp.lt.s32.totalorder %s40, 1
        %s3679 = scalar_select %p3678, %s40, 1
        %s3680 = scalar_lea.vmem %s26, %s3679
      $region144: #{simmim_forward.1} parent=135 // pred_fallthru
        _
      // Predicated region
      $region145: #{simmim_forward.1} parent=135 // pred_check
        %p3681 = pneg %p660
      $region146: #{simmim_forward.1} parent=135 // pred_check_branch
        %3683 = sbr.rel (%p3681) target = $region148
      $region147: #{simmim_forward.1} parent=135 // pred_region
        %p3684 = scmp.lt.s32.totalorder %s40, 1
        %s3685 = scalar_select %p3684, %s40, 1
        %s3686 = scalar_lea.vmem %s27, %s3685
      $region148: #{simmim_forward.1} parent=135 // pred_fallthru
        _
    $region136: #{simmim_forward.1} parent=5 // pred_fallthru
      _
  $region6: #{simmim_forward.1} parent=0 // loop_footer
    %s38 = sadd.s32 1, %s34
  $region7: #{simmim_forward.1} parent=0 // loop_footer_branch
    %33 = sbr.rel target = $region3
  $region8: #{simmim_forward.1} parent=0 // loop_exit
    _

</llo_original>
